<compile_context>
chip_gen: v7x
topology: tpu7x:2x2x1
jax: 0.10.0
libtpu: 0.0.40
codegen_flags: <defaults>
</compile_context>

<pallas_src>
import functools

import jax
import jax.numpy as jnp
import numpy as np
from jax.experimental import pallas as pl
from jax.experimental.pallas import tpu as pltpu

INT_CH = 512          # hard-coded in the PyTorch module
NEG_SLOPE = 0.01      # F.leaky_relu default
HALO = 8              # >= 5 rows needed; 8 keeps the tile M-dim 8-aligned


def _round_up(x, m):
    return -(-x // m) * m


def _leaky(v):
    return jnp.where(v >= 0, v, NEG_SLOPE * v)


def _make_kernel(tl, kc_pad, bot2_pad, compute_dtype):
    """tl: output timesteps per tile, kc_pad: padded 5*C_in, bot2_pad: padded 2*bot_ch."""
    m = tl + HALO  # working row extent (8-aligned)

    def kernel(x_ref, w1_ref, b1_ref, w2_ref, b2_ref, wmv_ref, bmv_ref, out_ref):
        xk = x_ref[0, 0]                                        # (m, kc_pad) compute dtype

        # ---- l1: Conv1d(C_in, 512, k=5, dil=2) as ONE im2col matmul ----
        h1 = _leaky(jnp.dot(xk, w1_ref[...],
                            preferred_element_type=jnp.float32)
                    + b1_ref[...])                              # (m, 512) f32

        # ---- l2: Conv1d(512, 512, k=2) as two matmuls; the tap-1 operand is
        #      an XLU sublane roll of the f32 activation (no shifted-slice
        #      relayout copies), cast once to the compute dtype per tap. ----
        h2 = _leaky(
            jnp.dot(h1.astype(compute_dtype), w2_ref[0],
                    preferred_element_type=jnp.float32)
            + jnp.dot(pltpu.roll(h1, m - 1, 0).astype(compute_dtype), w2_ref[1],
                      preferred_element_type=jnp.float32)
            + b2_ref[...])                                      # (m, 512) f32

        # h3..h6 (l3..l6) do not affect (mean, log_var) -> skipped (dead code).

        # ---- fused mean/log_var heads: Conv1d(512, 2*bot_ch, k=5) as five
        #      roll-accumulated matmuls over the full m-row extent; rows that
        #      receive wrapped-around data live in the discarded halo. ----
        acc = jnp.dot(h2.astype(compute_dtype), wmv_ref[0],
                      preferred_element_type=jnp.float32) + bmv_ref[...]
        for k in range(1, 5):
            acc = acc + jnp.dot(
                pltpu.roll(h2, m - k, 0).astype(compute_dtype), wmv_ref[k],
                preferred_element_type=jnp.float32)             # (m, bot2_pad) f32

        out_ref[0, 0] = acc[:tl]          # offset-0, 8-aligned slice; lane-dense store

    return kernel


def top_mini_conv(x, params, bot_ch, ar=True, tile_len=512,
                  compute_dtype=jnp.bfloat16):
    """x: (B, L, top_ch + bot_ch) float32.

    Returns (mean, log_var), each (B, L-13, bot_ch) float32, matching the
    PyTorch module's forward (after its .permute(0, 2, 1)).
    """
    B, L, c_in = x.shape
    if L < 14:
        raise ValueError(f"TopMiniConv needs L >= 14 (receptive field); got L={L}")
    if not ar:
        # PyTorch: x[:, :, -bot_ch:] = 0 (channel zeroing before the permute)
        x = x.at[:, :, -bot_ch:].set(0.0)

    w1, b1, w2, b2, wm, bm, wv, bv = params

    L1 = L - 8            # after l1 (k=5, dilation=2)
    Lm = L - 13           # final output length
    bot2 = 2 * bot_ch
    kc = 5 * c_in
    kc_pad = max(128, _round_up(kc, 128))       # lane-dense x tiles / clean MXU K
    bot2_pad = max(128, _round_up(bot2, 128))   # lane-dense output stores

    # ---- L tiling: tl output rows per grid step (8-aligned), HALO extra rows ----
    tl = max(8, min(_round_up(tile_len, 8), _round_up(Lm, 8)))
    n_tiles = -(-Lm // tl)
    m = tl + HALO
    l_pad = n_tiles * tl + HALO

    # im2col for l1: xcol[b, t] = concat_k x[b, t + 2k, :]   -> (B, L1, 5*C_in)
    xcol = jnp.concatenate([x[:, 2 * k:2 * k + L1, :] for k in range(5)], axis=-1)
    xcol = jnp.pad(xcol, ((0, 0), (0, l_pad - L1), (0, kc_pad - kc)))
    # overlapping tiles with halo, materialized via a static gather
    # TODO(synk): for very long L, DMA the overlapping windows from a pl.ANY-space
    # xcol inside the kernel instead of materializing xtiles via this gather.
    idx = (np.arange(n_tiles) * tl)[:, None] + np.arange(m)[None, :]
    xtiles = xcol[:, idx, :].astype(compute_dtype)          # (B, n_tiles, m, kc_pad)

    # ---- weights: PyTorch (out, in, k) -> matmul-friendly, pad & cast once ----
    w1col = jnp.transpose(w1, (2, 1, 0)).reshape(kc, INT_CH)
    w1col = jnp.pad(w1col, ((0, kc_pad - kc), (0, 0))).astype(compute_dtype)
    w2_t = jnp.transpose(w2, (2, 1, 0)).astype(compute_dtype)          # (2, 512, 512)
    wmv = jnp.concatenate([jnp.transpose(wm, (2, 1, 0)),
                           jnp.transpose(wv, (2, 1, 0))], axis=-1)     # (5, 512, 2*bot_ch)
    wmv = jnp.pad(wmv, ((0, 0), (0, 0), (0, bot2_pad - bot2))).astype(compute_dtype)
    b1r = b1.reshape(1, INT_CH).astype(jnp.float32)
    b2r = b2.reshape(1, INT_CH).astype(jnp.float32)
    bmv = jnp.pad(jnp.concatenate([bm, bv]).reshape(1, bot2),
                  ((0, 0), (0, bot2_pad - bot2))).astype(jnp.float32)

    kernel = _make_kernel(tl, kc_pad, bot2_pad, compute_dtype)

    def const(shape):
        # Constant index maps: weight blocks are DMA'd once and stay VMEM-resident.
        return pl.BlockSpec(shape, lambda t, b: (0,) * len(shape))

    out = pl.pallas_call(
        kernel,
        out_shape=jax.ShapeDtypeStruct((B, n_tiles, tl, bot2_pad), jnp.float32),
        grid=(n_tiles, B),   # larger axis first -> balanced 2-TC (v7x) megacore split
        in_specs=[
            pl.BlockSpec((1, 1, m, kc_pad), lambda t, b: (b, t, 0, 0)),
            const((kc_pad, INT_CH)),
            const((1, INT_CH)),
            const((2, INT_CH, INT_CH)),
            const((1, INT_CH)),
            const((5, INT_CH, bot2_pad)),
            const((1, bot2_pad)),
        ],
        out_specs=pl.BlockSpec((1, 1, tl, bot2_pad), lambda t, b: (b, t, 0, 0)),
        compiler_params=pltpu.CompilerParams(
            dimension_semantics=("parallel", "parallel"),
            vmem_limit_bytes=48 * 1024 * 1024),
    )(xtiles, w1col, b1r, w2_t, b2r, wmv, bmv)

    out = out.reshape(B, n_tiles * tl, bot2_pad)[:, :Lm]
    mean = out[..., :bot_ch]
    log_var = out[..., bot_ch:bot2]
    return mean, log_var


# ---------------------------- pure-JAX reference ----------------------------
def _conv1d_ref(z, w, b, dil):
    # z: (B, C, L), w: (O, I, K) PyTorch layout
    y = jax.lax.conv_general_dilated(
        z, w, window_strides=(1,), padding="VALID",
        rhs_dilation=(dil,), dimension_numbers=("NCH", "OIH", "NCH"))
    return y + b[None, :, None]


def ref_forward(x, params, bot_ch, ar=True):
    w1, b1, w2, b2, wm, bm, wv, bv = params
    if not ar:
        x = x.at[:, :, -bot_ch:].set(0.0)
    xc = jnp.transpose(x, (0, 2, 1))                 # (B, C, L)
    h1 = _leaky(_conv1d_ref(xc, w1, b1, 2))
    h2 = _leaky(_conv1d_ref(h1, w2, b2, 1))
    mean = jnp.transpose(_conv1d_ref(h2, wm, bm, 1), (0, 2, 1))
    log_var = jnp.transpose(_conv1d_ref(h2, wv, bv, 1), (0, 2, 1))
    return mean, log_var


def init_params(key, top_ch, bot_ch):
    # Only l1, l2, mean, log_var affect the returned outputs (l3..l6 are dead).
    c_in = top_ch + bot_ch
    ks = jax.random.split(key, 8)
    s = 0.05
    w1 = jax.random.normal(ks[0], (INT_CH, c_in, 5), jnp.float32) * s
    b1 = jax.random.normal(ks[1], (INT_CH,), jnp.float32) * s
    w2 = jax.random.normal(ks[2], (INT_CH, INT_CH, 2), jnp.float32) * s
    b2 = jax.random.normal(ks[3], (INT_CH,), jnp.float32) * s
    wm = jax.random.normal(ks[4], (bot_ch, INT_CH, 5), jnp.float32) * s
    bm = jax.random.normal(ks[5], (bot_ch,), jnp.float32) * s
    wv = jax.random.normal(ks[6], (bot_ch, INT_CH, 5), jnp.float32) * s
    bv = jax.random.normal(ks[7], (bot_ch,), jnp.float32) * s
    return (w1, b1, w2, b2, wm, bm, wv, bv)


if __name__ == "__main__":
    B, top_ch, bot_ch, L = 2, 4, 4, 24   # x: (B, L, top_ch + bot_ch)
    key = jax.random.PRNGKey(0)
    k_x, k_p = jax.random.split(key)
    x = jax.random.normal(k_x, (B, L, top_ch + bot_ch), jnp.float32)
    params = init_params(k_p, top_ch, bot_ch)

    mean_ref, log_var_ref = ref_forward(x, params, bot_ch, ar=True)

    # f32 compute path (matches the PyTorch/f32 reference).
    # tile_len=8 exercises the multi-tile (halo + roll-wraparound) path: grid=(2,2).
    f32_fn = jax.jit(functools.partial(top_mini_conv, bot_ch=bot_ch, ar=True,
                                       tile_len=8, compute_dtype=jnp.float32))
    m32, v32 = f32_fn(x, params)
    jax.block_until_ready((m32, v32))
    np.testing.assert_allclose(np.asarray(m32), np.asarray(mean_ref),
                               rtol=1e-4, atol=1e-4)
    np.testing.assert_allclose(np.asarray(v32), np.asarray(log_var_ref),
                               rtol=1e-4, atol=1e-4)

    # bf16 compute path (defaults): native MXU passes, f32 accumulation,
    # single-tile path (tile_len clamped to the short sequence).
    bf_fn = jax.jit(functools.partial(top_mini_conv, bot_ch=bot_ch, ar=True))
    mbf, vbf = bf_fn(x, params)
    jax.block_until_ready((mbf, vbf))
    np.testing.assert_allclose(np.asarray(mbf), np.asarray(mean_ref),
                               rtol=3e-2, atol=3e-2)
    np.testing.assert_allclose(np.asarray(vbf), np.asarray(log_var_ref),
                               rtol=3e-2, atol=3e-2)

    assert m32.shape == (B, L - 13, bot_ch) and v32.shape == (B, L - 13, bot_ch)
    assert mbf.shape == (B, L - 13, bot_ch) and vbf.shape == (B, L - 13, bot_ch)

    print("KERNEL_OK")
</pallas_src>

<mosaic_0001>
module attributes {stable_mosaic.version = 11 : i64} {
  func.func @kernel(%arg0: i32, %arg1: i32, %arg2: memref<1x1x16x128xf32, #tpu.memory_space<vmem>>, %arg3: memref<128x512xf32, #tpu.memory_space<vmem>>, %arg4: memref<1x512xf32, #tpu.memory_space<vmem>>, %arg5: memref<2x512x512xf32, #tpu.memory_space<vmem>>, %arg6: memref<1x512xf32, #tpu.memory_space<vmem>>, %arg7: memref<5x512x128xf32, #tpu.memory_space<vmem>>, %arg8: memref<1x128xf32, #tpu.memory_space<vmem>>, %arg9: memref<1x1x8x128xf32, #tpu.memory_space<vmem>>) attributes {dimension_semantics = [#tpu.dimension_semantics<parallel>, #tpu.dimension_semantics<parallel>], iteration_bounds = array<i64: 2, 2>, scalar_prefetch = 0 : i64, scratch_operands = 0 : i64, tpu.core_type = #tpu.core_type<tc>, window_params = [{transform_indices = @transform_0, window_bounds = array<i64: 1, 1, 16, 128>}, {pipeline_mode = #tpu.pipeline_mode<synchronous>, transform_indices = @transform_1, window_bounds = array<i64: 128, 512>}, {pipeline_mode = #tpu.pipeline_mode<synchronous>, transform_indices = @transform_2, window_bounds = array<i64: 1, 512>}, {pipeline_mode = #tpu.pipeline_mode<synchronous>, transform_indices = @transform_3, window_bounds = array<i64: 2, 512, 512>}, {pipeline_mode = #tpu.pipeline_mode<synchronous>, transform_indices = @transform_4, window_bounds = array<i64: 1, 512>}, {pipeline_mode = #tpu.pipeline_mode<synchronous>, transform_indices = @transform_5, window_bounds = array<i64: 5, 512, 128>}, {pipeline_mode = #tpu.pipeline_mode<synchronous>, transform_indices = @transform_6, window_bounds = array<i64: 1, 128>}, {transform_indices = @transform_7, window_bounds = array<i64: 1, 1, 8, 128>}]} {
    %c0 = arith.constant 0 : index
    %c0_0 = arith.constant 0 : index
    %c0_1 = arith.constant 0 : index
    %c0_2 = arith.constant 0 : index
    %0 = vector.load %arg2[%c0, %c0_0, %c0_1, %c0_2] : memref<1x1x16x128xf32, #tpu.memory_space<vmem>>, vector<1x1x16x128xf32>
    %1 = vector.shape_cast %0 : vector<1x1x16x128xf32> to vector<16x128xf32>
    %c0_3 = arith.constant 0 : index
    %c0_4 = arith.constant 0 : index
    %2 = vector.load %arg3[%c0_3, %c0_4] : memref<128x512xf32, #tpu.memory_space<vmem>>, vector<128x512xf32>
    %cst = arith.constant dense<0.000000e+00> : vector<16x512xf32>
    %3 = tpu.matmul %1, %2, %cst {dimension_numbers = #tpu.dot_dimension_numbers<[1], [0], [0], [1], [0, 0, 1, 1], [], []>} : vector<16x128xf32>, vector<128x512xf32>, vector<16x512xf32> -> vector<16x512xf32>
    %c0_5 = arith.constant 0 : index
    %c0_6 = arith.constant 0 : index
    %4 = vector.load %arg4[%c0_5, %c0_6] : memref<1x512xf32, #tpu.memory_space<vmem>>, vector<1x512xf32>
    %5 = vector.broadcast %4 : vector<1x512xf32> to vector<16x512xf32>
    %6 = arith.addf %3, %5 : vector<16x512xf32>
    %cst_7 = arith.constant 0.000000e+00 : f32
    %7 = vector.broadcast %cst_7 : f32 to vector<16x512xf32>
    %8 = arith.cmpf oge, %6, %7 : vector<16x512xf32>
    %cst_8 = arith.constant 0.00999999977 : f32
    %9 = vector.broadcast %cst_8 : f32 to vector<16x512xf32>
    %10 = arith.mulf %9, %6 : vector<16x512xf32>
    %11 = arith.select %8, %6, %10 : vector<16x512xi1>, vector<16x512xf32>
    %c0_9 = arith.constant 0 : index
    %c0_10 = arith.constant 0 : index
    %c0_11 = arith.constant 0 : index
    %12 = vector.load %arg5[%c0_9, %c0_10, %c0_11] : memref<2x512x512xf32, #tpu.memory_space<vmem>>, vector<1x512x512xf32>
    %13 = vector.shape_cast %12 : vector<1x512x512xf32> to vector<512x512xf32>
    %cst_12 = arith.constant dense<0.000000e+00> : vector<16x512xf32>
    %14 = tpu.matmul %11, %13, %cst_12 {dimension_numbers = #tpu.dot_dimension_numbers<[1], [0], [0], [1], [0, 0, 1, 1], [], []>} : vector<16x512xf32>, vector<512x512xf32>, vector<16x512xf32> -> vector<16x512xf32>
    %c15_i32 = arith.constant 15 : i32
    %15 = tpu.dynamic_rotate %11 by %c15_i32 dim 0 : vector<16x512xf32>, i32 -> vector<16x512xf32>
    %c1 = arith.constant 1 : index
    %c0_13 = arith.constant 0 : index
    %c0_14 = arith.constant 0 : index
    %16 = vector.load %arg5[%c1, %c0_13, %c0_14] : memref<2x512x512xf32, #tpu.memory_space<vmem>>, vector<1x512x512xf32>
    %17 = vector.shape_cast %16 : vector<1x512x512xf32> to vector<512x512xf32>
    %cst_15 = arith.constant dense<0.000000e+00> : vector<16x512xf32>
    %18 = tpu.matmul %15, %17, %cst_15 {dimension_numbers = #tpu.dot_dimension_numbers<[1], [0], [0], [1], [0, 0, 1, 1], [], []>} : vector<16x512xf32>, vector<512x512xf32>, vector<16x512xf32> -> vector<16x512xf32>
    %19 = arith.addf %14, %18 : vector<16x512xf32>
    %c0_16 = arith.constant 0 : index
    %c0_17 = arith.constant 0 : index
    %20 = vector.load %arg6[%c0_16, %c0_17] : memref<1x512xf32, #tpu.memory_space<vmem>>, vector<1x512xf32>
    %21 = vector.broadcast %20 : vector<1x512xf32> to vector<16x512xf32>
    %22 = arith.addf %19, %21 : vector<16x512xf32>
    %cst_18 = arith.constant 0.000000e+00 : f32
    %23 = vector.broadcast %cst_18 : f32 to vector<16x512xf32>
    %24 = arith.cmpf oge, %22, %23 : vector<16x512xf32>
    %cst_19 = arith.constant 0.00999999977 : f32
    %25 = vector.broadcast %cst_19 : f32 to vector<16x512xf32>
    %26 = arith.mulf %25, %22 : vector<16x512xf32>
    %27 = arith.select %24, %22, %26 : vector<16x512xi1>, vector<16x512xf32>
    %c0_20 = arith.constant 0 : index
    %c0_21 = arith.constant 0 : index
    %c0_22 = arith.constant 0 : index
    %28 = vector.load %arg7[%c0_20, %c0_21, %c0_22] : memref<5x512x128xf32, #tpu.memory_space<vmem>>, vector<1x512x128xf32>
    %29 = vector.shape_cast %28 : vector<1x512x128xf32> to vector<512x128xf32>
    %cst_23 = arith.constant dense<0.000000e+00> : vector<16x128xf32>
    %30 = tpu.matmul %27, %29, %cst_23 {dimension_numbers = #tpu.dot_dimension_numbers<[1], [0], [0], [1], [0, 0, 1, 1], [], []>} : vector<16x512xf32>, vector<512x128xf32>, vector<16x128xf32> -> vector<16x128xf32>
    %c0_24 = arith.constant 0 : index
    %c0_25 = arith.constant 0 : index
    %31 = vector.load %arg8[%c0_24, %c0_25] : memref<1x128xf32, #tpu.memory_space<vmem>>, vector<1x128xf32>
    %32 = vector.broadcast %31 : vector<1x128xf32> to vector<16x128xf32>
    %33 = arith.addf %30, %32 : vector<16x128xf32>
    %c15_i32_26 = arith.constant 15 : i32
    %34 = tpu.dynamic_rotate %27 by %c15_i32_26 dim 0 : vector<16x512xf32>, i32 -> vector<16x512xf32>
    %c1_27 = arith.constant 1 : index
    %c0_28 = arith.constant 0 : index
    %c0_29 = arith.constant 0 : index
    %35 = vector.load %arg7[%c1_27, %c0_28, %c0_29] : memref<5x512x128xf32, #tpu.memory_space<vmem>>, vector<1x512x128xf32>
    %36 = vector.shape_cast %35 : vector<1x512x128xf32> to vector<512x128xf32>
    %cst_30 = arith.constant dense<0.000000e+00> : vector<16x128xf32>
    %37 = tpu.matmul %34, %36, %cst_30 {dimension_numbers = #tpu.dot_dimension_numbers<[1], [0], [0], [1], [0, 0, 1, 1], [], []>} : vector<16x512xf32>, vector<512x128xf32>, vector<16x128xf32> -> vector<16x128xf32>
    %38 = arith.addf %33, %37 : vector<16x128xf32>
    %c14_i32 = arith.constant 14 : i32
    %39 = tpu.dynamic_rotate %27 by %c14_i32 dim 0 : vector<16x512xf32>, i32 -> vector<16x512xf32>
    %c2 = arith.constant 2 : index
    %c0_31 = arith.constant 0 : index
    %c0_32 = arith.constant 0 : index
    %40 = vector.load %arg7[%c2, %c0_31, %c0_32] : memref<5x512x128xf32, #tpu.memory_space<vmem>>, vector<1x512x128xf32>
    %41 = vector.shape_cast %40 : vector<1x512x128xf32> to vector<512x128xf32>
    %cst_33 = arith.constant dense<0.000000e+00> : vector<16x128xf32>
    %42 = tpu.matmul %39, %41, %cst_33 {dimension_numbers = #tpu.dot_dimension_numbers<[1], [0], [0], [1], [0, 0, 1, 1], [], []>} : vector<16x512xf32>, vector<512x128xf32>, vector<16x128xf32> -> vector<16x128xf32>
    %43 = arith.addf %38, %42 : vector<16x128xf32>
    %c13_i32 = arith.constant 13 : i32
    %44 = tpu.dynamic_rotate %27 by %c13_i32 dim 0 : vector<16x512xf32>, i32 -> vector<16x512xf32>
    %c3 = arith.constant 3 : index
    %c0_34 = arith.constant 0 : index
    %c0_35 = arith.constant 0 : index
    %45 = vector.load %arg7[%c3, %c0_34, %c0_35] : memref<5x512x128xf32, #tpu.memory_space<vmem>>, vector<1x512x128xf32>
    %46 = vector.shape_cast %45 : vector<1x512x128xf32> to vector<512x128xf32>
    %cst_36 = arith.constant dense<0.000000e+00> : vector<16x128xf32>
    %47 = tpu.matmul %44, %46, %cst_36 {dimension_numbers = #tpu.dot_dimension_numbers<[1], [0], [0], [1], [0, 0, 1, 1], [], []>} : vector<16x512xf32>, vector<512x128xf32>, vector<16x128xf32> -> vector<16x128xf32>
    %48 = arith.addf %43, %47 : vector<16x128xf32>
    %c12_i32 = arith.constant 12 : i32
    %49 = tpu.dynamic_rotate %27 by %c12_i32 dim 0 : vector<16x512xf32>, i32 -> vector<16x512xf32>
    %c4 = arith.constant 4 : index
    %c0_37 = arith.constant 0 : index
    %c0_38 = arith.constant 0 : index
    %50 = vector.load %arg7[%c4, %c0_37, %c0_38] : memref<5x512x128xf32, #tpu.memory_space<vmem>>, vector<1x512x128xf32>
    %51 = vector.shape_cast %50 : vector<1x512x128xf32> to vector<512x128xf32>
    %cst_39 = arith.constant dense<0.000000e+00> : vector<16x128xf32>
    %52 = tpu.matmul %49, %51, %cst_39 {dimension_numbers = #tpu.dot_dimension_numbers<[1], [0], [0], [1], [0, 0, 1, 1], [], []>} : vector<16x512xf32>, vector<512x128xf32>, vector<16x128xf32> -> vector<16x128xf32>
    %53 = arith.addf %48, %52 : vector<16x128xf32>
    %54 = vector.extract_strided_slice %53 {offsets = [0, 0], sizes = [8, 128], strides = [1, 1]} : vector<16x128xf32> to vector<8x128xf32>
    %c0_40 = arith.constant 0 : index
    %c0_41 = arith.constant 0 : index
    %c0_42 = arith.constant 0 : index
    %c0_43 = arith.constant 0 : index
    %55 = vector.load %arg9[%c0_40, %c0_41, %c0_42, %c0_43] : memref<1x1x8x128xf32, #tpu.memory_space<vmem>>, vector<1x1x8x128xf32>
    %56 = vector.shape_cast %55 : vector<1x1x8x128xf32> to vector<8x128xf32>
    %57 = vector.shape_cast %54 : vector<8x128xf32> to vector<1x1x8x128xf32>
    tpu.vector_store %arg9[%c0_40, %c0_41, %c0_42, %c0_43], %57 {strides = array<i32>} : memref<1x1x8x128xf32, #tpu.memory_space<vmem>>, vector<1x1x8x128xf32>,
    return
  }
  func.func @transform_0(%arg0: i32, %arg1: i32) -> (i32, i32, i32, i32) {
    %c0_i32 = arith.constant 0 : i32
    %c0_i32_0 = arith.constant 0 : i32
    %c0_i32_1 = arith.constant 0 : i32
    return %arg1, %arg0, %c0_i32, %c0_i32_0 : i32, i32, i32, i32
  }
  func.func @transform_1(%arg0: i32, %arg1: i32) -> (i32, i32) {
    %c0_i32 = arith.constant 0 : i32
    %c0_i32_0 = arith.constant 0 : i32
    %c0_i32_1 = arith.constant 0 : i32
    return %c0_i32, %c0_i32_0 : i32, i32
  }
  func.func @transform_2(%arg0: i32, %arg1: i32) -> (i32, i32) {
    %c0_i32 = arith.constant 0 : i32
    %c0_i32_0 = arith.constant 0 : i32
    %c0_i32_1 = arith.constant 0 : i32
    return %c0_i32, %c0_i32_0 : i32, i32
  }
  func.func @transform_3(%arg0: i32, %arg1: i32) -> (i32, i32, i32) {
    %c0_i32 = arith.constant 0 : i32
    %c0_i32_0 = arith.constant 0 : i32
    %c0_i32_1 = arith.constant 0 : i32
    %c0_i32_2 = arith.constant 0 : i32
    return %c0_i32, %c0_i32_0, %c0_i32_1 : i32, i32, i32
  }
  func.func @transform_4(%arg0: i32, %arg1: i32) -> (i32, i32) {
    %c0_i32 = arith.constant 0 : i32
    %c0_i32_0 = arith.constant 0 : i32
    %c0_i32_1 = arith.constant 0 : i32
    return %c0_i32, %c0_i32_0 : i32, i32
  }
  func.func @transform_5(%arg0: i32, %arg1: i32) -> (i32, i32, i32) {
    %c0_i32 = arith.constant 0 : i32
    %c0_i32_0 = arith.constant 0 : i32
    %c0_i32_1 = arith.constant 0 : i32
    %c0_i32_2 = arith.constant 0 : i32
    return %c0_i32, %c0_i32_0, %c0_i32_1 : i32, i32, i32
  }
  func.func @transform_6(%arg0: i32, %arg1: i32) -> (i32, i32) {
    %c0_i32 = arith.constant 0 : i32
    %c0_i32_0 = arith.constant 0 : i32
    %c0_i32_1 = arith.constant 0 : i32
    return %c0_i32, %c0_i32_0 : i32, i32
  }
  func.func @transform_7(%arg0: i32, %arg1: i32) -> (i32, i32, i32, i32) {
    %c0_i32 = arith.constant 0 : i32
    %c0_i32_0 = arith.constant 0 : i32
    %c0_i32_1 = arith.constant 0 : i32
    return %arg1, %arg0, %c0_i32, %c0_i32_0 : i32, i32, i32, i32
  }
}

</mosaic_0001>

<llo_original>
// kernel: top_mini_conv.1
$region0: #{top_mini_conv.1}
  #allocation0 [shape = 'u32[]', space=smem, size = 0x4, offset = 0x4, fixed_abs, tag = 'smem constant byte address 0x4 - core index']
  #allocation1 [shape = 'u32[144,128]{1,0:T(1,128)}', space=vmem, size = 0x12000, scoped, tag = 'internal scratch']
  %s0 = inlined_call_operand.vmem [shape: f32[2,2,16,128], index: 0, kind: input, shape index: {}]
  %s1 = inlined_call_operand.vmem [shape: f32[128,512], index: 1, kind: input, shape index: {}]
  %s2 = inlined_call_operand.vmem [shape: f32[1,512], index: 2, kind: input, shape index: {}]
  %s3 = inlined_call_operand.vmem [shape: f32[2,512,512], index: 3, kind: input, shape index: {}]
  %s4 = inlined_call_operand.vmem [shape: f32[1,512], index: 4, kind: input, shape index: {}]
  %s5 = inlined_call_operand.vmem [shape: f32[5,512,128], index: 5, kind: input, shape index: {}]
  %s6 = inlined_call_operand.vmem [shape: f32[1,128], index: 6, kind: input, shape index: {}]
  %s7 = inlined_call_operand.vmem [shape: f32[2,2,8,128], index: 7, kind: output, shape index: {}]
  %s8 = sld [smem:[#allocation0]]
  $region61: #{top_mini_conv.1} parent=0
    _
  %s10 = ssub.s32 1, %s8
  %s11 = scalar_select 0, %s10, %s8
  loop: start=0, step=1, limit=6
  $region2: #{top_mini_conv.1} parent=0 // loop_pre_header
    _
  $region3: #{top_mini_conv.1} parent=0 // loop_header
    %s13 = sphi 0, %s17
    %p14 = scmp.ge.s32.totalorder %s13, 6
    %s20 = sphi 0, %s32
    %s21 = sphi 0, %s28
    %s22 = sphi 0, %s20
    %s23 = sphi 0, %s21
    %s24 = sphi 0, %s22
    %s25 = sphi 0, %s23
    %s37 = sphi 0, %s39
    %s40 = sphi 0, %s37
    %s41 = sphi 0, %s40
    %s57 = sphi 0, %s41
    %s61 = sphi 0, %s61
    %s63 = sphi 0, %s61
    %s64 = sphi 0, %s63
    %s78 = sphi 0, %s64
    %s82 = sphi 0, %s82
    %s84 = sphi 0, %s82
    %s85 = sphi 0, %s84
    %s99 = sphi 0, %s85
    %s103 = sphi 0, %s103
    %s105 = sphi 0, %s103
    %s106 = sphi 0, %s105
    %s120 = sphi 0, %s106
    %s124 = sphi 0, %s124
    %s126 = sphi 0, %s124
    %s127 = sphi 0, %s126
    %s141 = sphi 0, %s127
    %s145 = sphi 0, %s145
    %s147 = sphi 0, %s145
    %s148 = sphi 0, %s147
    %s162 = sphi 0, %s148
    %s166 = sphi 0, %s166
    %s168 = sphi 0, %s166
    %s169 = sphi 0, %s168
    %s183 = sphi 0, %s169
    %s191 = sphi 0, %s193
    %s194 = sphi 0, %s191
    %s195 = sphi 0, %s194
    %s211 = sphi 0, %s195
  $region4: #{top_mini_conv.1} parent=0 // loop_header_branch
    %16 = sbr.rel (%p14) target = $region8
  $region5: #{top_mini_conv.1} parent=0 // loop_body
    %s18 = ssub.s32 %s13, 1
    %s19 = ssub.s32 %s13, 2
    %s26 = sadd.s32 1, %s21
    %p27 = scmp.ge.s32.totalorder %s26, 2
    %s28 = scalar_select %p27, 0, %s26
    %s29 = sadd.s32 1, %s20
    %s30 = scalar_select %p27, %s29, %s20
    %p31 = scmp.ge.s32.totalorder %s30, 2
    %s32 = scalar_select %p31, 0, %s30
    %s33 = ssub.s32 %s21, %s28
    %s34 = ssub.s32 %s20, %s32
    %s35 = sor.u32 %s33, %s34
    %p36 = scmp.eq.s32.totalorder %s35, 0
    %s38 = sadd.s32 %s37, 1
    %s39 = scalar_select %p36, %s37, %s38
    %p42 = pneg %p36
    %p43 = scmp.eq.s32.totalorder %s13, 3
    %p44 = por %p42, %p43
    %p45 = scmp.ne.s32.totalorder %s37, %s40
    %p46 = scmp.eq.s32.totalorder %s13, 0
    %p47 = por %p45, %p46
    %p48 = scmp.ne.s32.totalorder %s37, %s40
    %p49 = scmp.eq.s32.totalorder %s18, 3
    %p50 = por %p48, %p49
    %p51 = scmp.ne.s32.totalorder %s40, %s41
    %p52 = scmp.eq.s32.totalorder %s18, 0
    %p53 = por %p51, %p52
    %p54 = scmp.ne.s32.totalorder %s40, %s41
    %p55 = scmp.eq.s32.totalorder %s19, 3
    %p56 = por %p54, %p55
    %p58 = scmp.ne.s32.totalorder %s41, %s57
    %p59 = scmp.eq.s32.totalorder %s19, 0
    %p60 = por %p58, %p59
    %s62 = sadd.s32 %s61, 1
    %p65 = scmp.eq.s32.totalorder %s13, 3
    %p66 = scmp.ne.s32.totalorder %s61, %s63
    %p67 = scmp.eq.s32.totalorder %s13, 0
    %p68 = por %p66, %p67
    %p69 = scmp.ne.s32.totalorder %s61, %s63
    %p70 = scmp.eq.s32.totalorder %s18, 3
    %p71 = por %p69, %p70
    %p72 = scmp.ne.s32.totalorder %s63, %s64
    %p73 = scmp.eq.s32.totalorder %s18, 0
    %p74 = por %p72, %p73
    %p75 = scmp.ne.s32.totalorder %s63, %s64
    %p76 = scmp.eq.s32.totalorder %s19, 3
    %p77 = por %p75, %p76
    %p79 = scmp.ne.s32.totalorder %s64, %s78
    %p80 = scmp.eq.s32.totalorder %s19, 0
    %p81 = por %p79, %p80
    %s83 = sadd.s32 %s82, 1
    %p86 = scmp.eq.s32.totalorder %s13, 3
    %p87 = scmp.ne.s32.totalorder %s82, %s84
    %p88 = scmp.eq.s32.totalorder %s13, 0
    %p89 = por %p87, %p88
    %p90 = scmp.ne.s32.totalorder %s82, %s84
    %p91 = scmp.eq.s32.totalorder %s18, 3
    %p92 = por %p90, %p91
    %p93 = scmp.ne.s32.totalorder %s84, %s85
    %p94 = scmp.eq.s32.totalorder %s18, 0
    %p95 = por %p93, %p94
    %p96 = scmp.ne.s32.totalorder %s84, %s85
    %p97 = scmp.eq.s32.totalorder %s19, 3
    %p98 = por %p96, %p97
    %p100 = scmp.ne.s32.totalorder %s85, %s99
    %p101 = scmp.eq.s32.totalorder %s19, 0
    %p102 = por %p100, %p101
    %s104 = sadd.s32 %s103, 1
    %p107 = scmp.eq.s32.totalorder %s13, 3
    %p108 = scmp.ne.s32.totalorder %s103, %s105
    %p109 = scmp.eq.s32.totalorder %s13, 0
    %p110 = por %p108, %p109
    %p111 = scmp.ne.s32.totalorder %s103, %s105
    %p112 = scmp.eq.s32.totalorder %s18, 3
    %p113 = por %p111, %p112
    %p114 = scmp.ne.s32.totalorder %s105, %s106
    %p115 = scmp.eq.s32.totalorder %s18, 0
    %p116 = por %p114, %p115
    %p117 = scmp.ne.s32.totalorder %s105, %s106
    %p118 = scmp.eq.s32.totalorder %s19, 3
    %p119 = por %p117, %p118
    %p121 = scmp.ne.s32.totalorder %s106, %s120
    %p122 = scmp.eq.s32.totalorder %s19, 0
    %p123 = por %p121, %p122
    %s125 = sadd.s32 %s124, 1
    %p128 = scmp.eq.s32.totalorder %s13, 3
    %p129 = scmp.ne.s32.totalorder %s124, %s126
    %p130 = scmp.eq.s32.totalorder %s13, 0
    %p131 = por %p129, %p130
    %p132 = scmp.ne.s32.totalorder %s124, %s126
    %p133 = scmp.eq.s32.totalorder %s18, 3
    %p134 = por %p132, %p133
    %p135 = scmp.ne.s32.totalorder %s126, %s127
    %p136 = scmp.eq.s32.totalorder %s18, 0
    %p137 = por %p135, %p136
    %p138 = scmp.ne.s32.totalorder %s126, %s127
    %p139 = scmp.eq.s32.totalorder %s19, 3
    %p140 = por %p138, %p139
    %p142 = scmp.ne.s32.totalorder %s127, %s141
    %p143 = scmp.eq.s32.totalorder %s19, 0
    %p144 = por %p142, %p143
    %s146 = sadd.s32 %s145, 1
    %p149 = scmp.eq.s32.totalorder %s13, 3
    %p150 = scmp.ne.s32.totalorder %s145, %s147
    %p151 = scmp.eq.s32.totalorder %s13, 0
    %p152 = por %p150, %p151
    %p153 = scmp.ne.s32.totalorder %s145, %s147
    %p154 = scmp.eq.s32.totalorder %s18, 3
    %p155 = por %p153, %p154
    %p156 = scmp.ne.s32.totalorder %s147, %s148
    %p157 = scmp.eq.s32.totalorder %s18, 0
    %p158 = por %p156, %p157
    %p159 = scmp.ne.s32.totalorder %s147, %s148
    %p160 = scmp.eq.s32.totalorder %s19, 3
    %p161 = por %p159, %p160
    %p163 = scmp.ne.s32.totalorder %s148, %s162
    %p164 = scmp.eq.s32.totalorder %s19, 0
    %p165 = por %p163, %p164
    %s167 = sadd.s32 %s166, 1
    %p170 = scmp.eq.s32.totalorder %s13, 3
    %p171 = scmp.ne.s32.totalorder %s166, %s168
    %p172 = scmp.eq.s32.totalorder %s13, 0
    %p173 = por %p171, %p172
    %p174 = scmp.ne.s32.totalorder %s166, %s168
    %p175 = scmp.eq.s32.totalorder %s18, 3
    %p176 = por %p174, %p175
    %p177 = scmp.ne.s32.totalorder %s168, %s169
    %p178 = scmp.eq.s32.totalorder %s18, 0
    %p179 = por %p177, %p178
    %p180 = scmp.ne.s32.totalorder %s168, %s169
    %p181 = scmp.eq.s32.totalorder %s19, 3
    %p182 = por %p180, %p181
    %p184 = scmp.ne.s32.totalorder %s169, %s183
    %p185 = scmp.eq.s32.totalorder %s19, 0
    %p186 = por %p184, %p185
    %s187 = ssub.s32 %s21, %s28
    %s188 = ssub.s32 %s20, %s32
    %s189 = sor.u32 %s187, %s188
    %p190 = scmp.eq.s32.totalorder %s189, 0
    %s192 = sadd.s32 %s191, 1
    %s193 = scalar_select %p190, %s191, %s192
    %p196 = pneg %p190
    %p197 = scmp.eq.s32.totalorder %s13, 3
    %p198 = por %p196, %p197
    %p199 = scmp.ne.s32.totalorder %s191, %s194
    %p200 = scmp.eq.s32.totalorder %s13, 0
    %p201 = por %p199, %p200
    %p202 = scmp.ne.s32.totalorder %s191, %s194
    %p203 = scmp.eq.s32.totalorder %s18, 3
    %p204 = por %p202, %p203
    %p205 = scmp.ne.s32.totalorder %s194, %s195
    %p206 = scmp.eq.s32.totalorder %s18, 0
    %p207 = por %p205, %p206
    %p208 = scmp.ne.s32.totalorder %s194, %s195
    %p209 = scmp.eq.s32.totalorder %s19, 3
    %p210 = por %p208, %p209
    %p212 = scmp.ne.s32.totalorder %s195, %s211
    %p213 = scmp.eq.s32.totalorder %s19, 0
    %p214 = por %p212, %p213
    %p215 = scmp.le.s32.totalorder 1, %s13
    %p216 = scmp.lt.s32.totalorder %s13, 5
    %p217 = pnand %p215, %p216
    %p218 = pneg %p217
    // Predicated region
    $region9: #{top_mini_conv.1} parent=5 // pred_check
      _
    $region10: #{top_mini_conv.1} parent=5 // pred_check_branch
      %220 = sbr.rel (%p217) target = $region12
    $region11: #{top_mini_conv.1} parent=5 // pred_region
      %s221 = ssub.s32 %s13, 1
      // Predicated region
      $region13: #{top_mini_conv.1} parent=11 // pred_check
        %p222 = pneg %p74
      $region14: #{top_mini_conv.1} parent=11 // pred_check_branch
        %224 = sbr.rel (%p222) target = $region16
      $region15: #{top_mini_conv.1} parent=11 // pred_region
        _
      $region16: #{top_mini_conv.1} parent=11 // pred_fallthru
        _
      // Predicated region
      $region17: #{top_mini_conv.1} parent=11 // pred_check
        %p225 = pneg %p95
      $region18: #{top_mini_conv.1} parent=11 // pred_check_branch
        %227 = sbr.rel (%p225) target = $region20
      $region19: #{top_mini_conv.1} parent=11 // pred_region
        _
      $region20: #{top_mini_conv.1} parent=11 // pred_fallthru
        _
      // Predicated region
      $region21: #{top_mini_conv.1} parent=11 // pred_check
        %p228 = pneg %p116
      $region22: #{top_mini_conv.1} parent=11 // pred_check_branch
        %230 = sbr.rel (%p228) target = $region24
      $region23: #{top_mini_conv.1} parent=11 // pred_region
        _
      $region24: #{top_mini_conv.1} parent=11 // pred_fallthru
        _
      // Predicated region
      $region25: #{top_mini_conv.1} parent=11 // pred_check
        %p231 = pneg %p137
      $region26: #{top_mini_conv.1} parent=11 // pred_check_branch
        %233 = sbr.rel (%p231) target = $region28
      $region27: #{top_mini_conv.1} parent=11 // pred_region
        _
      $region28: #{top_mini_conv.1} parent=11 // pred_fallthru
        _
      // Predicated region
      $region29: #{top_mini_conv.1} parent=11 // pred_check
        %p234 = pneg %p158
      $region30: #{top_mini_conv.1} parent=11 // pred_check_branch
        %236 = sbr.rel (%p234) target = $region32
      $region31: #{top_mini_conv.1} parent=11 // pred_region
        _
      $region32: #{top_mini_conv.1} parent=11 // pred_fallthru
        _
      // Predicated region
      $region33: #{top_mini_conv.1} parent=11 // pred_check
        %p237 = pneg %p179
      $region34: #{top_mini_conv.1} parent=11 // pred_check_branch
        %239 = sbr.rel (%p237) target = $region36
      $region35: #{top_mini_conv.1} parent=11 // pred_region
        _
      $region36: #{top_mini_conv.1} parent=11 // pred_fallthru
        _
    $region12: #{top_mini_conv.1} parent=5 // pred_fallthru
      _
    %p240 = scmp.lt.s32.totalorder %s13, 4
    // Predicated region
    $region37: #{top_mini_conv.1} parent=5 // pred_check
      %p241 = pneg %p240
    $region38: #{top_mini_conv.1} parent=5 // pred_check_branch
      %243 = sbr.rel (%p241) target = $region40
    $region39: #{top_mini_conv.1} parent=5 // pred_region
      // Predicated region
      $region41: #{top_mini_conv.1} parent=39 // pred_check
        %p244 = pneg %p47
      $region42: #{top_mini_conv.1} parent=39 // pred_check_branch
        %246 = sbr.rel (%p244) target = $region44
      $region43: #{top_mini_conv.1} parent=39 // pred_region
        %p247 = scmp.lt.s32.totalorder %s21, 1
        %s248 = scalar_select %p247, %s21, 1
        %p249 = scmp.lt.s32.totalorder %s20, 1
        %s250 = scalar_select %p249, %s20, 1
        %s251 = smul.addr %s250, 2
        %s252 = smul.addr %s248, 4
        %s253 = sadd.s32 %s251, %s252
        %s254 = smul.addr %s253, 8
        %s255 = scalar_lea.vmem %s0, %s254
      $region44: #{top_mini_conv.1} parent=39 // pred_fallthru
        _
    $region40: #{top_mini_conv.1} parent=5 // pred_fallthru
      _
    %p256 = scmp.le.s32.totalorder 1, %s13
    %p257 = scmp.lt.s32.totalorder %s13, 5
    %p258 = pnand %p256, %p257
    %p259 = pneg %p258
    // Predicated region
    $region45: #{top_mini_conv.1} parent=5 // pred_check
      _
    $region46: #{top_mini_conv.1} parent=5 // pred_check_branch
      %261 = sbr.rel (%p258) target = $region48
    $region47: #{top_mini_conv.1} parent=5 // pred_region
      %s262 = ssub.s32 %s13, 1
      %p263 = scmp.lt.s32.totalorder %s23, 1
      %s264 = scalar_select %p263, %s23, 1
      %p265 = scmp.lt.s32.totalorder %s22, 1
      %s266 = scalar_select %p265, %s22, 1
      %s267 = smul.addr %s266, 2
      %s268 = smul.addr %s264, 4
      %s269 = sadd.s32 %s267, %s268
      %s270 = smul.addr %s269, 8
      %s271 = scalar_lea.vmem %s0, %s270
      %p272 = pneg %p53
      %p273 = pneg %p50
      %p274 = pneg %p74
      %p275 = pneg %p71
      %p276 = pneg %p95
      %p277 = pneg %p92
      %p278 = pneg %p116
      %p279 = pneg %p113
      %p280 = pneg %p137
      %p281 = pneg %p134
      %p282 = pneg %p158
      %p283 = pneg %p155
      %p284 = pneg %p179
      %p285 = pneg %p176
      %p286 = pneg %p207
      %p287 = pneg %p204
      %p288 = scmp.lt.s32.totalorder %s23, 1
      %s289 = scalar_select %p288, %s23, 1
      %p290 = scmp.lt.s32.totalorder %s22, 1
      %s291 = scalar_select %p290, %s22, 1
      %s292 = smul.addr %s289, 2
      %s293 = sadd.s32 %s291, %s292
      %s294 = smul.addr %s293, 8
      %s295 = scalar_lea.vmem %s7, %s294
      %p296 = scmp.lt.s32.totalorder %s23, 1
      %s297 = scalar_select %p296, %s23, 1
      %p298 = scmp.lt.s32.totalorder %s22, 1
      %s299 = scalar_select %p298, %s22, 1
      %s300 = smul.addr %s299, 2
      %s301 = smul.addr %s297, 4
      %s302 = sadd.s32 %s300, %s301
      %s303 = smul.addr %s302, 8
      %s304 = scalar_lea.vmem %s0, %s303
      %p305 = scmp.lt.s32.totalorder %s23, 1
      %s306 = scalar_select %p305, %s23, 1
      %p307 = scmp.lt.s32.totalorder %s22, 1
      %s308 = scalar_select %p307, %s22, 1
      %s309 = smul.addr %s306, 2
      %s310 = sadd.s32 %s308, %s309
      %s311 = smul.addr %s310, 8
      %s312 = scalar_lea.vmem %s7, %s311
      %v313 = vld [vmem:[%s304] sm:$0xff]
      %v314 = vld [vmem:[%s304 + $0x8] sm:$0xff]
      %v315 = vld [vmem:[%s1] sm:$0xff]
      %v316 = vld [vmem:[%s1 + $0x8] sm:$0xff]
      %v317 = vld [vmem:[%s1 + $0x10] sm:$0xff]
      %v318 = vld [vmem:[%s1 + $0x18] sm:$0xff]
      %v319 = vld [vmem:[%s1 + $0x20] sm:$0xff]
      %v320 = vld [vmem:[%s1 + $0x28] sm:$0xff]
      %v321 = vld [vmem:[%s1 + $0x30] sm:$0xff]
      %v322 = vld [vmem:[%s1 + $0x38] sm:$0xff]
      %v323 = vld [vmem:[%s1 + $0x40] sm:$0xff]
      %v324 = vld [vmem:[%s1 + $0x48] sm:$0xff]
      %v325 = vld [vmem:[%s1 + $0x50] sm:$0xff]
      %v326 = vld [vmem:[%s1 + $0x58] sm:$0xff]
      %v327 = vld [vmem:[%s1 + $0x60] sm:$0xff]
      %v328 = vld [vmem:[%s1 + $0x68] sm:$0xff]
      %v329 = vld [vmem:[%s1 + $0x70] sm:$0xff]
      %v330 = vld [vmem:[%s1 + $0x78] sm:$0xff]
      %v331 = vld [vmem:[%s1 + $0x80] sm:$0xff]
      %v332 = vld [vmem:[%s1 + $0x88] sm:$0xff]
      %v333 = vld [vmem:[%s1 + $0x90] sm:$0xff]
      %v334 = vld [vmem:[%s1 + $0x98] sm:$0xff]
      %v335 = vld [vmem:[%s1 + $0xa0] sm:$0xff]
      %v336 = vld [vmem:[%s1 + $0xa8] sm:$0xff]
      %v337 = vld [vmem:[%s1 + $0xb0] sm:$0xff]
      %v338 = vld [vmem:[%s1 + $0xb8] sm:$0xff]
      %v339 = vld [vmem:[%s1 + $0xc0] sm:$0xff]
      %v340 = vld [vmem:[%s1 + $0xc8] sm:$0xff]
      %v341 = vld [vmem:[%s1 + $0xd0] sm:$0xff]
      %v342 = vld [vmem:[%s1 + $0xd8] sm:$0xff]
      %v343 = vld [vmem:[%s1 + $0xe0] sm:$0xff]
      %v344 = vld [vmem:[%s1 + $0xe8] sm:$0xff]
      %v345 = vld [vmem:[%s1 + $0xf0] sm:$0xff]
      %v346 = vld [vmem:[%s1 + $0xf8] sm:$0xff]
      %v347 = vld [vmem:[%s1 + $0x100] sm:$0xff]
      %v348 = vld [vmem:[%s1 + $0x108] sm:$0xff]
      %v349 = vld [vmem:[%s1 + $0x110] sm:$0xff]
      %v350 = vld [vmem:[%s1 + $0x118] sm:$0xff]
      %v351 = vld [vmem:[%s1 + $0x120] sm:$0xff]
      %v352 = vld [vmem:[%s1 + $0x128] sm:$0xff]
      %v353 = vld [vmem:[%s1 + $0x130] sm:$0xff]
      %v354 = vld [vmem:[%s1 + $0x138] sm:$0xff]
      %v355 = vld [vmem:[%s1 + $0x140] sm:$0xff]
      %v356 = vld [vmem:[%s1 + $0x148] sm:$0xff]
      %v357 = vld [vmem:[%s1 + $0x150] sm:$0xff]
      %v358 = vld [vmem:[%s1 + $0x158] sm:$0xff]
      %v359 = vld [vmem:[%s1 + $0x160] sm:$0xff]
      %v360 = vld [vmem:[%s1 + $0x168] sm:$0xff]
      %v361 = vld [vmem:[%s1 + $0x170] sm:$0xff]
      %v362 = vld [vmem:[%s1 + $0x178] sm:$0xff]
      %v363 = vld [vmem:[%s1 + $0x180] sm:$0xff]
      %v364 = vld [vmem:[%s1 + $0x188] sm:$0xff]
      %v365 = vld [vmem:[%s1 + $0x190] sm:$0xff]
      %v366 = vld [vmem:[%s1 + $0x198] sm:$0xff]
      %v367 = vld [vmem:[%s1 + $0x1a0] sm:$0xff]
      %v368 = vld [vmem:[%s1 + $0x1a8] sm:$0xff]
      %v369 = vld [vmem:[%s1 + $0x1b0] sm:$0xff]
      %v370 = vld [vmem:[%s1 + $0x1b8] sm:$0xff]
      %v371 = vld [vmem:[%s1 + $0x1c0] sm:$0xff]
      %v372 = vld [vmem:[%s1 + $0x1c8] sm:$0xff]
      %v373 = vld [vmem:[%s1 + $0x1d0] sm:$0xff]
      %v374 = vld [vmem:[%s1 + $0x1d8] sm:$0xff]
      %v375 = vld [vmem:[%s1 + $0x1e0] sm:$0xff]
      %v376 = vld [vmem:[%s1 + $0x1e8] sm:$0xff]
      %v377 = vld [vmem:[%s1 + $0x1f0] sm:$0xff]
      %v378 = vld [vmem:[%s1 + $0x1f8] sm:$0xff]
      %v379 = vld [vmem:[%s2] sm:$0xf]
      %v381 = vlaneseq
      %v382 = vshrl.u32 %v381, 7
      %v383 = vsub.s32 0, %v382
      %v384 = vrot.slane %v379, %v383
      %v385 = vlaneseq
      %v386 = vshrl.u32 %v385, 7
      %v387 = vsub.s32 1, %v386
      %v388 = vrot.slane %v379, %v387
      %v389 = vlaneseq
      %v390 = vshrl.u32 %v389, 7
      %v391 = vsub.s32 2, %v390
      %v392 = vrot.slane %v379, %v391
      %v393 = vlaneseq
      %v394 = vshrl.u32 %v393, 7
      %v395 = vsub.s32 3, %v394
      %v396 = vrot.slane %v379, %v395
      %401 = vmatprep.subr.mxu0 %v316
      %402 = vmatpush1.msra.mxu0 %v315
      %403 = vmatprep.subr.mxu0 %v320
      %404 = vmatpush1.msra.mxu0 %v319
      %405 = vmatprep.subr.mxu0 %v324
      %406 = vmatpush1.msra.mxu0 %v323
      %407 = vmatprep.subr.mxu0 %v328
      %408 = vmatpush1.msra.mxu0 %v327
      %409 = vmatprep.subr.mxu0 %v332
      %410 = vmatpush1.msra.mxu0 %v331
      %411 = vmatprep.subr.mxu0 %v336
      %412 = vmatpush1.msra.mxu0 %v335
      %413 = vmatprep.subr.mxu0 %v340
      %414 = vmatpush1.msra.mxu0 %v339
      %415 = vmatprep.subr.mxu0 %v344
      %416 = vmatpush1.msra.mxu0 %v343
      %417 = vmatprep.subr.mxu0 %v348
      %418 = vmatpush1.msra.mxu0 %v347
      %419 = vmatprep.subr.mxu0 %v352
      %420 = vmatpush1.msra.mxu0 %v351
      %421 = vmatprep.subr.mxu0 %v356
      %422 = vmatpush1.msra.mxu0 %v355
      %423 = vmatprep.subr.mxu0 %v360
      %424 = vmatpush1.msra.mxu0 %v359
      %425 = vmatprep.subr.mxu0 %v364
      %426 = vmatpush1.msra.mxu0 %v363
      %427 = vmatprep.subr.mxu0 %v368
      %428 = vmatpush1.msra.mxu0 %v367
      %429 = vmatprep.subr.mxu0 %v372
      %430 = vmatpush1.msra.mxu0 %v371
      %431 = vmatprep.subr.mxu0 %v376
      %432 = vmatpush1.msra.mxu0 %v375
      %433 = vmatprep.subr.mxu0 0.0
      %434 = vmatpush1.msra.mxu0 0.0
      %435 = vmatprep.subr.mxu0 0.0
      %436 = vmatpush1.msra.mxu0 0.0
      %437 = vmatprep.subr.mxu0 0.0
      %438 = vmatpush1.msra.mxu0 0.0
      %439 = vmatprep.subr.mxu0 0.0
      %440 = vmatpush1.msra.mxu0 0.0
      %441 = vmatprep.subr.mxu0 0.0
      %442 = vmatpush1.msra.mxu0 0.0
      %443 = vmatprep.subr.mxu0 0.0
      %444 = vmatpush1.msra.mxu0 0.0
      %445 = vmatprep.subr.mxu0 0.0
      %446 = vmatpush1.msra.mxu0 0.0
      %447 = vmatprep.subr.mxu0 0.0
      %448 = vmatpush1.msra.mxu0 0.0
      %449 = vmatprep.subr.mxu0 0.0
      %450 = vmatpush1.msra.mxu0 0.0
      %451 = vmatprep.subr.mxu0 0.0
      %452 = vmatpush1.msra.mxu0 0.0
      %453 = vmatprep.subr.mxu0 0.0
      %454 = vmatpush1.msra.mxu0 0.0
      %455 = vmatprep.subr.mxu0 0.0
      %456 = vmatpush1.msra.mxu0 0.0
      %457 = vmatprep.subr.mxu0 0.0
      %458 = vmatpush1.msra.mxu0 0.0
      %459 = vmatprep.subr.mxu0 0.0
      %460 = vmatpush1.msra.mxu0 0.0
      %461 = vmatprep.subr.mxu0 0.0
      %462 = vmatpush1.msra.mxu0 0.0
      %463 = vmatprep.subr.mxu0 0.0
      %464 = vmatpush1.msra.mxu0 0.0
      %465 = vmatprep.mubr.f32.mxu0 0.0
      %466 = vmatmul.mubr.f32.gmra.mrb[0].mxu0 %v313
      %v467 = vpop.f32.mrb[0].mxu0
      %v468 = vadd.f32 %v384, %v467
      %v469 = vpop.f32.mrb[0].mxu0
      %v470 = vadd.f32 %v388, %v469
      %471 = vmatprep.mubr.f32.mxu0 0.0
      %472 = vmatmul.mubr.f32.gmra.mrb[0].mxu0 %v314
      %v473 = vpop.f32.mrb[0].mxu0
      %v474 = vadd.f32 %v384, %v473
      %v475 = vpop.f32.mrb[0].mxu0
      %v476 = vadd.f32 %v388, %v475
      %477 = vdwg.mxu0
      %478 = vmatprep.subr.mxu0 %v318
      %479 = vmatpush1.msra.mxu0 %v317
      %480 = vmatprep.subr.mxu0 %v322
      %481 = vmatpush1.msra.mxu0 %v321
      %482 = vmatprep.subr.mxu0 %v326
      %483 = vmatpush1.msra.mxu0 %v325
      %484 = vmatprep.subr.mxu0 %v330
      %485 = vmatpush1.msra.mxu0 %v329
      %486 = vmatprep.subr.mxu0 %v334
      %487 = vmatpush1.msra.mxu0 %v333
      %488 = vmatprep.subr.mxu0 %v338
      %489 = vmatpush1.msra.mxu0 %v337
      %490 = vmatprep.subr.mxu0 %v342
      %491 = vmatpush1.msra.mxu0 %v341
      %492 = vmatprep.subr.mxu0 %v346
      %493 = vmatpush1.msra.mxu0 %v345
      %494 = vmatprep.subr.mxu0 %v350
      %495 = vmatpush1.msra.mxu0 %v349
      %496 = vmatprep.subr.mxu0 %v354
      %497 = vmatpush1.msra.mxu0 %v353
      %498 = vmatprep.subr.mxu0 %v358
      %499 = vmatpush1.msra.mxu0 %v357
      %500 = vmatprep.subr.mxu0 %v362
      %501 = vmatpush1.msra.mxu0 %v361
      %502 = vmatprep.subr.mxu0 %v366
      %503 = vmatpush1.msra.mxu0 %v365
      %504 = vmatprep.subr.mxu0 %v370
      %505 = vmatpush1.msra.mxu0 %v369
      %506 = vmatprep.subr.mxu0 %v374
      %507 = vmatpush1.msra.mxu0 %v373
      %508 = vmatprep.subr.mxu0 %v378
      %509 = vmatpush1.msra.mxu0 %v377
      %510 = vmatprep.subr.mxu0 0.0
      %511 = vmatpush1.msra.mxu0 0.0
      %512 = vmatprep.subr.mxu0 0.0
      %513 = vmatpush1.msra.mxu0 0.0
      %514 = vmatprep.subr.mxu0 0.0
      %515 = vmatpush1.msra.mxu0 0.0
      %516 = vmatprep.subr.mxu0 0.0
      %517 = vmatpush1.msra.mxu0 0.0
      %518 = vmatprep.subr.mxu0 0.0
      %519 = vmatpush1.msra.mxu0 0.0
      %520 = vmatprep.subr.mxu0 0.0
      %521 = vmatpush1.msra.mxu0 0.0
      %522 = vmatprep.subr.mxu0 0.0
      %523 = vmatpush1.msra.mxu0 0.0
      %524 = vmatprep.subr.mxu0 0.0
      %525 = vmatpush1.msra.mxu0 0.0
      %526 = vmatprep.subr.mxu0 0.0
      %527 = vmatpush1.msra.mxu0 0.0
      %528 = vmatprep.subr.mxu0 0.0
      %529 = vmatpush1.msra.mxu0 0.0
      %530 = vmatprep.subr.mxu0 0.0
      %531 = vmatpush1.msra.mxu0 0.0
      %532 = vmatprep.subr.mxu0 0.0
      %533 = vmatpush1.msra.mxu0 0.0
      %534 = vmatprep.subr.mxu0 0.0
      %535 = vmatpush1.msra.mxu0 0.0
      %536 = vmatprep.subr.mxu0 0.0
      %537 = vmatpush1.msra.mxu0 0.0
      %538 = vmatprep.subr.mxu0 0.0
      %539 = vmatpush1.msra.mxu0 0.0
      %540 = vmatprep.subr.mxu0 0.0
      %541 = vmatpush1.msra.mxu0 0.0
      %542 = vmatprep.mubr.f32.mxu0 0.0
      %543 = vmatmul.mubr.f32.gmra.mrb[0].mxu0 %v313
      %v544 = vpop.f32.mrb[0].mxu0
      %v545 = vadd.f32 %v392, %v544
      %v546 = vpop.f32.mrb[0].mxu0
      %v547 = vadd.f32 %v396, %v546
      %548 = vmatprep.mubr.f32.mxu0 0.0
      %549 = vmatmul.mubr.f32.gmra.mrb[0].mxu0 %v314
      %v550 = vpop.f32.mrb[0].mxu0
      %v551 = vadd.f32 %v392, %v550
      %v552 = vpop.f32.mrb[0].mxu0
      %v553 = vadd.f32 %v396, %v552
      %554 = vdwg.mxu0
      %vm555 = vcmp.ge.f32.partialorder %v468, 0.0
      %vm556 = vcmp.ge.f32.partialorder %v470, 0.0
      %vm557 = vcmp.ge.f32.partialorder %v545, 0.0
      %vm558 = vcmp.ge.f32.partialorder %v547, 0.0
      %vm559 = vcmp.ge.f32.partialorder %v474, 0.0
      %vm560 = vcmp.ge.f32.partialorder %v476, 0.0
      %vm561 = vcmp.ge.f32.partialorder %v551, 0.0
      %vm562 = vcmp.ge.f32.partialorder %v553, 0.0
      %v563 = vmul.f32 %v468, 0.01
      %v564 = vmul.f32 %v470, 0.01
      %v565 = vmul.f32 %v545, 0.01
      %v566 = vmul.f32 %v547, 0.01
      %v567 = vmul.f32 %v474, 0.01
      %v568 = vmul.f32 %v476, 0.01
      %v569 = vmul.f32 %v551, 0.01
      %v570 = vmul.f32 %v553, 0.01
      %v571 = vsel %vm555, %v468, %v563
      %v572 = vsel %vm556, %v470, %v564
      %v573 = vsel %vm557, %v545, %v565
      %v574 = vsel %vm558, %v547, %v566
      %v575 = vsel %vm559, %v474, %v567
      %v576 = vsel %vm560, %v476, %v568
      %v577 = vsel %vm561, %v551, %v569
      %v578 = vsel %vm562, %v553, %v570
      %v579 = vld [vmem:[%s3] sm:$0xff]
      %v580 = vld [vmem:[%s3 + $0x8] sm:$0xff]
      %v581 = vld [vmem:[%s3 + $0x10] sm:$0xff]
      %v582 = vld [vmem:[%s3 + $0x18] sm:$0xff]
      %v583 = vld [vmem:[%s3 + $0x20] sm:$0xff]
      %v584 = vld [vmem:[%s3 + $0x28] sm:$0xff]
      %v585 = vld [vmem:[%s3 + $0x30] sm:$0xff]
      %v586 = vld [vmem:[%s3 + $0x38] sm:$0xff]
      %v587 = vld [vmem:[%s3 + $0x40] sm:$0xff]
      %v588 = vld [vmem:[%s3 + $0x48] sm:$0xff]
      %v589 = vld [vmem:[%s3 + $0x50] sm:$0xff]
      %v590 = vld [vmem:[%s3 + $0x58] sm:$0xff]
      %v591 = vld [vmem:[%s3 + $0x60] sm:$0xff]
      %v592 = vld [vmem:[%s3 + $0x68] sm:$0xff]
      %v593 = vld [vmem:[%s3 + $0x70] sm:$0xff]
      %v594 = vld [vmem:[%s3 + $0x78] sm:$0xff]
      %v595 = vld [vmem:[%s3 + $0x80] sm:$0xff]
      %v596 = vld [vmem:[%s3 + $0x88] sm:$0xff]
      %v597 = vld [vmem:[%s3 + $0x90] sm:$0xff]
      %v598 = vld [vmem:[%s3 + $0x98] sm:$0xff]
      %v599 = vld [vmem:[%s3 + $0xa0] sm:$0xff]
      %v600 = vld [vmem:[%s3 + $0xa8] sm:$0xff]
      %v601 = vld [vmem:[%s3 + $0xb0] sm:$0xff]
      %v602 = vld [vmem:[%s3 + $0xb8] sm:$0xff]
      %v603 = vld [vmem:[%s3 + $0xc0] sm:$0xff]
      %v604 = vld [vmem:[%s3 + $0xc8] sm:$0xff]
      %v605 = vld [vmem:[%s3 + $0xd0] sm:$0xff]
      %v606 = vld [vmem:[%s3 + $0xd8] sm:$0xff]
      %v607 = vld [vmem:[%s3 + $0xe0] sm:$0xff]
      %v608 = vld [vmem:[%s3 + $0xe8] sm:$0xff]
      %v609 = vld [vmem:[%s3 + $0xf0] sm:$0xff]
      %v610 = vld [vmem:[%s3 + $0xf8] sm:$0xff]
      %v611 = vld [vmem:[%s3 + $0x100] sm:$0xff]
      %v612 = vld [vmem:[%s3 + $0x108] sm:$0xff]
      %v613 = vld [vmem:[%s3 + $0x110] sm:$0xff]
      %v614 = vld [vmem:[%s3 + $0x118] sm:$0xff]
      %v615 = vld [vmem:[%s3 + $0x120] sm:$0xff]
      %v616 = vld [vmem:[%s3 + $0x128] sm:$0xff]
      %v617 = vld [vmem:[%s3 + $0x130] sm:$0xff]
      %v618 = vld [vmem:[%s3 + $0x138] sm:$0xff]
      %v619 = vld [vmem:[%s3 + $0x140] sm:$0xff]
      %v620 = vld [vmem:[%s3 + $0x148] sm:$0xff]
      %v621 = vld [vmem:[%s3 + $0x150] sm:$0xff]
      %v622 = vld [vmem:[%s3 + $0x158] sm:$0xff]
      %v623 = vld [vmem:[%s3 + $0x160] sm:$0xff]
      %v624 = vld [vmem:[%s3 + $0x168] sm:$0xff]
      %v625 = vld [vmem:[%s3 + $0x170] sm:$0xff]
      %v626 = vld [vmem:[%s3 + $0x178] sm:$0xff]
      %v627 = vld [vmem:[%s3 + $0x180] sm:$0xff]
      %v628 = vld [vmem:[%s3 + $0x188] sm:$0xff]
      %v629 = vld [vmem:[%s3 + $0x190] sm:$0xff]
      %v630 = vld [vmem:[%s3 + $0x198] sm:$0xff]
      %v631 = vld [vmem:[%s3 + $0x1a0] sm:$0xff]
      %v632 = vld [vmem:[%s3 + $0x1a8] sm:$0xff]
      %v633 = vld [vmem:[%s3 + $0x1b0] sm:$0xff]
      %v634 = vld [vmem:[%s3 + $0x1b8] sm:$0xff]
      %v635 = vld [vmem:[%s3 + $0x1c0] sm:$0xff]
      %v636 = vld [vmem:[%s3 + $0x1c8] sm:$0xff]
      %v637 = vld [vmem:[%s3 + $0x1d0] sm:$0xff]
      %v638 = vld [vmem:[%s3 + $0x1d8] sm:$0xff]
      %v639 = vld [vmem:[%s3 + $0x1e0] sm:$0xff]
      %v640 = vld [vmem:[%s3 + $0x1e8] sm:$0xff]
      %v641 = vld [vmem:[%s3 + $0x1f0] sm:$0xff]
      %v642 = vld [vmem:[%s3 + $0x1f8] sm:$0xff]
      %v643 = vld [vmem:[%s3 + $0x200] sm:$0xff]
      %v644 = vld [vmem:[%s3 + $0x208] sm:$0xff]
      %v645 = vld [vmem:[%s3 + $0x210] sm:$0xff]
      %v646 = vld [vmem:[%s3 + $0x218] sm:$0xff]
      %v647 = vld [vmem:[%s3 + $0x220] sm:$0xff]
      %v648 = vld [vmem:[%s3 + $0x228] sm:$0xff]
      %v649 = vld [vmem:[%s3 + $0x230] sm:$0xff]
      %v650 = vld [vmem:[%s3 + $0x238] sm:$0xff]
      %v651 = vld [vmem:[%s3 + $0x240] sm:$0xff]
      %v652 = vld [vmem:[%s3 + $0x248] sm:$0xff]
      %v653 = vld [vmem:[%s3 + $0x250] sm:$0xff]
      %v654 = vld [vmem:[%s3 + $0x258] sm:$0xff]
      %v655 = vld [vmem:[%s3 + $0x260] sm:$0xff]
      %v656 = vld [vmem:[%s3 + $0x268] sm:$0xff]
      %v657 = vld [vmem:[%s3 + $0x270] sm:$0xff]
      %v658 = vld [vmem:[%s3 + $0x278] sm:$0xff]
      %v659 = vld [vmem:[%s3 + $0x280] sm:$0xff]
      %v660 = vld [vmem:[%s3 + $0x288] sm:$0xff]
      %v661 = vld [vmem:[%s3 + $0x290] sm:$0xff]
      %v662 = vld [vmem:[%s3 + $0x298] sm:$0xff]
      %v663 = vld [vmem:[%s3 + $0x2a0] sm:$0xff]
      %v664 = vld [vmem:[%s3 + $0x2a8] sm:$0xff]
      %v665 = vld [vmem:[%s3 + $0x2b0] sm:$0xff]
      %v666 = vld [vmem:[%s3 + $0x2b8] sm:$0xff]
      %v667 = vld [vmem:[%s3 + $0x2c0] sm:$0xff]
      %v668 = vld [vmem:[%s3 + $0x2c8] sm:$0xff]
      %v669 = vld [vmem:[%s3 + $0x2d0] sm:$0xff]
      %v670 = vld [vmem:[%s3 + $0x2d8] sm:$0xff]
      %v671 = vld [vmem:[%s3 + $0x2e0] sm:$0xff]
      %v672 = vld [vmem:[%s3 + $0x2e8] sm:$0xff]
      %v673 = vld [vmem:[%s3 + $0x2f0] sm:$0xff]
      %v674 = vld [vmem:[%s3 + $0x2f8] sm:$0xff]
      %v675 = vld [vmem:[%s3 + $0x300] sm:$0xff]
      %v676 = vld [vmem:[%s3 + $0x308] sm:$0xff]
      %v677 = vld [vmem:[%s3 + $0x310] sm:$0xff]
      %v678 = vld [vmem:[%s3 + $0x318] sm:$0xff]
      %v679 = vld [vmem:[%s3 + $0x320] sm:$0xff]
      %v680 = vld [vmem:[%s3 + $0x328] sm:$0xff]
      %v681 = vld [vmem:[%s3 + $0x330] sm:$0xff]
      %v682 = vld [vmem:[%s3 + $0x338] sm:$0xff]
      %v683 = vld [vmem:[%s3 + $0x340] sm:$0xff]
      %v684 = vld [vmem:[%s3 + $0x348] sm:$0xff]
      %v685 = vld [vmem:[%s3 + $0x350] sm:$0xff]
      %v686 = vld [vmem:[%s3 + $0x358] sm:$0xff]
      %v687 = vld [vmem:[%s3 + $0x360] sm:$0xff]
      %v688 = vld [vmem:[%s3 + $0x368] sm:$0xff]
      %v689 = vld [vmem:[%s3 + $0x370] sm:$0xff]
      %v690 = vld [vmem:[%s3 + $0x378] sm:$0xff]
      %v691 = vld [vmem:[%s3 + $0x380] sm:$0xff]
      %v692 = vld [vmem:[%s3 + $0x388] sm:$0xff]
      %v693 = vld [vmem:[%s3 + $0x390] sm:$0xff]
      %v694 = vld [vmem:[%s3 + $0x398] sm:$0xff]
      %v695 = vld [vmem:[%s3 + $0x3a0] sm:$0xff]
      %v696 = vld [vmem:[%s3 + $0x3a8] sm:$0xff]
      %v697 = vld [vmem:[%s3 + $0x3b0] sm:$0xff]
      %v698 = vld [vmem:[%s3 + $0x3b8] sm:$0xff]
      %v699 = vld [vmem:[%s3 + $0x3c0] sm:$0xff]
      %v700 = vld [vmem:[%s3 + $0x3c8] sm:$0xff]
      %v701 = vld [vmem:[%s3 + $0x3d0] sm:$0xff]
      %v702 = vld [vmem:[%s3 + $0x3d8] sm:$0xff]
      %v703 = vld [vmem:[%s3 + $0x3e0] sm:$0xff]
      %v704 = vld [vmem:[%s3 + $0x3e8] sm:$0xff]
      %v705 = vld [vmem:[%s3 + $0x3f0] sm:$0xff]
      %v706 = vld [vmem:[%s3 + $0x3f8] sm:$0xff]
      %v707 = vld [vmem:[%s3 + $0x400] sm:$0xff]
      %v708 = vld [vmem:[%s3 + $0x408] sm:$0xff]
      %v709 = vld [vmem:[%s3 + $0x410] sm:$0xff]
      %v710 = vld [vmem:[%s3 + $0x418] sm:$0xff]
      %v711 = vld [vmem:[%s3 + $0x420] sm:$0xff]
      %v712 = vld [vmem:[%s3 + $0x428] sm:$0xff]
      %v713 = vld [vmem:[%s3 + $0x430] sm:$0xff]
      %v714 = vld [vmem:[%s3 + $0x438] sm:$0xff]
      %v715 = vld [vmem:[%s3 + $0x440] sm:$0xff]
      %v716 = vld [vmem:[%s3 + $0x448] sm:$0xff]
      %v717 = vld [vmem:[%s3 + $0x450] sm:$0xff]
      %v718 = vld [vmem:[%s3 + $0x458] sm:$0xff]
      %v719 = vld [vmem:[%s3 + $0x460] sm:$0xff]
      %v720 = vld [vmem:[%s3 + $0x468] sm:$0xff]
      %v721 = vld [vmem:[%s3 + $0x470] sm:$0xff]
      %v722 = vld [vmem:[%s3 + $0x478] sm:$0xff]
      %v723 = vld [vmem:[%s3 + $0x480] sm:$0xff]
      %v724 = vld [vmem:[%s3 + $0x488] sm:$0xff]
      %v725 = vld [vmem:[%s3 + $0x490] sm:$0xff]
      %v726 = vld [vmem:[%s3 + $0x498] sm:$0xff]
      %v727 = vld [vmem:[%s3 + $0x4a0] sm:$0xff]
      %v728 = vld [vmem:[%s3 + $0x4a8] sm:$0xff]
      %v729 = vld [vmem:[%s3 + $0x4b0] sm:$0xff]
      %v730 = vld [vmem:[%s3 + $0x4b8] sm:$0xff]
      %v731 = vld [vmem:[%s3 + $0x4c0] sm:$0xff]
      %v732 = vld [vmem:[%s3 + $0x4c8] sm:$0xff]
      %v733 = vld [vmem:[%s3 + $0x4d0] sm:$0xff]
      %v734 = vld [vmem:[%s3 + $0x4d8] sm:$0xff]
      %v735 = vld [vmem:[%s3 + $0x4e0] sm:$0xff]
      %v736 = vld [vmem:[%s3 + $0x4e8] sm:$0xff]
      %v737 = vld [vmem:[%s3 + $0x4f0] sm:$0xff]
      %v738 = vld [vmem:[%s3 + $0x4f8] sm:$0xff]
      %v739 = vld [vmem:[%s3 + $0x500] sm:$0xff]
      %v740 = vld [vmem:[%s3 + $0x508] sm:$0xff]
      %v741 = vld [vmem:[%s3 + $0x510] sm:$0xff]
      %v742 = vld [vmem:[%s3 + $0x518] sm:$0xff]
      %v743 = vld [vmem:[%s3 + $0x520] sm:$0xff]
      %v744 = vld [vmem:[%s3 + $0x528] sm:$0xff]
      %v745 = vld [vmem:[%s3 + $0x530] sm:$0xff]
      %v746 = vld [vmem:[%s3 + $0x538] sm:$0xff]
      %v747 = vld [vmem:[%s3 + $0x540] sm:$0xff]
      %v748 = vld [vmem:[%s3 + $0x548] sm:$0xff]
      %v749 = vld [vmem:[%s3 + $0x550] sm:$0xff]
      %v750 = vld [vmem:[%s3 + $0x558] sm:$0xff]
      %v751 = vld [vmem:[%s3 + $0x560] sm:$0xff]
      %v752 = vld [vmem:[%s3 + $0x568] sm:$0xff]
      %v753 = vld [vmem:[%s3 + $0x570] sm:$0xff]
      %v754 = vld [vmem:[%s3 + $0x578] sm:$0xff]
      %v755 = vld [vmem:[%s3 + $0x580] sm:$0xff]
      %v756 = vld [vmem:[%s3 + $0x588] sm:$0xff]
      %v757 = vld [vmem:[%s3 + $0x590] sm:$0xff]
      %v758 = vld [vmem:[%s3 + $0x598] sm:$0xff]
      %v759 = vld [vmem:[%s3 + $0x5a0] sm:$0xff]
      %v760 = vld [vmem:[%s3 + $0x5a8] sm:$0xff]
      %v761 = vld [vmem:[%s3 + $0x5b0] sm:$0xff]
      %v762 = vld [vmem:[%s3 + $0x5b8] sm:$0xff]
      %v763 = vld [vmem:[%s3 + $0x5c0] sm:$0xff]
      %v764 = vld [vmem:[%s3 + $0x5c8] sm:$0xff]
      %v765 = vld [vmem:[%s3 + $0x5d0] sm:$0xff]
      %v766 = vld [vmem:[%s3 + $0x5d8] sm:$0xff]
      %v767 = vld [vmem:[%s3 + $0x5e0] sm:$0xff]
      %v768 = vld [vmem:[%s3 + $0x5e8] sm:$0xff]
      %v769 = vld [vmem:[%s3 + $0x5f0] sm:$0xff]
      %v770 = vld [vmem:[%s3 + $0x5f8] sm:$0xff]
      %v771 = vld [vmem:[%s3 + $0x600] sm:$0xff]
      %v772 = vld [vmem:[%s3 + $0x608] sm:$0xff]
      %v773 = vld [vmem:[%s3 + $0x610] sm:$0xff]
      %v774 = vld [vmem:[%s3 + $0x618] sm:$0xff]
      %v775 = vld [vmem:[%s3 + $0x620] sm:$0xff]
      %v776 = vld [vmem:[%s3 + $0x628] sm:$0xff]
      %v777 = vld [vmem:[%s3 + $0x630] sm:$0xff]
      %v778 = vld [vmem:[%s3 + $0x638] sm:$0xff]
      %v779 = vld [vmem:[%s3 + $0x640] sm:$0xff]
      %v780 = vld [vmem:[%s3 + $0x648] sm:$0xff]
      %v781 = vld [vmem:[%s3 + $0x650] sm:$0xff]
      %v782 = vld [vmem:[%s3 + $0x658] sm:$0xff]
      %v783 = vld [vmem:[%s3 + $0x660] sm:$0xff]
      %v784 = vld [vmem:[%s3 + $0x668] sm:$0xff]
      %v785 = vld [vmem:[%s3 + $0x670] sm:$0xff]
      %v786 = vld [vmem:[%s3 + $0x678] sm:$0xff]
      %v787 = vld [vmem:[%s3 + $0x680] sm:$0xff]
      %v788 = vld [vmem:[%s3 + $0x688] sm:$0xff]
      %v789 = vld [vmem:[%s3 + $0x690] sm:$0xff]
      %v790 = vld [vmem:[%s3 + $0x698] sm:$0xff]
      %v791 = vld [vmem:[%s3 + $0x6a0] sm:$0xff]
      %v792 = vld [vmem:[%s3 + $0x6a8] sm:$0xff]
      %v793 = vld [vmem:[%s3 + $0x6b0] sm:$0xff]
      %v794 = vld [vmem:[%s3 + $0x6b8] sm:$0xff]
      %v795 = vld [vmem:[%s3 + $0x6c0] sm:$0xff]
      %v796 = vld [vmem:[%s3 + $0x6c8] sm:$0xff]
      %v797 = vld [vmem:[%s3 + $0x6d0] sm:$0xff]
      %v798 = vld [vmem:[%s3 + $0x6d8] sm:$0xff]
      %v799 = vld [vmem:[%s3 + $0x6e0] sm:$0xff]
      %v800 = vld [vmem:[%s3 + $0x6e8] sm:$0xff]
      %v801 = vld [vmem:[%s3 + $0x6f0] sm:$0xff]
      %v802 = vld [vmem:[%s3 + $0x6f8] sm:$0xff]
      %v803 = vld [vmem:[%s3 + $0x700] sm:$0xff]
      %v804 = vld [vmem:[%s3 + $0x708] sm:$0xff]
      %v805 = vld [vmem:[%s3 + $0x710] sm:$0xff]
      %v806 = vld [vmem:[%s3 + $0x718] sm:$0xff]
      %v807 = vld [vmem:[%s3 + $0x720] sm:$0xff]
      %v808 = vld [vmem:[%s3 + $0x728] sm:$0xff]
      %v809 = vld [vmem:[%s3 + $0x730] sm:$0xff]
      %v810 = vld [vmem:[%s3 + $0x738] sm:$0xff]
      %v811 = vld [vmem:[%s3 + $0x740] sm:$0xff]
      %v812 = vld [vmem:[%s3 + $0x748] sm:$0xff]
      %v813 = vld [vmem:[%s3 + $0x750] sm:$0xff]
      %v814 = vld [vmem:[%s3 + $0x758] sm:$0xff]
      %v815 = vld [vmem:[%s3 + $0x760] sm:$0xff]
      %v816 = vld [vmem:[%s3 + $0x768] sm:$0xff]
      %v817 = vld [vmem:[%s3 + $0x770] sm:$0xff]
      %v818 = vld [vmem:[%s3 + $0x778] sm:$0xff]
      %v819 = vld [vmem:[%s3 + $0x780] sm:$0xff]
      %v820 = vld [vmem:[%s3 + $0x788] sm:$0xff]
      %v821 = vld [vmem:[%s3 + $0x790] sm:$0xff]
      %v822 = vld [vmem:[%s3 + $0x798] sm:$0xff]
      %v823 = vld [vmem:[%s3 + $0x7a0] sm:$0xff]
      %v824 = vld [vmem:[%s3 + $0x7a8] sm:$0xff]
      %v825 = vld [vmem:[%s3 + $0x7b0] sm:$0xff]
      %v826 = vld [vmem:[%s3 + $0x7b8] sm:$0xff]
      %v827 = vld [vmem:[%s3 + $0x7c0] sm:$0xff]
      %v828 = vld [vmem:[%s3 + $0x7c8] sm:$0xff]
      %v829 = vld [vmem:[%s3 + $0x7d0] sm:$0xff]
      %v830 = vld [vmem:[%s3 + $0x7d8] sm:$0xff]
      %v831 = vld [vmem:[%s3 + $0x7e0] sm:$0xff]
      %v832 = vld [vmem:[%s3 + $0x7e8] sm:$0xff]
      %v833 = vld [vmem:[%s3 + $0x7f0] sm:$0xff]
      %v834 = vld [vmem:[%s3 + $0x7f8] sm:$0xff]
      %v835 = vrot.slane %v571, 1
      %v836 = vrot.slane %v572, 1
      %v837 = vrot.slane %v573, 1
      %v838 = vrot.slane %v574, 1
      %v839 = vrot.slane %v575, 1
      %v840 = vrot.slane %v576, 1
      %v841 = vrot.slane %v577, 1
      %v842 = vrot.slane %v578, 1
      %v843 = vlaneseq
      %v844 = vshrl.u32 %v843, 7
      %vm845 = vcmp.lt.s32.totalorder %v844, 7
      %v846 = vsel %vm845, %v835, %v839
      %v847 = vsel %vm845, %v836, %v840
      %v848 = vsel %vm845, %v837, %v841
      %v849 = vsel %vm845, %v838, %v842
      %v850 = vsel %vm845, %v839, %v835
      %v851 = vsel %vm845, %v840, %v836
      %v852 = vsel %vm845, %v841, %v837
      %v853 = vsel %vm845, %v842, %v838
      %s854 = scalar_lea.vmem %s3, 2048
      %v855 = vld [vmem:[%s854] sm:$0xff]
      %v856 = vld [vmem:[%s854 + $0x8] sm:$0xff]
      %v857 = vld [vmem:[%s854 + $0x10] sm:$0xff]
      %v858 = vld [vmem:[%s854 + $0x18] sm:$0xff]
      %v859 = vld [vmem:[%s854 + $0x20] sm:$0xff]
      %v860 = vld [vmem:[%s854 + $0x28] sm:$0xff]
      %v861 = vld [vmem:[%s854 + $0x30] sm:$0xff]
      %v862 = vld [vmem:[%s854 + $0x38] sm:$0xff]
      %v863 = vld [vmem:[%s854 + $0x40] sm:$0xff]
      %v864 = vld [vmem:[%s854 + $0x48] sm:$0xff]
      %v865 = vld [vmem:[%s854 + $0x50] sm:$0xff]
      %v866 = vld [vmem:[%s854 + $0x58] sm:$0xff]
      %v867 = vld [vmem:[%s854 + $0x60] sm:$0xff]
      %v868 = vld [vmem:[%s854 + $0x68] sm:$0xff]
      %v869 = vld [vmem:[%s854 + $0x70] sm:$0xff]
      %v870 = vld [vmem:[%s854 + $0x78] sm:$0xff]
      %v871 = vld [vmem:[%s854 + $0x80] sm:$0xff]
      %v872 = vld [vmem:[%s854 + $0x88] sm:$0xff]
      %v873 = vld [vmem:[%s854 + $0x90] sm:$0xff]
      %v874 = vld [vmem:[%s854 + $0x98] sm:$0xff]
      %v875 = vld [vmem:[%s854 + $0xa0] sm:$0xff]
      %v876 = vld [vmem:[%s854 + $0xa8] sm:$0xff]
      %v877 = vld [vmem:[%s854 + $0xb0] sm:$0xff]
      %v878 = vld [vmem:[%s854 + $0xb8] sm:$0xff]
      %v879 = vld [vmem:[%s854 + $0xc0] sm:$0xff]
      %v880 = vld [vmem:[%s854 + $0xc8] sm:$0xff]
      %v881 = vld [vmem:[%s854 + $0xd0] sm:$0xff]
      %v882 = vld [vmem:[%s854 + $0xd8] sm:$0xff]
      %v883 = vld [vmem:[%s854 + $0xe0] sm:$0xff]
      %v884 = vld [vmem:[%s854 + $0xe8] sm:$0xff]
      %v885 = vld [vmem:[%s854 + $0xf0] sm:$0xff]
      %v886 = vld [vmem:[%s854 + $0xf8] sm:$0xff]
      %v887 = vld [vmem:[%s854 + $0x100] sm:$0xff]
      %v888 = vld [vmem:[%s854 + $0x108] sm:$0xff]
      %v889 = vld [vmem:[%s854 + $0x110] sm:$0xff]
      %v890 = vld [vmem:[%s854 + $0x118] sm:$0xff]
      %v891 = vld [vmem:[%s854 + $0x120] sm:$0xff]
      %v892 = vld [vmem:[%s854 + $0x128] sm:$0xff]
      %v893 = vld [vmem:[%s854 + $0x130] sm:$0xff]
      %v894 = vld [vmem:[%s854 + $0x138] sm:$0xff]
      %v895 = vld [vmem:[%s854 + $0x140] sm:$0xff]
      %v896 = vld [vmem:[%s854 + $0x148] sm:$0xff]
      %v897 = vld [vmem:[%s854 + $0x150] sm:$0xff]
      %v898 = vld [vmem:[%s854 + $0x158] sm:$0xff]
      %v899 = vld [vmem:[%s854 + $0x160] sm:$0xff]
      %v900 = vld [vmem:[%s854 + $0x168] sm:$0xff]
      %v901 = vld [vmem:[%s854 + $0x170] sm:$0xff]
      %v902 = vld [vmem:[%s854 + $0x178] sm:$0xff]
      %v903 = vld [vmem:[%s854 + $0x180] sm:$0xff]
      %v904 = vld [vmem:[%s854 + $0x188] sm:$0xff]
      %v905 = vld [vmem:[%s854 + $0x190] sm:$0xff]
      %v906 = vld [vmem:[%s854 + $0x198] sm:$0xff]
      %v907 = vld [vmem:[%s854 + $0x1a0] sm:$0xff]
      %v908 = vld [vmem:[%s854 + $0x1a8] sm:$0xff]
      %v909 = vld [vmem:[%s854 + $0x1b0] sm:$0xff]
      %v910 = vld [vmem:[%s854 + $0x1b8] sm:$0xff]
      %v911 = vld [vmem:[%s854 + $0x1c0] sm:$0xff]
      %v912 = vld [vmem:[%s854 + $0x1c8] sm:$0xff]
      %v913 = vld [vmem:[%s854 + $0x1d0] sm:$0xff]
      %v914 = vld [vmem:[%s854 + $0x1d8] sm:$0xff]
      %v915 = vld [vmem:[%s854 + $0x1e0] sm:$0xff]
      %v916 = vld [vmem:[%s854 + $0x1e8] sm:$0xff]
      %v917 = vld [vmem:[%s854 + $0x1f0] sm:$0xff]
      %v918 = vld [vmem:[%s854 + $0x1f8] sm:$0xff]
      %v919 = vld [vmem:[%s854 + $0x200] sm:$0xff]
      %v920 = vld [vmem:[%s854 + $0x208] sm:$0xff]
      %v921 = vld [vmem:[%s854 + $0x210] sm:$0xff]
      %v922 = vld [vmem:[%s854 + $0x218] sm:$0xff]
      %v923 = vld [vmem:[%s854 + $0x220] sm:$0xff]
      %v924 = vld [vmem:[%s854 + $0x228] sm:$0xff]
      %v925 = vld [vmem:[%s854 + $0x230] sm:$0xff]
      %v926 = vld [vmem:[%s854 + $0x238] sm:$0xff]
      %v927 = vld [vmem:[%s854 + $0x240] sm:$0xff]
      %v928 = vld [vmem:[%s854 + $0x248] sm:$0xff]
      %v929 = vld [vmem:[%s854 + $0x250] sm:$0xff]
      %v930 = vld [vmem:[%s854 + $0x258] sm:$0xff]
      %v931 = vld [vmem:[%s854 + $0x260] sm:$0xff]
      %v932 = vld [vmem:[%s854 + $0x268] sm:$0xff]
      %v933 = vld [vmem:[%s854 + $0x270] sm:$0xff]
      %v934 = vld [vmem:[%s854 + $0x278] sm:$0xff]
      %v935 = vld [vmem:[%s854 + $0x280] sm:$0xff]
      %v936 = vld [vmem:[%s854 + $0x288] sm:$0xff]
      %v937 = vld [vmem:[%s854 + $0x290] sm:$0xff]
      %v938 = vld [vmem:[%s854 + $0x298] sm:$0xff]
      %v939 = vld [vmem:[%s854 + $0x2a0] sm:$0xff]
      %v940 = vld [vmem:[%s854 + $0x2a8] sm:$0xff]
      %v941 = vld [vmem:[%s854 + $0x2b0] sm:$0xff]
      %v942 = vld [vmem:[%s854 + $0x2b8] sm:$0xff]
      %v943 = vld [vmem:[%s854 + $0x2c0] sm:$0xff]
      %v944 = vld [vmem:[%s854 + $0x2c8] sm:$0xff]
      %v945 = vld [vmem:[%s854 + $0x2d0] sm:$0xff]
      %v946 = vld [vmem:[%s854 + $0x2d8] sm:$0xff]
      %v947 = vld [vmem:[%s854 + $0x2e0] sm:$0xff]
      %v948 = vld [vmem:[%s854 + $0x2e8] sm:$0xff]
      %v949 = vld [vmem:[%s854 + $0x2f0] sm:$0xff]
      %v950 = vld [vmem:[%s854 + $0x2f8] sm:$0xff]
      %v951 = vld [vmem:[%s854 + $0x300] sm:$0xff]
      %v952 = vld [vmem:[%s854 + $0x308] sm:$0xff]
      %v953 = vld [vmem:[%s854 + $0x310] sm:$0xff]
      %v954 = vld [vmem:[%s854 + $0x318] sm:$0xff]
      %v955 = vld [vmem:[%s854 + $0x320] sm:$0xff]
      %v956 = vld [vmem:[%s854 + $0x328] sm:$0xff]
      %v957 = vld [vmem:[%s854 + $0x330] sm:$0xff]
      %v958 = vld [vmem:[%s854 + $0x338] sm:$0xff]
      %v959 = vld [vmem:[%s854 + $0x340] sm:$0xff]
      %v960 = vld [vmem:[%s854 + $0x348] sm:$0xff]
      %v961 = vld [vmem:[%s854 + $0x350] sm:$0xff]
      %v962 = vld [vmem:[%s854 + $0x358] sm:$0xff]
      %v963 = vld [vmem:[%s854 + $0x360] sm:$0xff]
      %v964 = vld [vmem:[%s854 + $0x368] sm:$0xff]
      %v965 = vld [vmem:[%s854 + $0x370] sm:$0xff]
      %v966 = vld [vmem:[%s854 + $0x378] sm:$0xff]
      %v967 = vld [vmem:[%s854 + $0x380] sm:$0xff]
      %v968 = vld [vmem:[%s854 + $0x388] sm:$0xff]
      %v969 = vld [vmem:[%s854 + $0x390] sm:$0xff]
      %v970 = vld [vmem:[%s854 + $0x398] sm:$0xff]
      %v971 = vld [vmem:[%s854 + $0x3a0] sm:$0xff]
      %v972 = vld [vmem:[%s854 + $0x3a8] sm:$0xff]
      %v973 = vld [vmem:[%s854 + $0x3b0] sm:$0xff]
      %v974 = vld [vmem:[%s854 + $0x3b8] sm:$0xff]
      %v975 = vld [vmem:[%s854 + $0x3c0] sm:$0xff]
      %v976 = vld [vmem:[%s854 + $0x3c8] sm:$0xff]
      %v977 = vld [vmem:[%s854 + $0x3d0] sm:$0xff]
      %v978 = vld [vmem:[%s854 + $0x3d8] sm:$0xff]
      %v979 = vld [vmem:[%s854 + $0x3e0] sm:$0xff]
      %v980 = vld [vmem:[%s854 + $0x3e8] sm:$0xff]
      %v981 = vld [vmem:[%s854 + $0x3f0] sm:$0xff]
      %v982 = vld [vmem:[%s854 + $0x3f8] sm:$0xff]
      %v983 = vld [vmem:[%s854 + $0x400] sm:$0xff]
      %v984 = vld [vmem:[%s854 + $0x408] sm:$0xff]
      %v985 = vld [vmem:[%s854 + $0x410] sm:$0xff]
      %v986 = vld [vmem:[%s854 + $0x418] sm:$0xff]
      %v987 = vld [vmem:[%s854 + $0x420] sm:$0xff]
      %v988 = vld [vmem:[%s854 + $0x428] sm:$0xff]
      %v989 = vld [vmem:[%s854 + $0x430] sm:$0xff]
      %v990 = vld [vmem:[%s854 + $0x438] sm:$0xff]
      %v991 = vld [vmem:[%s854 + $0x440] sm:$0xff]
      %v992 = vld [vmem:[%s854 + $0x448] sm:$0xff]
      %v993 = vld [vmem:[%s854 + $0x450] sm:$0xff]
      %v994 = vld [vmem:[%s854 + $0x458] sm:$0xff]
      %v995 = vld [vmem:[%s854 + $0x460] sm:$0xff]
      %v996 = vld [vmem:[%s854 + $0x468] sm:$0xff]
      %v997 = vld [vmem:[%s854 + $0x470] sm:$0xff]
      %v998 = vld [vmem:[%s854 + $0x478] sm:$0xff]
      %v999 = vld [vmem:[%s854 + $0x480] sm:$0xff]
      %v1000 = vld [vmem:[%s854 + $0x488] sm:$0xff]
      %v1001 = vld [vmem:[%s854 + $0x490] sm:$0xff]
      %v1002 = vld [vmem:[%s854 + $0x498] sm:$0xff]
      %v1003 = vld [vmem:[%s854 + $0x4a0] sm:$0xff]
      %v1004 = vld [vmem:[%s854 + $0x4a8] sm:$0xff]
      %v1005 = vld [vmem:[%s854 + $0x4b0] sm:$0xff]
      %v1006 = vld [vmem:[%s854 + $0x4b8] sm:$0xff]
      %v1007 = vld [vmem:[%s854 + $0x4c0] sm:$0xff]
      %v1008 = vld [vmem:[%s854 + $0x4c8] sm:$0xff]
      %v1009 = vld [vmem:[%s854 + $0x4d0] sm:$0xff]
      %v1010 = vld [vmem:[%s854 + $0x4d8] sm:$0xff]
      %v1011 = vld [vmem:[%s854 + $0x4e0] sm:$0xff]
      %v1012 = vld [vmem:[%s854 + $0x4e8] sm:$0xff]
      %v1013 = vld [vmem:[%s854 + $0x4f0] sm:$0xff]
      %v1014 = vld [vmem:[%s854 + $0x4f8] sm:$0xff]
      %v1015 = vld [vmem:[%s854 + $0x500] sm:$0xff]
      %v1016 = vld [vmem:[%s854 + $0x508] sm:$0xff]
      %v1017 = vld [vmem:[%s854 + $0x510] sm:$0xff]
      %v1018 = vld [vmem:[%s854 + $0x518] sm:$0xff]
      %v1019 = vld [vmem:[%s854 + $0x520] sm:$0xff]
      %v1020 = vld [vmem:[%s854 + $0x528] sm:$0xff]
      %v1021 = vld [vmem:[%s854 + $0x530] sm:$0xff]
      %v1022 = vld [vmem:[%s854 + $0x538] sm:$0xff]
      %v1023 = vld [vmem:[%s854 + $0x540] sm:$0xff]
      %v1024 = vld [vmem:[%s854 + $0x548] sm:$0xff]
      %v1025 = vld [vmem:[%s854 + $0x550] sm:$0xff]
      %v1026 = vld [vmem:[%s854 + $0x558] sm:$0xff]
      %v1027 = vld [vmem:[%s854 + $0x560] sm:$0xff]
      %v1028 = vld [vmem:[%s854 + $0x568] sm:$0xff]
      %v1029 = vld [vmem:[%s854 + $0x570] sm:$0xff]
      %v1030 = vld [vmem:[%s854 + $0x578] sm:$0xff]
      %v1031 = vld [vmem:[%s854 + $0x580] sm:$0xff]
      %v1032 = vld [vmem:[%s854 + $0x588] sm:$0xff]
      %v1033 = vld [vmem:[%s854 + $0x590] sm:$0xff]
      %v1034 = vld [vmem:[%s854 + $0x598] sm:$0xff]
      %v1035 = vld [vmem:[%s854 + $0x5a0] sm:$0xff]
      %v1036 = vld [vmem:[%s854 + $0x5a8] sm:$0xff]
      %v1037 = vld [vmem:[%s854 + $0x5b0] sm:$0xff]
      %v1038 = vld [vmem:[%s854 + $0x5b8] sm:$0xff]
      %v1039 = vld [vmem:[%s854 + $0x5c0] sm:$0xff]
      %v1040 = vld [vmem:[%s854 + $0x5c8] sm:$0xff]
      %v1041 = vld [vmem:[%s854 + $0x5d0] sm:$0xff]
      %v1042 = vld [vmem:[%s854 + $0x5d8] sm:$0xff]
      %v1043 = vld [vmem:[%s854 + $0x5e0] sm:$0xff]
      %v1044 = vld [vmem:[%s854 + $0x5e8] sm:$0xff]
      %v1045 = vld [vmem:[%s854 + $0x5f0] sm:$0xff]
      %v1046 = vld [vmem:[%s854 + $0x5f8] sm:$0xff]
      %v1047 = vld [vmem:[%s854 + $0x600] sm:$0xff]
      %v1048 = vld [vmem:[%s854 + $0x608] sm:$0xff]
      %v1049 = vld [vmem:[%s854 + $0x610] sm:$0xff]
      %v1050 = vld [vmem:[%s854 + $0x618] sm:$0xff]
      %v1051 = vld [vmem:[%s854 + $0x620] sm:$0xff]
      %v1052 = vld [vmem:[%s854 + $0x628] sm:$0xff]
      %v1053 = vld [vmem:[%s854 + $0x630] sm:$0xff]
      %v1054 = vld [vmem:[%s854 + $0x638] sm:$0xff]
      %v1055 = vld [vmem:[%s854 + $0x640] sm:$0xff]
      %v1056 = vld [vmem:[%s854 + $0x648] sm:$0xff]
      %v1057 = vld [vmem:[%s854 + $0x650] sm:$0xff]
      %v1058 = vld [vmem:[%s854 + $0x658] sm:$0xff]
      %v1059 = vld [vmem:[%s854 + $0x660] sm:$0xff]
      %v1060 = vld [vmem:[%s854 + $0x668] sm:$0xff]
      %v1061 = vld [vmem:[%s854 + $0x670] sm:$0xff]
      %v1062 = vld [vmem:[%s854 + $0x678] sm:$0xff]
      %v1063 = vld [vmem:[%s854 + $0x680] sm:$0xff]
      %v1064 = vld [vmem:[%s854 + $0x688] sm:$0xff]
      %v1065 = vld [vmem:[%s854 + $0x690] sm:$0xff]
      %v1066 = vld [vmem:[%s854 + $0x698] sm:$0xff]
      %v1067 = vld [vmem:[%s854 + $0x6a0] sm:$0xff]
      %v1068 = vld [vmem:[%s854 + $0x6a8] sm:$0xff]
      %v1069 = vld [vmem:[%s854 + $0x6b0] sm:$0xff]
      %v1070 = vld [vmem:[%s854 + $0x6b8] sm:$0xff]
      %v1071 = vld [vmem:[%s854 + $0x6c0] sm:$0xff]
      %v1072 = vld [vmem:[%s854 + $0x6c8] sm:$0xff]
      %v1073 = vld [vmem:[%s854 + $0x6d0] sm:$0xff]
      %v1074 = vld [vmem:[%s854 + $0x6d8] sm:$0xff]
      %v1075 = vld [vmem:[%s854 + $0x6e0] sm:$0xff]
      %v1076 = vld [vmem:[%s854 + $0x6e8] sm:$0xff]
      %v1077 = vld [vmem:[%s854 + $0x6f0] sm:$0xff]
      %v1078 = vld [vmem:[%s854 + $0x6f8] sm:$0xff]
      %v1079 = vld [vmem:[%s854 + $0x700] sm:$0xff]
      %v1080 = vld [vmem:[%s854 + $0x708] sm:$0xff]
      %v1081 = vld [vmem:[%s854 + $0x710] sm:$0xff]
      %v1082 = vld [vmem:[%s854 + $0x718] sm:$0xff]
      %v1083 = vld [vmem:[%s854 + $0x720] sm:$0xff]
      %v1084 = vld [vmem:[%s854 + $0x728] sm:$0xff]
      %v1085 = vld [vmem:[%s854 + $0x730] sm:$0xff]
      %v1086 = vld [vmem:[%s854 + $0x738] sm:$0xff]
      %v1087 = vld [vmem:[%s854 + $0x740] sm:$0xff]
      %v1088 = vld [vmem:[%s854 + $0x748] sm:$0xff]
      %v1089 = vld [vmem:[%s854 + $0x750] sm:$0xff]
      %v1090 = vld [vmem:[%s854 + $0x758] sm:$0xff]
      %v1091 = vld [vmem:[%s854 + $0x760] sm:$0xff]
      %v1092 = vld [vmem:[%s854 + $0x768] sm:$0xff]
      %v1093 = vld [vmem:[%s854 + $0x770] sm:$0xff]
      %v1094 = vld [vmem:[%s854 + $0x778] sm:$0xff]
      %v1095 = vld [vmem:[%s854 + $0x780] sm:$0xff]
      %v1096 = vld [vmem:[%s854 + $0x788] sm:$0xff]
      %v1097 = vld [vmem:[%s854 + $0x790] sm:$0xff]
      %v1098 = vld [vmem:[%s854 + $0x798] sm:$0xff]
      %v1099 = vld [vmem:[%s854 + $0x7a0] sm:$0xff]
      %v1100 = vld [vmem:[%s854 + $0x7a8] sm:$0xff]
      %v1101 = vld [vmem:[%s854 + $0x7b0] sm:$0xff]
      %v1102 = vld [vmem:[%s854 + $0x7b8] sm:$0xff]
      %v1103 = vld [vmem:[%s854 + $0x7c0] sm:$0xff]
      %v1104 = vld [vmem:[%s854 + $0x7c8] sm:$0xff]
      %v1105 = vld [vmem:[%s854 + $0x7d0] sm:$0xff]
      %v1106 = vld [vmem:[%s854 + $0x7d8] sm:$0xff]
      %v1107 = vld [vmem:[%s854 + $0x7e0] sm:$0xff]
      %v1108 = vld [vmem:[%s854 + $0x7e8] sm:$0xff]
      %v1109 = vld [vmem:[%s854 + $0x7f0] sm:$0xff]
      %v1110 = vld [vmem:[%s854 + $0x7f8] sm:$0xff]
      %1111 = vmatprep.subr.mxu0 %v856
      %1112 = vmatpush1.msra.mxu0 %v855
      %1113 = vmatprep.subr.mxu0 %v860
      %1114 = vmatpush1.msra.mxu0 %v859
      %1115 = vmatprep.subr.mxu0 %v864
      %1116 = vmatpush1.msra.mxu0 %v863
      %1117 = vmatprep.subr.mxu0 %v868
      %1118 = vmatpush1.msra.mxu0 %v867
      %1119 = vmatprep.subr.mxu0 %v872
      %1120 = vmatpush1.msra.mxu0 %v871
      %1121 = vmatprep.subr.mxu0 %v876
      %1122 = vmatpush1.msra.mxu0 %v875
      %1123 = vmatprep.subr.mxu0 %v880
      %1124 = vmatpush1.msra.mxu0 %v879
      %1125 = vmatprep.subr.mxu0 %v884
      %1126 = vmatpush1.msra.mxu0 %v883
      %1127 = vmatprep.subr.mxu0 %v888
      %1128 = vmatpush1.msra.mxu0 %v887
      %1129 = vmatprep.subr.mxu0 %v892
      %1130 = vmatpush1.msra.mxu0 %v891
      %1131 = vmatprep.subr.mxu0 %v896
      %1132 = vmatpush1.msra.mxu0 %v895
      %1133 = vmatprep.subr.mxu0 %v900
      %1134 = vmatpush1.msra.mxu0 %v899
      %1135 = vmatprep.subr.mxu0 %v904
      %1136 = vmatpush1.msra.mxu0 %v903
      %1137 = vmatprep.subr.mxu0 %v908
      %1138 = vmatpush1.msra.mxu0 %v907
      %1139 = vmatprep.subr.mxu0 %v912
      %1140 = vmatpush1.msra.mxu0 %v911
      %1141 = vmatprep.subr.mxu0 %v916
      %1142 = vmatpush1.msra.mxu0 %v915
      %1143 = vmatprep.subr.mxu0 %v920
      %1144 = vmatpush1.msra.mxu0 %v919
      %1145 = vmatprep.subr.mxu0 %v924
      %1146 = vmatpush1.msra.mxu0 %v923
      %1147 = vmatprep.subr.mxu0 %v928
      %1148 = vmatpush1.msra.mxu0 %v927
      %1149 = vmatprep.subr.mxu0 %v932
      %1150 = vmatpush1.msra.mxu0 %v931
      %1151 = vmatprep.subr.mxu0 %v936
      %1152 = vmatpush1.msra.mxu0 %v935
      %1153 = vmatprep.subr.mxu0 %v940
      %1154 = vmatpush1.msra.mxu0 %v939
      %1155 = vmatprep.subr.mxu0 %v944
      %1156 = vmatpush1.msra.mxu0 %v943
      %1157 = vmatprep.subr.mxu0 %v948
      %1158 = vmatpush1.msra.mxu0 %v947
      %1159 = vmatprep.subr.mxu0 %v952
      %1160 = vmatpush1.msra.mxu0 %v951
      %1161 = vmatprep.subr.mxu0 %v956
      %1162 = vmatpush1.msra.mxu0 %v955
      %1163 = vmatprep.subr.mxu0 %v960
      %1164 = vmatpush1.msra.mxu0 %v959
      %1165 = vmatprep.subr.mxu0 %v964
      %1166 = vmatpush1.msra.mxu0 %v963
      %1167 = vmatprep.subr.mxu0 %v968
      %1168 = vmatpush1.msra.mxu0 %v967
      %1169 = vmatprep.subr.mxu0 %v972
      %1170 = vmatpush1.msra.mxu0 %v971
      %1171 = vmatprep.subr.mxu0 %v976
      %1172 = vmatpush1.msra.mxu0 %v975
      %1173 = vmatprep.subr.mxu0 %v980
      %1174 = vmatpush1.msra.mxu0 %v979
      %1175 = vmatprep.mubr.f32.mxu0 %v847
      %1176 = vmatmul.mubr.f32.gmra.mrb[0].mxu0 %v846
      %v1177 = vpop.f32.mrb[0].mxu0
      %v1178 = vadd.f32 0.0, %v1177
      %v1179 = vpop.f32.mrb[0].mxu0
      %v1180 = vadd.f32 0.0, %v1179
      %1181 = vmatprep.mubr.f32.mxu0 %v851
      %1182 = vmatmul.mubr.f32.gmra.mrb[0].mxu0 %v850
      %v1183 = vpop.f32.mrb[0].mxu0
      %v1184 = vadd.f32 0.0, %v1183
      %v1185 = vpop.f32.mrb[0].mxu0
      %v1186 = vadd.f32 0.0, %v1185
      %1187 = vdwg.mxu0
      %1188 = vmatprep.subr.mxu0 %v984
      %1189 = vmatpush1.msra.mxu0 %v983
      %1190 = vmatprep.subr.mxu0 %v988
      %1191 = vmatpush1.msra.mxu0 %v987
      %1192 = vmatprep.subr.mxu0 %v992
      %1193 = vmatpush1.msra.mxu0 %v991
      %1194 = vmatprep.subr.mxu0 %v996
      %1195 = vmatpush1.msra.mxu0 %v995
      %1196 = vmatprep.subr.mxu0 %v1000
      %1197 = vmatpush1.msra.mxu0 %v999
      %1198 = vmatprep.subr.mxu0 %v1004
      %1199 = vmatpush1.msra.mxu0 %v1003
      %1200 = vmatprep.subr.mxu0 %v1008
      %1201 = vmatpush1.msra.mxu0 %v1007
      %1202 = vmatprep.subr.mxu0 %v1012
      %1203 = vmatpush1.msra.mxu0 %v1011
      %1204 = vmatprep.subr.mxu0 %v1016
      %1205 = vmatpush1.msra.mxu0 %v1015
      %1206 = vmatprep.subr.mxu0 %v1020
      %1207 = vmatpush1.msra.mxu0 %v1019
      %1208 = vmatprep.subr.mxu0 %v1024
      %1209 = vmatpush1.msra.mxu0 %v1023
      %1210 = vmatprep.subr.mxu0 %v1028
      %1211 = vmatpush1.msra.mxu0 %v1027
      %1212 = vmatprep.subr.mxu0 %v1032
      %1213 = vmatpush1.msra.mxu0 %v1031
      %1214 = vmatprep.subr.mxu0 %v1036
      %1215 = vmatpush1.msra.mxu0 %v1035
      %1216 = vmatprep.subr.mxu0 %v1040
      %1217 = vmatpush1.msra.mxu0 %v1039
      %1218 = vmatprep.subr.mxu0 %v1044
      %1219 = vmatpush1.msra.mxu0 %v1043
      %1220 = vmatprep.subr.mxu0 %v1048
      %1221 = vmatpush1.msra.mxu0 %v1047
      %1222 = vmatprep.subr.mxu0 %v1052
      %1223 = vmatpush1.msra.mxu0 %v1051
      %1224 = vmatprep.subr.mxu0 %v1056
      %1225 = vmatpush1.msra.mxu0 %v1055
      %1226 = vmatprep.subr.mxu0 %v1060
      %1227 = vmatpush1.msra.mxu0 %v1059
      %1228 = vmatprep.subr.mxu0 %v1064
      %1229 = vmatpush1.msra.mxu0 %v1063
      %1230 = vmatprep.subr.mxu0 %v1068
      %1231 = vmatpush1.msra.mxu0 %v1067
      %1232 = vmatprep.subr.mxu0 %v1072
      %1233 = vmatpush1.msra.mxu0 %v1071
      %1234 = vmatprep.subr.mxu0 %v1076
      %1235 = vmatpush1.msra.mxu0 %v1075
      %1236 = vmatprep.subr.mxu0 %v1080
      %1237 = vmatpush1.msra.mxu0 %v1079
      %1238 = vmatprep.subr.mxu0 %v1084
      %1239 = vmatpush1.msra.mxu0 %v1083
      %1240 = vmatprep.subr.mxu0 %v1088
      %1241 = vmatpush1.msra.mxu0 %v1087
      %1242 = vmatprep.subr.mxu0 %v1092
      %1243 = vmatpush1.msra.mxu0 %v1091
      %1244 = vmatprep.subr.mxu0 %v1096
      %1245 = vmatpush1.msra.mxu0 %v1095
      %1246 = vmatprep.subr.mxu0 %v1100
      %1247 = vmatpush1.msra.mxu0 %v1099
      %1248 = vmatprep.subr.mxu0 %v1104
      %1249 = vmatpush1.msra.mxu0 %v1103
      %1250 = vmatprep.subr.mxu0 %v1108
      %1251 = vmatpush1.msra.mxu0 %v1107
      %1252 = vmatprep.mubr.f32.mxu0 %v849
      %1253 = vmatmul.mubr.f32.gmra.mrb[0].mxu0 %v848
      %v1254 = vpop.f32.mrb[0].mxu0
      %v1255 = vadd.f32 %v1178, %v1254
      %v1256 = vpop.f32.mrb[0].mxu0
      %v1257 = vadd.f32 %v1180, %v1256
      %1258 = vmatprep.mubr.f32.mxu0 %v853
      %1259 = vmatmul.mubr.f32.gmra.mrb[0].mxu0 %v852
      %v1260 = vpop.f32.mrb[0].mxu0
      %v1261 = vadd.f32 %v1184, %v1260
      %v1262 = vpop.f32.mrb[0].mxu0
      %v1263 = vadd.f32 %v1186, %v1262
      %1264 = vdwg.mxu0
      %1265 = vmatprep.subr.mxu0 %v858
      %1266 = vmatpush1.msra.mxu0 %v857
      %1267 = vmatprep.subr.mxu0 %v862
      %1268 = vmatpush1.msra.mxu0 %v861
      %1269 = vmatprep.subr.mxu0 %v866
      %1270 = vmatpush1.msra.mxu0 %v865
      %1271 = vmatprep.subr.mxu0 %v870
      %1272 = vmatpush1.msra.mxu0 %v869
      %1273 = vmatprep.subr.mxu0 %v874
      %1274 = vmatpush1.msra.mxu0 %v873
      %1275 = vmatprep.subr.mxu0 %v878
      %1276 = vmatpush1.msra.mxu0 %v877
      %1277 = vmatprep.subr.mxu0 %v882
      %1278 = vmatpush1.msra.mxu0 %v881
      %1279 = vmatprep.subr.mxu0 %v886
      %1280 = vmatpush1.msra.mxu0 %v885
      %1281 = vmatprep.subr.mxu0 %v890
      %1282 = vmatpush1.msra.mxu0 %v889
      %1283 = vmatprep.subr.mxu0 %v894
      %1284 = vmatpush1.msra.mxu0 %v893
      %1285 = vmatprep.subr.mxu0 %v898
      %1286 = vmatpush1.msra.mxu0 %v897
      %1287 = vmatprep.subr.mxu0 %v902
      %1288 = vmatpush1.msra.mxu0 %v901
      %1289 = vmatprep.subr.mxu0 %v906
      %1290 = vmatpush1.msra.mxu0 %v905
      %1291 = vmatprep.subr.mxu0 %v910
      %1292 = vmatpush1.msra.mxu0 %v909
      %1293 = vmatprep.subr.mxu0 %v914
      %1294 = vmatpush1.msra.mxu0 %v913
      %1295 = vmatprep.subr.mxu0 %v918
      %1296 = vmatpush1.msra.mxu0 %v917
      %1297 = vmatprep.subr.mxu0 %v922
      %1298 = vmatpush1.msra.mxu0 %v921
      %1299 = vmatprep.subr.mxu0 %v926
      %1300 = vmatpush1.msra.mxu0 %v925
      %1301 = vmatprep.subr.mxu0 %v930
      %1302 = vmatpush1.msra.mxu0 %v929
      %1303 = vmatprep.subr.mxu0 %v934
      %1304 = vmatpush1.msra.mxu0 %v933
      %1305 = vmatprep.subr.mxu0 %v938
      %1306 = vmatpush1.msra.mxu0 %v937
      %1307 = vmatprep.subr.mxu0 %v942
      %1308 = vmatpush1.msra.mxu0 %v941
      %1309 = vmatprep.subr.mxu0 %v946
      %1310 = vmatpush1.msra.mxu0 %v945
      %1311 = vmatprep.subr.mxu0 %v950
      %1312 = vmatpush1.msra.mxu0 %v949
      %1313 = vmatprep.subr.mxu0 %v954
      %1314 = vmatpush1.msra.mxu0 %v953
      %1315 = vmatprep.subr.mxu0 %v958
      %1316 = vmatpush1.msra.mxu0 %v957
      %1317 = vmatprep.subr.mxu0 %v962
      %1318 = vmatpush1.msra.mxu0 %v961
      %1319 = vmatprep.subr.mxu0 %v966
      %1320 = vmatpush1.msra.mxu0 %v965
      %1321 = vmatprep.subr.mxu0 %v970
      %1322 = vmatpush1.msra.mxu0 %v969
      %1323 = vmatprep.subr.mxu0 %v974
      %1324 = vmatpush1.msra.mxu0 %v973
      %1325 = vmatprep.subr.mxu0 %v978
      %1326 = vmatpush1.msra.mxu0 %v977
      %1327 = vmatprep.subr.mxu0 %v982
      %1328 = vmatpush1.msra.mxu0 %v981
      %1329 = vmatprep.mubr.f32.mxu0 %v847
      %1330 = vmatmul.mubr.f32.gmra.mrb[0].mxu0 %v846
      %v1331 = vpop.f32.mrb[0].mxu0
      %v1332 = vadd.f32 0.0, %v1331
      %v1333 = vpop.f32.mrb[0].mxu0
      %v1334 = vadd.f32 0.0, %v1333
      %1335 = vmatprep.mubr.f32.mxu0 %v851
      %1336 = vmatmul.mubr.f32.gmra.mrb[0].mxu0 %v850
      %v1337 = vpop.f32.mrb[0].mxu0
      %v1338 = vadd.f32 0.0, %v1337
      %v1339 = vpop.f32.mrb[0].mxu0
      %v1340 = vadd.f32 0.0, %v1339
      %1341 = vdwg.mxu0
      %1342 = vmatprep.subr.mxu0 %v986
      %1343 = vmatpush1.msra.mxu0 %v985
      %1344 = vmatprep.subr.mxu0 %v990
      %1345 = vmatpush1.msra.mxu0 %v989
      %1346 = vmatprep.subr.mxu0 %v994
      %1347 = vmatpush1.msra.mxu0 %v993
      %1348 = vmatprep.subr.mxu0 %v998
      %1349 = vmatpush1.msra.mxu0 %v997
      %1350 = vmatprep.subr.mxu0 %v1002
      %1351 = vmatpush1.msra.mxu0 %v1001
      %1352 = vmatprep.subr.mxu0 %v1006
      %1353 = vmatpush1.msra.mxu0 %v1005
      %1354 = vmatprep.subr.mxu0 %v1010
      %1355 = vmatpush1.msra.mxu0 %v1009
      %1356 = vmatprep.subr.mxu0 %v1014
      %1357 = vmatpush1.msra.mxu0 %v1013
      %1358 = vmatprep.subr.mxu0 %v1018
      %1359 = vmatpush1.msra.mxu0 %v1017
      %1360 = vmatprep.subr.mxu0 %v1022
      %1361 = vmatpush1.msra.mxu0 %v1021
      %1362 = vmatprep.subr.mxu0 %v1026
      %1363 = vmatpush1.msra.mxu0 %v1025
      %1364 = vmatprep.subr.mxu0 %v1030
      %1365 = vmatpush1.msra.mxu0 %v1029
      %1366 = vmatprep.subr.mxu0 %v1034
      %1367 = vmatpush1.msra.mxu0 %v1033
      %1368 = vmatprep.subr.mxu0 %v1038
      %1369 = vmatpush1.msra.mxu0 %v1037
      %1370 = vmatprep.subr.mxu0 %v1042
      %1371 = vmatpush1.msra.mxu0 %v1041
      %1372 = vmatprep.subr.mxu0 %v1046
      %1373 = vmatpush1.msra.mxu0 %v1045
      %1374 = vmatprep.subr.mxu0 %v1050
      %1375 = vmatpush1.msra.mxu0 %v1049
      %1376 = vmatprep.subr.mxu0 %v1054
      %1377 = vmatpush1.msra.mxu0 %v1053
      %1378 = vmatprep.subr.mxu0 %v1058
      %1379 = vmatpush1.msra.mxu0 %v1057
      %1380 = vmatprep.subr.mxu0 %v1062
      %1381 = vmatpush1.msra.mxu0 %v1061
      %1382 = vmatprep.subr.mxu0 %v1066
      %1383 = vmatpush1.msra.mxu0 %v1065
      %1384 = vmatprep.subr.mxu0 %v1070
      %1385 = vmatpush1.msra.mxu0 %v1069
      %1386 = vmatprep.subr.mxu0 %v1074
      %1387 = vmatpush1.msra.mxu0 %v1073
      %1388 = vmatprep.subr.mxu0 %v1078
      %1389 = vmatpush1.msra.mxu0 %v1077
      %1390 = vmatprep.subr.mxu0 %v1082
      %1391 = vmatpush1.msra.mxu0 %v1081
      %1392 = vmatprep.subr.mxu0 %v1086
      %1393 = vmatpush1.msra.mxu0 %v1085
      %1394 = vmatprep.subr.mxu0 %v1090
      %1395 = vmatpush1.msra.mxu0 %v1089
      %1396 = vmatprep.subr.mxu0 %v1094
      %1397 = vmatpush1.msra.mxu0 %v1093
      %1398 = vmatprep.subr.mxu0 %v1098
      %1399 = vmatpush1.msra.mxu0 %v1097
      %1400 = vmatprep.subr.mxu0 %v1102
      %1401 = vmatpush1.msra.mxu0 %v1101
      %1402 = vmatprep.subr.mxu0 %v1106
      %1403 = vmatpush1.msra.mxu0 %v1105
      %1404 = vmatprep.subr.mxu0 %v1110
      %1405 = vmatpush1.msra.mxu0 %v1109
      %1406 = vmatprep.mubr.f32.mxu0 %v849
      %1407 = vmatmul.mubr.f32.gmra.mrb[0].mxu0 %v848
      %v1408 = vpop.f32.mrb[0].mxu0
      %v1409 = vadd.f32 %v1332, %v1408
      %v1410 = vpop.f32.mrb[0].mxu0
      %v1411 = vadd.f32 %v1334, %v1410
      %1412 = vmatprep.mubr.f32.mxu0 %v853
      %1413 = vmatmul.mubr.f32.gmra.mrb[0].mxu0 %v852
      %v1414 = vpop.f32.mrb[0].mxu0
      %v1415 = vadd.f32 %v1338, %v1414
      %v1416 = vpop.f32.mrb[0].mxu0
      %v1417 = vadd.f32 %v1340, %v1416
      %1418 = vdwg.mxu0
      %1419 = vmatprep.subr.mxu0 %v580
      %1420 = vmatpush1.msra.mxu0 %v579
      %1421 = vmatprep.subr.mxu0 %v584
      %1422 = vmatpush1.msra.mxu0 %v583
      %1423 = vmatprep.subr.mxu0 %v588
      %1424 = vmatpush1.msra.mxu0 %v587
      %1425 = vmatprep.subr.mxu0 %v592
      %1426 = vmatpush1.msra.mxu0 %v591
      %1427 = vmatprep.subr.mxu0 %v596
      %1428 = vmatpush1.msra.mxu0 %v595
      %1429 = vmatprep.subr.mxu0 %v600
      %1430 = vmatpush1.msra.mxu0 %v599
      %1431 = vmatprep.subr.mxu0 %v604
      %1432 = vmatpush1.msra.mxu0 %v603
      %1433 = vmatprep.subr.mxu0 %v608
      %1434 = vmatpush1.msra.mxu0 %v607
      %1435 = vmatprep.subr.mxu0 %v612
      %1436 = vmatpush1.msra.mxu0 %v611
      %1437 = vmatprep.subr.mxu0 %v616
      %1438 = vmatpush1.msra.mxu0 %v615
      %1439 = vmatprep.subr.mxu0 %v620
      %1440 = vmatpush1.msra.mxu0 %v619
      %1441 = vmatprep.subr.mxu0 %v624
      %1442 = vmatpush1.msra.mxu0 %v623
      %1443 = vmatprep.subr.mxu0 %v628
      %1444 = vmatpush1.msra.mxu0 %v627
      %1445 = vmatprep.subr.mxu0 %v632
      %1446 = vmatpush1.msra.mxu0 %v631
      %1447 = vmatprep.subr.mxu0 %v636
      %1448 = vmatpush1.msra.mxu0 %v635
      %1449 = vmatprep.subr.mxu0 %v640
      %1450 = vmatpush1.msra.mxu0 %v639
      %1451 = vmatprep.subr.mxu0 %v644
      %1452 = vmatpush1.msra.mxu0 %v643
      %1453 = vmatprep.subr.mxu0 %v648
      %1454 = vmatpush1.msra.mxu0 %v647
      %1455 = vmatprep.subr.mxu0 %v652
      %1456 = vmatpush1.msra.mxu0 %v651
      %1457 = vmatprep.subr.mxu0 %v656
      %1458 = vmatpush1.msra.mxu0 %v655
      %1459 = vmatprep.subr.mxu0 %v660
      %1460 = vmatpush1.msra.mxu0 %v659
      %1461 = vmatprep.subr.mxu0 %v664
      %1462 = vmatpush1.msra.mxu0 %v663
      %1463 = vmatprep.subr.mxu0 %v668
      %1464 = vmatpush1.msra.mxu0 %v667
      %1465 = vmatprep.subr.mxu0 %v672
      %1466 = vmatpush1.msra.mxu0 %v671
      %1467 = vmatprep.subr.mxu0 %v676
      %1468 = vmatpush1.msra.mxu0 %v675
      %1469 = vmatprep.subr.mxu0 %v680
      %1470 = vmatpush1.msra.mxu0 %v679
      %1471 = vmatprep.subr.mxu0 %v684
      %1472 = vmatpush1.msra.mxu0 %v683
      %1473 = vmatprep.subr.mxu0 %v688
      %1474 = vmatpush1.msra.mxu0 %v687
      %1475 = vmatprep.subr.mxu0 %v692
      %1476 = vmatpush1.msra.mxu0 %v691
      %1477 = vmatprep.subr.mxu0 %v696
      %1478 = vmatpush1.msra.mxu0 %v695
      %1479 = vmatprep.subr.mxu0 %v700
      %1480 = vmatpush1.msra.mxu0 %v699
      %1481 = vmatprep.subr.mxu0 %v704
      %1482 = vmatpush1.msra.mxu0 %v703
      %1483 = vmatprep.mubr.f32.mxu0 %v572
      %1484 = vmatmul.mubr.f32.gmra.mrb[0].mxu0 %v571
      %v1485 = vpop.f32.mrb[0].mxu0
      %v1486 = vadd.f32 %v1255, %v1485
      %v1487 = vpop.f32.mrb[0].mxu0
      %v1488 = vadd.f32 %v1257, %v1487
      %1489 = vmatprep.mubr.f32.mxu0 %v576
      %1490 = vmatmul.mubr.f32.gmra.mrb[0].mxu0 %v575
      %v1491 = vpop.f32.mrb[0].mxu0
      %v1492 = vadd.f32 %v1261, %v1491
      %v1493 = vpop.f32.mrb[0].mxu0
      %v1494 = vadd.f32 %v1263, %v1493
      %1495 = vdwg.mxu0
      %1496 = vmatprep.subr.mxu0 %v708
      %1497 = vmatpush1.msra.mxu0 %v707
      %1498 = vmatprep.subr.mxu0 %v712
      %1499 = vmatpush1.msra.mxu0 %v711
      %1500 = vmatprep.subr.mxu0 %v716
      %1501 = vmatpush1.msra.mxu0 %v715
      %1502 = vmatprep.subr.mxu0 %v720
      %1503 = vmatpush1.msra.mxu0 %v719
      %1504 = vmatprep.subr.mxu0 %v724
      %1505 = vmatpush1.msra.mxu0 %v723
      %1506 = vmatprep.subr.mxu0 %v728
      %1507 = vmatpush1.msra.mxu0 %v727
      %1508 = vmatprep.subr.mxu0 %v732
      %1509 = vmatpush1.msra.mxu0 %v731
      %1510 = vmatprep.subr.mxu0 %v736
      %1511 = vmatpush1.msra.mxu0 %v735
      %1512 = vmatprep.subr.mxu0 %v740
      %1513 = vmatpush1.msra.mxu0 %v739
      %1514 = vmatprep.subr.mxu0 %v744
      %1515 = vmatpush1.msra.mxu0 %v743
      %1516 = vmatprep.subr.mxu0 %v748
      %1517 = vmatpush1.msra.mxu0 %v747
      %1518 = vmatprep.subr.mxu0 %v752
      %1519 = vmatpush1.msra.mxu0 %v751
      %1520 = vmatprep.subr.mxu0 %v756
      %1521 = vmatpush1.msra.mxu0 %v755
      %1522 = vmatprep.subr.mxu0 %v760
      %1523 = vmatpush1.msra.mxu0 %v759
      %1524 = vmatprep.subr.mxu0 %v764
      %1525 = vmatpush1.msra.mxu0 %v763
      %1526 = vmatprep.subr.mxu0 %v768
      %1527 = vmatpush1.msra.mxu0 %v767
      %1528 = vmatprep.subr.mxu0 %v772
      %1529 = vmatpush1.msra.mxu0 %v771
      %1530 = vmatprep.subr.mxu0 %v776
      %1531 = vmatpush1.msra.mxu0 %v775
      %1532 = vmatprep.subr.mxu0 %v780
      %1533 = vmatpush1.msra.mxu0 %v779
      %1534 = vmatprep.subr.mxu0 %v784
      %1535 = vmatpush1.msra.mxu0 %v783
      %1536 = vmatprep.subr.mxu0 %v788
      %1537 = vmatpush1.msra.mxu0 %v787
      %1538 = vmatprep.subr.mxu0 %v792
      %1539 = vmatpush1.msra.mxu0 %v791
      %1540 = vmatprep.subr.mxu0 %v796
      %1541 = vmatpush1.msra.mxu0 %v795
      %1542 = vmatprep.subr.mxu0 %v800
      %1543 = vmatpush1.msra.mxu0 %v799
      %1544 = vmatprep.subr.mxu0 %v804
      %1545 = vmatpush1.msra.mxu0 %v803
      %1546 = vmatprep.subr.mxu0 %v808
      %1547 = vmatpush1.msra.mxu0 %v807
      %1548 = vmatprep.subr.mxu0 %v812
      %1549 = vmatpush1.msra.mxu0 %v811
      %1550 = vmatprep.subr.mxu0 %v816
      %1551 = vmatpush1.msra.mxu0 %v815
      %1552 = vmatprep.subr.mxu0 %v820
      %1553 = vmatpush1.msra.mxu0 %v819
      %1554 = vmatprep.subr.mxu0 %v824
      %1555 = vmatpush1.msra.mxu0 %v823
      %1556 = vmatprep.subr.mxu0 %v828
      %1557 = vmatpush1.msra.mxu0 %v827
      %1558 = vmatprep.subr.mxu0 %v832
      %1559 = vmatpush1.msra.mxu0 %v831
      %1560 = vmatprep.mubr.f32.mxu0 %v574
      %1561 = vmatmul.mubr.f32.gmra.mrb[0].mxu0 %v573
      %v1562 = vpop.f32.mrb[0].mxu0
      %v1563 = vadd.f32 %v1486, %v1562
      %v1564 = vpop.f32.mrb[0].mxu0
      %v1565 = vadd.f32 %v1488, %v1564
      %1566 = vmatprep.mubr.f32.mxu0 %v578
      %1567 = vmatmul.mubr.f32.gmra.mrb[0].mxu0 %v577
      %v1568 = vpop.f32.mrb[0].mxu0
      %v1569 = vadd.f32 %v1492, %v1568
      %v1570 = vpop.f32.mrb[0].mxu0
      %v1571 = vadd.f32 %v1494, %v1570
      %1572 = vdwg.mxu0
      %1573 = vmatprep.subr.mxu0 %v582
      %1574 = vmatpush1.msra.mxu0 %v581
      %1575 = vmatprep.subr.mxu0 %v586
      %1576 = vmatpush1.msra.mxu0 %v585
      %1577 = vmatprep.subr.mxu0 %v590
      %1578 = vmatpush1.msra.mxu0 %v589
      %1579 = vmatprep.subr.mxu0 %v594
      %1580 = vmatpush1.msra.mxu0 %v593
      %1581 = vmatprep.subr.mxu0 %v598
      %1582 = vmatpush1.msra.mxu0 %v597
      %1583 = vmatprep.subr.mxu0 %v602
      %1584 = vmatpush1.msra.mxu0 %v601
      %1585 = vmatprep.subr.mxu0 %v606
      %1586 = vmatpush1.msra.mxu0 %v605
      %1587 = vmatprep.subr.mxu0 %v610
      %1588 = vmatpush1.msra.mxu0 %v609
      %1589 = vmatprep.subr.mxu0 %v614
      %1590 = vmatpush1.msra.mxu0 %v613
      %1591 = vmatprep.subr.mxu0 %v618
      %1592 = vmatpush1.msra.mxu0 %v617
      %1593 = vmatprep.subr.mxu0 %v622
      %1594 = vmatpush1.msra.mxu0 %v621
      %1595 = vmatprep.subr.mxu0 %v626
      %1596 = vmatpush1.msra.mxu0 %v625
      %1597 = vmatprep.subr.mxu0 %v630
      %1598 = vmatpush1.msra.mxu0 %v629
      %1599 = vmatprep.subr.mxu0 %v634
      %1600 = vmatpush1.msra.mxu0 %v633
      %1601 = vmatprep.subr.mxu0 %v638
      %1602 = vmatpush1.msra.mxu0 %v637
      %1603 = vmatprep.subr.mxu0 %v642
      %1604 = vmatpush1.msra.mxu0 %v641
      %1605 = vmatprep.subr.mxu0 %v646
      %1606 = vmatpush1.msra.mxu0 %v645
      %1607 = vmatprep.subr.mxu0 %v650
      %1608 = vmatpush1.msra.mxu0 %v649
      %1609 = vmatprep.subr.mxu0 %v654
      %1610 = vmatpush1.msra.mxu0 %v653
      %1611 = vmatprep.subr.mxu0 %v658
      %1612 = vmatpush1.msra.mxu0 %v657
      %1613 = vmatprep.subr.mxu0 %v662
      %1614 = vmatpush1.msra.mxu0 %v661
      %1615 = vmatprep.subr.mxu0 %v666
      %1616 = vmatpush1.msra.mxu0 %v665
      %1617 = vmatprep.subr.mxu0 %v670
      %1618 = vmatpush1.msra.mxu0 %v669
      %1619 = vmatprep.subr.mxu0 %v674
      %1620 = vmatpush1.msra.mxu0 %v673
      %1621 = vmatprep.subr.mxu0 %v678
      %1622 = vmatpush1.msra.mxu0 %v677
      %1623 = vmatprep.subr.mxu0 %v682
      %1624 = vmatpush1.msra.mxu0 %v681
      %1625 = vmatprep.subr.mxu0 %v686
      %1626 = vmatpush1.msra.mxu0 %v685
      %1627 = vmatprep.subr.mxu0 %v690
      %1628 = vmatpush1.msra.mxu0 %v689
      %1629 = vmatprep.subr.mxu0 %v694
      %1630 = vmatpush1.msra.mxu0 %v693
      %1631 = vmatprep.subr.mxu0 %v698
      %1632 = vmatpush1.msra.mxu0 %v697
      %1633 = vmatprep.subr.mxu0 %v702
      %1634 = vmatpush1.msra.mxu0 %v701
      %1635 = vmatprep.subr.mxu0 %v706
      %1636 = vmatpush1.msra.mxu0 %v705
      %1637 = vmatprep.mubr.f32.mxu0 %v572
      %1638 = vmatmul.mubr.f32.gmra.mrb[0].mxu0 %v571
      %v1639 = vpop.f32.mrb[0].mxu0
      %v1640 = vadd.f32 %v1409, %v1639
      %v1641 = vpop.f32.mrb[0].mxu0
      %v1642 = vadd.f32 %v1411, %v1641
      %1643 = vmatprep.mubr.f32.mxu0 %v576
      %1644 = vmatmul.mubr.f32.gmra.mrb[0].mxu0 %v575
      %v1645 = vpop.f32.mrb[0].mxu0
      %v1646 = vadd.f32 %v1415, %v1645
      %v1647 = vpop.f32.mrb[0].mxu0
      %v1648 = vadd.f32 %v1417, %v1647
      %1649 = vdwg.mxu0
      %1650 = vmatprep.subr.mxu0 %v710
      %1651 = vmatpush1.msra.mxu0 %v709
      %1652 = vmatprep.subr.mxu0 %v714
      %1653 = vmatpush1.msra.mxu0 %v713
      %1654 = vmatprep.subr.mxu0 %v718
      %1655 = vmatpush1.msra.mxu0 %v717
      %1656 = vmatprep.subr.mxu0 %v722
      %1657 = vmatpush1.msra.mxu0 %v721
      %1658 = vmatprep.subr.mxu0 %v726
      %1659 = vmatpush1.msra.mxu0 %v725
      %1660 = vmatprep.subr.mxu0 %v730
      %1661 = vmatpush1.msra.mxu0 %v729
      %1662 = vmatprep.subr.mxu0 %v734
      %1663 = vmatpush1.msra.mxu0 %v733
      %1664 = vmatprep.subr.mxu0 %v738
      %1665 = vmatpush1.msra.mxu0 %v737
      %1666 = vmatprep.subr.mxu0 %v742
      %1667 = vmatpush1.msra.mxu0 %v741
      %1668 = vmatprep.subr.mxu0 %v746
      %1669 = vmatpush1.msra.mxu0 %v745
      %1670 = vmatprep.subr.mxu0 %v750
      %1671 = vmatpush1.msra.mxu0 %v749
      %1672 = vmatprep.subr.mxu0 %v754
      %1673 = vmatpush1.msra.mxu0 %v753
      %1674 = vmatprep.subr.mxu0 %v758
      %1675 = vmatpush1.msra.mxu0 %v757
      %1676 = vmatprep.subr.mxu0 %v762
      %1677 = vmatpush1.msra.mxu0 %v761
      %1678 = vmatprep.subr.mxu0 %v766
      %1679 = vmatpush1.msra.mxu0 %v765
      %1680 = vmatprep.subr.mxu0 %v770
      %1681 = vmatpush1.msra.mxu0 %v769
      %1682 = vmatprep.subr.mxu0 %v774
      %1683 = vmatpush1.msra.mxu0 %v773
      %1684 = vmatprep.subr.mxu0 %v778
      %1685 = vmatpush1.msra.mxu0 %v777
      %1686 = vmatprep.subr.mxu0 %v782
      %1687 = vmatpush1.msra.mxu0 %v781
      %1688 = vmatprep.subr.mxu0 %v786
      %1689 = vmatpush1.msra.mxu0 %v785
      %1690 = vmatprep.subr.mxu0 %v790
      %1691 = vmatpush1.msra.mxu0 %v789
      %1692 = vmatprep.subr.mxu0 %v794
      %1693 = vmatpush1.msra.mxu0 %v793
      %1694 = vmatprep.subr.mxu0 %v798
      %1695 = vmatpush1.msra.mxu0 %v797
      %1696 = vmatprep.subr.mxu0 %v802
      %1697 = vmatpush1.msra.mxu0 %v801
      %1698 = vmatprep.subr.mxu0 %v806
      %1699 = vmatpush1.msra.mxu0 %v805
      %1700 = vmatprep.subr.mxu0 %v810
      %1701 = vmatpush1.msra.mxu0 %v809
      %1702 = vmatprep.subr.mxu0 %v814
      %1703 = vmatpush1.msra.mxu0 %v813
      %1704 = vmatprep.subr.mxu0 %v818
      %1705 = vmatpush1.msra.mxu0 %v817
      %1706 = vmatprep.subr.mxu0 %v822
      %1707 = vmatpush1.msra.mxu0 %v821
      %1708 = vmatprep.subr.mxu0 %v826
      %1709 = vmatpush1.msra.mxu0 %v825
      %1710 = vmatprep.subr.mxu0 %v830
      %1711 = vmatpush1.msra.mxu0 %v829
      %1712 = vmatprep.subr.mxu0 %v834
      %1713 = vmatpush1.msra.mxu0 %v833
      %1714 = vmatprep.mubr.f32.mxu0 %v574
      %1715 = vmatmul.mubr.f32.gmra.mrb[0].mxu0 %v573
      %v1716 = vpop.f32.mrb[0].mxu0
      %v1717 = vadd.f32 %v1640, %v1716
      %v1718 = vpop.f32.mrb[0].mxu0
      %v1719 = vadd.f32 %v1642, %v1718
      %1720 = vmatprep.mubr.f32.mxu0 %v578
      %1721 = vmatmul.mubr.f32.gmra.mrb[0].mxu0 %v577
      %v1722 = vpop.f32.mrb[0].mxu0
      %v1723 = vadd.f32 %v1646, %v1722
      %v1724 = vpop.f32.mrb[0].mxu0
      %v1725 = vadd.f32 %v1648, %v1724
      %1726 = vdwg.mxu0
      %v1727 = vld [vmem:[%s4] sm:$0xf]
      %v1729 = vlaneseq
      %v1730 = vshrl.u32 %v1729, 7
      %v1731 = vsub.s32 0, %v1730
      %v1732 = vrot.slane %v1727, %v1731
      %v1733 = vlaneseq
      %v1734 = vshrl.u32 %v1733, 7
      %v1735 = vsub.s32 1, %v1734
      %v1736 = vrot.slane %v1727, %v1735
      %v1737 = vlaneseq
      %v1738 = vshrl.u32 %v1737, 7
      %v1739 = vsub.s32 2, %v1738
      %v1740 = vrot.slane %v1727, %v1739
      %v1741 = vlaneseq
      %v1742 = vshrl.u32 %v1741, 7
      %v1743 = vsub.s32 3, %v1742
      %v1744 = vrot.slane %v1727, %v1743
      %v1749 = vadd.f32 %v1563, %v1732
      %v1750 = vadd.f32 %v1565, %v1736
      %v1751 = vadd.f32 %v1717, %v1740
      %v1752 = vadd.f32 %v1719, %v1744
      %v1753 = vadd.f32 %v1569, %v1732
      %v1754 = vadd.f32 %v1571, %v1736
      %v1755 = vadd.f32 %v1723, %v1740
      %v1756 = vadd.f32 %v1725, %v1744
      %vm1757 = vcmp.ge.f32.partialorder %v1749, 0.0
      %vm1758 = vcmp.ge.f32.partialorder %v1750, 0.0
      %vm1759 = vcmp.ge.f32.partialorder %v1751, 0.0
      %vm1760 = vcmp.ge.f32.partialorder %v1752, 0.0
      %vm1761 = vcmp.ge.f32.partialorder %v1753, 0.0
      %vm1762 = vcmp.ge.f32.partialorder %v1754, 0.0
      %vm1763 = vcmp.ge.f32.partialorder %v1755, 0.0
      %vm1764 = vcmp.ge.f32.partialorder %v1756, 0.0
      %v1765 = vmul.f32 %v1749, 0.01
      %v1766 = vmul.f32 %v1750, 0.01
      %v1767 = vmul.f32 %v1751, 0.01
      %v1768 = vmul.f32 %v1752, 0.01
      %v1769 = vmul.f32 %v1753, 0.01
      %v1770 = vmul.f32 %v1754, 0.01
      %v1771 = vmul.f32 %v1755, 0.01
      %v1772 = vmul.f32 %v1756, 0.01
      %v1773 = vsel %vm1757, %v1749, %v1765
      %v1774 = vsel %vm1758, %v1750, %v1766
      %v1775 = vsel %vm1759, %v1751, %v1767
      %v1776 = vsel %vm1760, %v1752, %v1768
      %v1777 = vsel %vm1761, %v1753, %v1769
      %v1778 = vsel %vm1762, %v1754, %v1770
      %v1779 = vsel %vm1763, %v1755, %v1771
      %v1780 = vsel %vm1764, %v1756, %v1772
      %v1781 = vld [vmem:[%s5] sm:$0xff]
      %v1782 = vld [vmem:[%s5 + $0x8] sm:$0xff]
      %v1783 = vld [vmem:[%s5 + $0x10] sm:$0xff]
      %v1784 = vld [vmem:[%s5 + $0x18] sm:$0xff]
      %v1785 = vld [vmem:[%s5 + $0x20] sm:$0xff]
      %v1786 = vld [vmem:[%s5 + $0x28] sm:$0xff]
      %v1787 = vld [vmem:[%s5 + $0x30] sm:$0xff]
      %v1788 = vld [vmem:[%s5 + $0x38] sm:$0xff]
      %v1789 = vld [vmem:[%s5 + $0x40] sm:$0xff]
      %v1790 = vld [vmem:[%s5 + $0x48] sm:$0xff]
      %v1791 = vld [vmem:[%s5 + $0x50] sm:$0xff]
      %v1792 = vld [vmem:[%s5 + $0x58] sm:$0xff]
      %v1793 = vld [vmem:[%s5 + $0x60] sm:$0xff]
      %v1794 = vld [vmem:[%s5 + $0x68] sm:$0xff]
      %v1795 = vld [vmem:[%s5 + $0x70] sm:$0xff]
      %v1796 = vld [vmem:[%s5 + $0x78] sm:$0xff]
      %v1797 = vld [vmem:[%s5 + $0x80] sm:$0xff]
      %v1798 = vld [vmem:[%s5 + $0x88] sm:$0xff]
      %v1799 = vld [vmem:[%s5 + $0x90] sm:$0xff]
      %v1800 = vld [vmem:[%s5 + $0x98] sm:$0xff]
      %v1801 = vld [vmem:[%s5 + $0xa0] sm:$0xff]
      %v1802 = vld [vmem:[%s5 + $0xa8] sm:$0xff]
      %v1803 = vld [vmem:[%s5 + $0xb0] sm:$0xff]
      %v1804 = vld [vmem:[%s5 + $0xb8] sm:$0xff]
      %v1805 = vld [vmem:[%s5 + $0xc0] sm:$0xff]
      %v1806 = vld [vmem:[%s5 + $0xc8] sm:$0xff]
      %v1807 = vld [vmem:[%s5 + $0xd0] sm:$0xff]
      %v1808 = vld [vmem:[%s5 + $0xd8] sm:$0xff]
      %v1809 = vld [vmem:[%s5 + $0xe0] sm:$0xff]
      %v1810 = vld [vmem:[%s5 + $0xe8] sm:$0xff]
      %v1811 = vld [vmem:[%s5 + $0xf0] sm:$0xff]
      %v1812 = vld [vmem:[%s5 + $0xf8] sm:$0xff]
      %v1813 = vld [vmem:[%s5 + $0x100] sm:$0xff]
      %v1814 = vld [vmem:[%s5 + $0x108] sm:$0xff]
      %v1815 = vld [vmem:[%s5 + $0x110] sm:$0xff]
      %v1816 = vld [vmem:[%s5 + $0x118] sm:$0xff]
      %v1817 = vld [vmem:[%s5 + $0x120] sm:$0xff]
      %v1818 = vld [vmem:[%s5 + $0x128] sm:$0xff]
      %v1819 = vld [vmem:[%s5 + $0x130] sm:$0xff]
      %v1820 = vld [vmem:[%s5 + $0x138] sm:$0xff]
      %v1821 = vld [vmem:[%s5 + $0x140] sm:$0xff]
      %v1822 = vld [vmem:[%s5 + $0x148] sm:$0xff]
      %v1823 = vld [vmem:[%s5 + $0x150] sm:$0xff]
      %v1824 = vld [vmem:[%s5 + $0x158] sm:$0xff]
      %v1825 = vld [vmem:[%s5 + $0x160] sm:$0xff]
      %v1826 = vld [vmem:[%s5 + $0x168] sm:$0xff]
      %v1827 = vld [vmem:[%s5 + $0x170] sm:$0xff]
      %v1828 = vld [vmem:[%s5 + $0x178] sm:$0xff]
      %v1829 = vld [vmem:[%s5 + $0x180] sm:$0xff]
      %v1830 = vld [vmem:[%s5 + $0x188] sm:$0xff]
      %v1831 = vld [vmem:[%s5 + $0x190] sm:$0xff]
      %v1832 = vld [vmem:[%s5 + $0x198] sm:$0xff]
      %v1833 = vld [vmem:[%s5 + $0x1a0] sm:$0xff]
      %v1834 = vld [vmem:[%s5 + $0x1a8] sm:$0xff]
      %v1835 = vld [vmem:[%s5 + $0x1b0] sm:$0xff]
      %v1836 = vld [vmem:[%s5 + $0x1b8] sm:$0xff]
      %v1837 = vld [vmem:[%s5 + $0x1c0] sm:$0xff]
      %v1838 = vld [vmem:[%s5 + $0x1c8] sm:$0xff]
      %v1839 = vld [vmem:[%s5 + $0x1d0] sm:$0xff]
      %v1840 = vld [vmem:[%s5 + $0x1d8] sm:$0xff]
      %v1841 = vld [vmem:[%s5 + $0x1e0] sm:$0xff]
      %v1842 = vld [vmem:[%s5 + $0x1e8] sm:$0xff]
      %v1843 = vld [vmem:[%s5 + $0x1f0] sm:$0xff]
      %v1844 = vld [vmem:[%s5 + $0x1f8] sm:$0xff]
      %v1845 = vld [vmem:[%s6] sm:$0x1]
      %v1847 = vlaneseq
      %v1848 = vshrl.u32 %v1847, 7
      %v1849 = vsub.s32 0, %v1848
      %v1850 = vrot.slane %v1845, %v1849
      %1852 = vmatprep.subr.mxu0 0.0
      %1853 = vmatpush1.msra.mxu0 %v1781
      %1854 = vmatprep.subr.mxu0 0.0
      %1855 = vmatpush1.msra.mxu0 %v1782
      %1856 = vmatprep.subr.mxu0 0.0
      %1857 = vmatpush1.msra.mxu0 %v1783
      %1858 = vmatprep.subr.mxu0 0.0
      %1859 = vmatpush1.msra.mxu0 %v1784
      %1860 = vmatprep.subr.mxu0 0.0
      %1861 = vmatpush1.msra.mxu0 %v1785
      %1862 = vmatprep.subr.mxu0 0.0
      %1863 = vmatpush1.msra.mxu0 %v1786
      %1864 = vmatprep.subr.mxu0 0.0
      %1865 = vmatpush1.msra.mxu0 %v1787
      %1866 = vmatprep.subr.mxu0 0.0
      %1867 = vmatpush1.msra.mxu0 %v1788
      %1868 = vmatprep.subr.mxu0 0.0
      %1869 = vmatpush1.msra.mxu0 %v1789
      %1870 = vmatprep.subr.mxu0 0.0
      %1871 = vmatpush1.msra.mxu0 %v1790
      %1872 = vmatprep.subr.mxu0 0.0
      %1873 = vmatpush1.msra.mxu0 %v1791
      %1874 = vmatprep.subr.mxu0 0.0
      %1875 = vmatpush1.msra.mxu0 %v1792
      %1876 = vmatprep.subr.mxu0 0.0
      %1877 = vmatpush1.msra.mxu0 %v1793
      %1878 = vmatprep.subr.mxu0 0.0
      %1879 = vmatpush1.msra.mxu0 %v1794
      %1880 = vmatprep.subr.mxu0 0.0
      %1881 = vmatpush1.msra.mxu0 %v1795
      %1882 = vmatprep.subr.mxu0 0.0
      %1883 = vmatpush1.msra.mxu0 %v1796
      %1884 = vmatprep.subr.mxu0 0.0
      %1885 = vmatpush1.msra.mxu0 %v1797
      %1886 = vmatprep.subr.mxu0 0.0
      %1887 = vmatpush1.msra.mxu0 %v1798
      %1888 = vmatprep.subr.mxu0 0.0
      %1889 = vmatpush1.msra.mxu0 %v1799
      %1890 = vmatprep.subr.mxu0 0.0
      %1891 = vmatpush1.msra.mxu0 %v1800
      %1892 = vmatprep.subr.mxu0 0.0
      %1893 = vmatpush1.msra.mxu0 %v1801
      %1894 = vmatprep.subr.mxu0 0.0
      %1895 = vmatpush1.msra.mxu0 %v1802
      %1896 = vmatprep.subr.mxu0 0.0
      %1897 = vmatpush1.msra.mxu0 %v1803
      %1898 = vmatprep.subr.mxu0 0.0
      %1899 = vmatpush1.msra.mxu0 %v1804
      %1900 = vmatprep.subr.mxu0 0.0
      %1901 = vmatpush1.msra.mxu0 %v1805
      %1902 = vmatprep.subr.mxu0 0.0
      %1903 = vmatpush1.msra.mxu0 %v1806
      %1904 = vmatprep.subr.mxu0 0.0
      %1905 = vmatpush1.msra.mxu0 %v1807
      %1906 = vmatprep.subr.mxu0 0.0
      %1907 = vmatpush1.msra.mxu0 %v1808
      %1908 = vmatprep.subr.mxu0 0.0
      %1909 = vmatpush1.msra.mxu0 %v1809
      %1910 = vmatprep.subr.mxu0 0.0
      %1911 = vmatpush1.msra.mxu0 %v1810
      %1912 = vmatprep.subr.mxu0 0.0
      %1913 = vmatpush1.msra.mxu0 %v1811
      %1914 = vmatprep.subr.mxu0 0.0
      %1915 = vmatpush1.msra.mxu0 %v1812
      %1916 = vmatprep.mubr.f32.mxu0 %v1774
      %1917 = vmatmul.mubr.f32.gmra.mrb[0].mxu0 %v1773
      %v1918 = vpop.f32.mrb[0].mxu0
      %v1919 = vadd.f32 %v1850, %v1918
      %v1920 = vpop.f32.mrb[0].mxu0
      %1921 = vmatprep.mubr.f32.mxu0 %v1778
      %1922 = vmatmul.mubr.f32.gmra.mrb[0].mxu0 %v1777
      %v1923 = vpop.f32.mrb[0].mxu0
      %v1924 = vpop.f32.mrb[0].mxu0
      %1925 = vdwg.mxu0
      %1926 = vmatprep.subr.mxu0 0.0
      %1927 = vmatpush1.msra.mxu0 %v1813
      %1928 = vmatprep.subr.mxu0 0.0
      %1929 = vmatpush1.msra.mxu0 %v1814
      %1930 = vmatprep.subr.mxu0 0.0
      %1931 = vmatpush1.msra.mxu0 %v1815
      %1932 = vmatprep.subr.mxu0 0.0
      %1933 = vmatpush1.msra.mxu0 %v1816
      %1934 = vmatprep.subr.mxu0 0.0
      %1935 = vmatpush1.msra.mxu0 %v1817
      %1936 = vmatprep.subr.mxu0 0.0
      %1937 = vmatpush1.msra.mxu0 %v1818
      %1938 = vmatprep.subr.mxu0 0.0
      %1939 = vmatpush1.msra.mxu0 %v1819
      %1940 = vmatprep.subr.mxu0 0.0
      %1941 = vmatpush1.msra.mxu0 %v1820
      %1942 = vmatprep.subr.mxu0 0.0
      %1943 = vmatpush1.msra.mxu0 %v1821
      %1944 = vmatprep.subr.mxu0 0.0
      %1945 = vmatpush1.msra.mxu0 %v1822
      %1946 = vmatprep.subr.mxu0 0.0
      %1947 = vmatpush1.msra.mxu0 %v1823
      %1948 = vmatprep.subr.mxu0 0.0
      %1949 = vmatpush1.msra.mxu0 %v1824
      %1950 = vmatprep.subr.mxu0 0.0
      %1951 = vmatpush1.msra.mxu0 %v1825
      %1952 = vmatprep.subr.mxu0 0.0
      %1953 = vmatpush1.msra.mxu0 %v1826
      %1954 = vmatprep.subr.mxu0 0.0
      %1955 = vmatpush1.msra.mxu0 %v1827
      %1956 = vmatprep.subr.mxu0 0.0
      %1957 = vmatpush1.msra.mxu0 %v1828
      %1958 = vmatprep.subr.mxu0 0.0
      %1959 = vmatpush1.msra.mxu0 %v1829
      %1960 = vmatprep.subr.mxu0 0.0
      %1961 = vmatpush1.msra.mxu0 %v1830
      %1962 = vmatprep.subr.mxu0 0.0
      %1963 = vmatpush1.msra.mxu0 %v1831
      %1964 = vmatprep.subr.mxu0 0.0
      %1965 = vmatpush1.msra.mxu0 %v1832
      %1966 = vmatprep.subr.mxu0 0.0
      %1967 = vmatpush1.msra.mxu0 %v1833
      %1968 = vmatprep.subr.mxu0 0.0
      %1969 = vmatpush1.msra.mxu0 %v1834
      %1970 = vmatprep.subr.mxu0 0.0
      %1971 = vmatpush1.msra.mxu0 %v1835
      %1972 = vmatprep.subr.mxu0 0.0
      %1973 = vmatpush1.msra.mxu0 %v1836
      %1974 = vmatprep.subr.mxu0 0.0
      %1975 = vmatpush1.msra.mxu0 %v1837
      %1976 = vmatprep.subr.mxu0 0.0
      %1977 = vmatpush1.msra.mxu0 %v1838
      %1978 = vmatprep.subr.mxu0 0.0
      %1979 = vmatpush1.msra.mxu0 %v1839
      %1980 = vmatprep.subr.mxu0 0.0
      %1981 = vmatpush1.msra.mxu0 %v1840
      %1982 = vmatprep.subr.mxu0 0.0
      %1983 = vmatpush1.msra.mxu0 %v1841
      %1984 = vmatprep.subr.mxu0 0.0
      %1985 = vmatpush1.msra.mxu0 %v1842
      %1986 = vmatprep.subr.mxu0 0.0
      %1987 = vmatpush1.msra.mxu0 %v1843
      %1988 = vmatprep.subr.mxu0 0.0
      %1989 = vmatpush1.msra.mxu0 %v1844
      %1990 = vmatprep.mubr.f32.mxu0 %v1776
      %1991 = vmatmul.mubr.f32.gmra.mrb[0].mxu0 %v1775
      %v1992 = vpop.f32.mrb[0].mxu0
      %v1993 = vadd.f32 %v1919, %v1992
      %v1994 = vpop.f32.mrb[0].mxu0
      %1995 = vmatprep.mubr.f32.mxu0 %v1780
      %1996 = vmatmul.mubr.f32.gmra.mrb[0].mxu0 %v1779
      %v1997 = vpop.f32.mrb[0].mxu0
      %v1998 = vpop.f32.mrb[0].mxu0
      %1999 = vdwg.mxu0
      %v2000 = vrot.slane %v1773, 1
      %v2001 = vrot.slane %v1774, 1
      %v2002 = vrot.slane %v1775, 1
      %v2003 = vrot.slane %v1776, 1
      %v2004 = vrot.slane %v1777, 1
      %v2005 = vrot.slane %v1778, 1
      %v2006 = vrot.slane %v1779, 1
      %v2007 = vrot.slane %v1780, 1
      %v2008 = vsel %vm845, %v2000, %v2004
      %v2009 = vsel %vm845, %v2001, %v2005
      %v2010 = vsel %vm845, %v2002, %v2006
      %v2011 = vsel %vm845, %v2003, %v2007
      %v2012 = vsel %vm845, %v2004, %v2000
      %v2013 = vsel %vm845, %v2005, %v2001
      %v2014 = vsel %vm845, %v2006, %v2002
      %v2015 = vsel %vm845, %v2007, %v2003
      %s2016 = scalar_lea.vmem %s5, 512
      %v2017 = vld [vmem:[%s2016] sm:$0xff]
      %v2018 = vld [vmem:[%s2016 + $0x8] sm:$0xff]
      %v2019 = vld [vmem:[%s2016 + $0x10] sm:$0xff]
      %v2020 = vld [vmem:[%s2016 + $0x18] sm:$0xff]
      %v2021 = vld [vmem:[%s2016 + $0x20] sm:$0xff]
      %v2022 = vld [vmem:[%s2016 + $0x28] sm:$0xff]
      %v2023 = vld [vmem:[%s2016 + $0x30] sm:$0xff]
      %v2024 = vld [vmem:[%s2016 + $0x38] sm:$0xff]
      %v2025 = vld [vmem:[%s2016 + $0x40] sm:$0xff]
      %v2026 = vld [vmem:[%s2016 + $0x48] sm:$0xff]
      %v2027 = vld [vmem:[%s2016 + $0x50] sm:$0xff]
      %v2028 = vld [vmem:[%s2016 + $0x58] sm:$0xff]
      %v2029 = vld [vmem:[%s2016 + $0x60] sm:$0xff]
      %v2030 = vld [vmem:[%s2016 + $0x68] sm:$0xff]
      %v2031 = vld [vmem:[%s2016 + $0x70] sm:$0xff]
      %v2032 = vld [vmem:[%s2016 + $0x78] sm:$0xff]
      %v2033 = vld [vmem:[%s2016 + $0x80] sm:$0xff]
      %v2034 = vld [vmem:[%s2016 + $0x88] sm:$0xff]
      %v2035 = vld [vmem:[%s2016 + $0x90] sm:$0xff]
      %v2036 = vld [vmem:[%s2016 + $0x98] sm:$0xff]
      %v2037 = vld [vmem:[%s2016 + $0xa0] sm:$0xff]
      %v2038 = vld [vmem:[%s2016 + $0xa8] sm:$0xff]
      %v2039 = vld [vmem:[%s2016 + $0xb0] sm:$0xff]
      %v2040 = vld [vmem:[%s2016 + $0xb8] sm:$0xff]
      %v2041 = vld [vmem:[%s2016 + $0xc0] sm:$0xff]
      %v2042 = vld [vmem:[%s2016 + $0xc8] sm:$0xff]
      %v2043 = vld [vmem:[%s2016 + $0xd0] sm:$0xff]
      %v2044 = vld [vmem:[%s2016 + $0xd8] sm:$0xff]
      %v2045 = vld [vmem:[%s2016 + $0xe0] sm:$0xff]
      %v2046 = vld [vmem:[%s2016 + $0xe8] sm:$0xff]
      %v2047 = vld [vmem:[%s2016 + $0xf0] sm:$0xff]
      %v2048 = vld [vmem:[%s2016 + $0xf8] sm:$0xff]
      %v2049 = vld [vmem:[%s2016 + $0x100] sm:$0xff]
      %v2050 = vld [vmem:[%s2016 + $0x108] sm:$0xff]
      %v2051 = vld [vmem:[%s2016 + $0x110] sm:$0xff]
      %v2052 = vld [vmem:[%s2016 + $0x118] sm:$0xff]
      %v2053 = vld [vmem:[%s2016 + $0x120] sm:$0xff]
      %v2054 = vld [vmem:[%s2016 + $0x128] sm:$0xff]
      %v2055 = vld [vmem:[%s2016 + $0x130] sm:$0xff]
      %v2056 = vld [vmem:[%s2016 + $0x138] sm:$0xff]
      %v2057 = vld [vmem:[%s2016 + $0x140] sm:$0xff]
      %v2058 = vld [vmem:[%s2016 + $0x148] sm:$0xff]
      %v2059 = vld [vmem:[%s2016 + $0x150] sm:$0xff]
      %v2060 = vld [vmem:[%s2016 + $0x158] sm:$0xff]
      %v2061 = vld [vmem:[%s2016 + $0x160] sm:$0xff]
      %v2062 = vld [vmem:[%s2016 + $0x168] sm:$0xff]
      %v2063 = vld [vmem:[%s2016 + $0x170] sm:$0xff]
      %v2064 = vld [vmem:[%s2016 + $0x178] sm:$0xff]
      %v2065 = vld [vmem:[%s2016 + $0x180] sm:$0xff]
      %v2066 = vld [vmem:[%s2016 + $0x188] sm:$0xff]
      %v2067 = vld [vmem:[%s2016 + $0x190] sm:$0xff]
      %v2068 = vld [vmem:[%s2016 + $0x198] sm:$0xff]
      %v2069 = vld [vmem:[%s2016 + $0x1a0] sm:$0xff]
      %v2070 = vld [vmem:[%s2016 + $0x1a8] sm:$0xff]
      %v2071 = vld [vmem:[%s2016 + $0x1b0] sm:$0xff]
      %v2072 = vld [vmem:[%s2016 + $0x1b8] sm:$0xff]
      %v2073 = vld [vmem:[%s2016 + $0x1c0] sm:$0xff]
      %v2074 = vld [vmem:[%s2016 + $0x1c8] sm:$0xff]
      %v2075 = vld [vmem:[%s2016 + $0x1d0] sm:$0xff]
      %v2076 = vld [vmem:[%s2016 + $0x1d8] sm:$0xff]
      %v2077 = vld [vmem:[%s2016 + $0x1e0] sm:$0xff]
      %v2078 = vld [vmem:[%s2016 + $0x1e8] sm:$0xff]
      %v2079 = vld [vmem:[%s2016 + $0x1f0] sm:$0xff]
      %v2080 = vld [vmem:[%s2016 + $0x1f8] sm:$0xff]
      %2081 = vmatprep.subr.mxu0 0.0
      %2082 = vmatpush1.msra.mxu0 %v2017
      %2083 = vmatprep.subr.mxu0 0.0
      %2084 = vmatpush1.msra.mxu0 %v2018
      %2085 = vmatprep.subr.mxu0 0.0
      %2086 = vmatpush1.msra.mxu0 %v2019
      %2087 = vmatprep.subr.mxu0 0.0
      %2088 = vmatpush1.msra.mxu0 %v2020
      %2089 = vmatprep.subr.mxu0 0.0
      %2090 = vmatpush1.msra.mxu0 %v2021
      %2091 = vmatprep.subr.mxu0 0.0
      %2092 = vmatpush1.msra.mxu0 %v2022
      %2093 = vmatprep.subr.mxu0 0.0
      %2094 = vmatpush1.msra.mxu0 %v2023
      %2095 = vmatprep.subr.mxu0 0.0
      %2096 = vmatpush1.msra.mxu0 %v2024
      %2097 = vmatprep.subr.mxu0 0.0
      %2098 = vmatpush1.msra.mxu0 %v2025
      %2099 = vmatprep.subr.mxu0 0.0
      %2100 = vmatpush1.msra.mxu0 %v2026
      %2101 = vmatprep.subr.mxu0 0.0
      %2102 = vmatpush1.msra.mxu0 %v2027
      %2103 = vmatprep.subr.mxu0 0.0
      %2104 = vmatpush1.msra.mxu0 %v2028
      %2105 = vmatprep.subr.mxu0 0.0
      %2106 = vmatpush1.msra.mxu0 %v2029
      %2107 = vmatprep.subr.mxu0 0.0
      %2108 = vmatpush1.msra.mxu0 %v2030
      %2109 = vmatprep.subr.mxu0 0.0
      %2110 = vmatpush1.msra.mxu0 %v2031
      %2111 = vmatprep.subr.mxu0 0.0
      %2112 = vmatpush1.msra.mxu0 %v2032
      %2113 = vmatprep.subr.mxu0 0.0
      %2114 = vmatpush1.msra.mxu0 %v2033
      %2115 = vmatprep.subr.mxu0 0.0
      %2116 = vmatpush1.msra.mxu0 %v2034
      %2117 = vmatprep.subr.mxu0 0.0
      %2118 = vmatpush1.msra.mxu0 %v2035
      %2119 = vmatprep.subr.mxu0 0.0
      %2120 = vmatpush1.msra.mxu0 %v2036
      %2121 = vmatprep.subr.mxu0 0.0
      %2122 = vmatpush1.msra.mxu0 %v2037
      %2123 = vmatprep.subr.mxu0 0.0
      %2124 = vmatpush1.msra.mxu0 %v2038
      %2125 = vmatprep.subr.mxu0 0.0
      %2126 = vmatpush1.msra.mxu0 %v2039
      %2127 = vmatprep.subr.mxu0 0.0
      %2128 = vmatpush1.msra.mxu0 %v2040
      %2129 = vmatprep.subr.mxu0 0.0
      %2130 = vmatpush1.msra.mxu0 %v2041
      %2131 = vmatprep.subr.mxu0 0.0
      %2132 = vmatpush1.msra.mxu0 %v2042
      %2133 = vmatprep.subr.mxu0 0.0
      %2134 = vmatpush1.msra.mxu0 %v2043
      %2135 = vmatprep.subr.mxu0 0.0
      %2136 = vmatpush1.msra.mxu0 %v2044
      %2137 = vmatprep.subr.mxu0 0.0
      %2138 = vmatpush1.msra.mxu0 %v2045
      %2139 = vmatprep.subr.mxu0 0.0
      %2140 = vmatpush1.msra.mxu0 %v2046
      %2141 = vmatprep.subr.mxu0 0.0
      %2142 = vmatpush1.msra.mxu0 %v2047
      %2143 = vmatprep.subr.mxu0 0.0
      %2144 = vmatpush1.msra.mxu0 %v2048
      %2145 = vmatprep.mubr.f32.mxu0 %v2009
      %2146 = vmatmul.mubr.f32.gmra.mrb[0].mxu0 %v2008
      %v2147 = vpop.f32.mrb[0].mxu0
      %v2148 = vadd.f32 0.0, %v2147
      %v2149 = vpop.f32.mrb[0].mxu0
      %2150 = vmatprep.mubr.f32.mxu0 %v2013
      %2151 = vmatmul.mubr.f32.gmra.mrb[0].mxu0 %v2012
      %v2152 = vpop.f32.mrb[0].mxu0
      %v2153 = vpop.f32.mrb[0].mxu0
      %2154 = vdwg.mxu0
      %2155 = vmatprep.subr.mxu0 0.0
      %2156 = vmatpush1.msra.mxu0 %v2049
      %2157 = vmatprep.subr.mxu0 0.0
      %2158 = vmatpush1.msra.mxu0 %v2050
      %2159 = vmatprep.subr.mxu0 0.0
      %2160 = vmatpush1.msra.mxu0 %v2051
      %2161 = vmatprep.subr.mxu0 0.0
      %2162 = vmatpush1.msra.mxu0 %v2052
      %2163 = vmatprep.subr.mxu0 0.0
      %2164 = vmatpush1.msra.mxu0 %v2053
      %2165 = vmatprep.subr.mxu0 0.0
      %2166 = vmatpush1.msra.mxu0 %v2054
      %2167 = vmatprep.subr.mxu0 0.0
      %2168 = vmatpush1.msra.mxu0 %v2055
      %2169 = vmatprep.subr.mxu0 0.0
      %2170 = vmatpush1.msra.mxu0 %v2056
      %2171 = vmatprep.subr.mxu0 0.0
      %2172 = vmatpush1.msra.mxu0 %v2057
      %2173 = vmatprep.subr.mxu0 0.0
      %2174 = vmatpush1.msra.mxu0 %v2058
      %2175 = vmatprep.subr.mxu0 0.0
      %2176 = vmatpush1.msra.mxu0 %v2059
      %2177 = vmatprep.subr.mxu0 0.0
      %2178 = vmatpush1.msra.mxu0 %v2060
      %2179 = vmatprep.subr.mxu0 0.0
      %2180 = vmatpush1.msra.mxu0 %v2061
      %2181 = vmatprep.subr.mxu0 0.0
      %2182 = vmatpush1.msra.mxu0 %v2062
      %2183 = vmatprep.subr.mxu0 0.0
      %2184 = vmatpush1.msra.mxu0 %v2063
      %2185 = vmatprep.subr.mxu0 0.0
      %2186 = vmatpush1.msra.mxu0 %v2064
      %2187 = vmatprep.subr.mxu0 0.0
      %2188 = vmatpush1.msra.mxu0 %v2065
      %2189 = vmatprep.subr.mxu0 0.0
      %2190 = vmatpush1.msra.mxu0 %v2066
      %2191 = vmatprep.subr.mxu0 0.0
      %2192 = vmatpush1.msra.mxu0 %v2067
      %2193 = vmatprep.subr.mxu0 0.0
      %2194 = vmatpush1.msra.mxu0 %v2068
      %2195 = vmatprep.subr.mxu0 0.0
      %2196 = vmatpush1.msra.mxu0 %v2069
      %2197 = vmatprep.subr.mxu0 0.0
      %2198 = vmatpush1.msra.mxu0 %v2070
      %2199 = vmatprep.subr.mxu0 0.0
      %2200 = vmatpush1.msra.mxu0 %v2071
      %2201 = vmatprep.subr.mxu0 0.0
      %2202 = vmatpush1.msra.mxu0 %v2072
      %2203 = vmatprep.subr.mxu0 0.0
      %2204 = vmatpush1.msra.mxu0 %v2073
      %2205 = vmatprep.subr.mxu0 0.0
      %2206 = vmatpush1.msra.mxu0 %v2074
      %2207 = vmatprep.subr.mxu0 0.0
      %2208 = vmatpush1.msra.mxu0 %v2075
      %2209 = vmatprep.subr.mxu0 0.0
      %2210 = vmatpush1.msra.mxu0 %v2076
      %2211 = vmatprep.subr.mxu0 0.0
      %2212 = vmatpush1.msra.mxu0 %v2077
      %2213 = vmatprep.subr.mxu0 0.0
      %2214 = vmatpush1.msra.mxu0 %v2078
      %2215 = vmatprep.subr.mxu0 0.0
      %2216 = vmatpush1.msra.mxu0 %v2079
      %2217 = vmatprep.subr.mxu0 0.0
      %2218 = vmatpush1.msra.mxu0 %v2080
      %2219 = vmatprep.mubr.f32.mxu0 %v2011
      %2220 = vmatmul.mubr.f32.gmra.mrb[0].mxu0 %v2010
      %v2221 = vpop.f32.mrb[0].mxu0
      %v2222 = vadd.f32 %v2148, %v2221
      %v2223 = vpop.f32.mrb[0].mxu0
      %2224 = vmatprep.mubr.f32.mxu0 %v2015
      %2225 = vmatmul.mubr.f32.gmra.mrb[0].mxu0 %v2014
      %v2226 = vpop.f32.mrb[0].mxu0
      %v2227 = vpop.f32.mrb[0].mxu0
      %2228 = vdwg.mxu0
      %v2229 = vadd.f32 %v1993, %v2222
      %v2230 = vrot.slane %v1773, 2
      %v2231 = vrot.slane %v1774, 2
      %v2232 = vrot.slane %v1775, 2
      %v2233 = vrot.slane %v1776, 2
      %v2234 = vrot.slane %v1777, 2
      %v2235 = vrot.slane %v1778, 2
      %v2236 = vrot.slane %v1779, 2
      %v2237 = vrot.slane %v1780, 2
      %vm2238 = vcmp.lt.s32.totalorder %v844, 6
      %v2239 = vsel %vm2238, %v2230, %v2234
      %v2240 = vsel %vm2238, %v2231, %v2235
      %v2241 = vsel %vm2238, %v2232, %v2236
      %v2242 = vsel %vm2238, %v2233, %v2237
      %v2243 = vsel %vm2238, %v2234, %v2230
      %v2244 = vsel %vm2238, %v2235, %v2231
      %v2245 = vsel %vm2238, %v2236, %v2232
      %v2246 = vsel %vm2238, %v2237, %v2233
      %s2247 = scalar_lea.vmem %s5, 1024
      %v2248 = vld [vmem:[%s2247] sm:$0xff]
      %v2249 = vld [vmem:[%s2247 + $0x8] sm:$0xff]
      %v2250 = vld [vmem:[%s2247 + $0x10] sm:$0xff]
      %v2251 = vld [vmem:[%s2247 + $0x18] sm:$0xff]
      %v2252 = vld [vmem:[%s2247 + $0x20] sm:$0xff]
      %v2253 = vld [vmem:[%s2247 + $0x28] sm:$0xff]
      %v2254 = vld [vmem:[%s2247 + $0x30] sm:$0xff]
      %v2255 = vld [vmem:[%s2247 + $0x38] sm:$0xff]
      %v2256 = vld [vmem:[%s2247 + $0x40] sm:$0xff]
      %v2257 = vld [vmem:[%s2247 + $0x48] sm:$0xff]
      %v2258 = vld [vmem:[%s2247 + $0x50] sm:$0xff]
      %v2259 = vld [vmem:[%s2247 + $0x58] sm:$0xff]
      %v2260 = vld [vmem:[%s2247 + $0x60] sm:$0xff]
      %v2261 = vld [vmem:[%s2247 + $0x68] sm:$0xff]
      %v2262 = vld [vmem:[%s2247 + $0x70] sm:$0xff]
      %v2263 = vld [vmem:[%s2247 + $0x78] sm:$0xff]
      %v2264 = vld [vmem:[%s2247 + $0x80] sm:$0xff]
      %v2265 = vld [vmem:[%s2247 + $0x88] sm:$0xff]
      %v2266 = vld [vmem:[%s2247 + $0x90] sm:$0xff]
      %v2267 = vld [vmem:[%s2247 + $0x98] sm:$0xff]
      %v2268 = vld [vmem:[%s2247 + $0xa0] sm:$0xff]
      %v2269 = vld [vmem:[%s2247 + $0xa8] sm:$0xff]
      %v2270 = vld [vmem:[%s2247 + $0xb0] sm:$0xff]
      %v2271 = vld [vmem:[%s2247 + $0xb8] sm:$0xff]
      %v2272 = vld [vmem:[%s2247 + $0xc0] sm:$0xff]
      %v2273 = vld [vmem:[%s2247 + $0xc8] sm:$0xff]
      %v2274 = vld [vmem:[%s2247 + $0xd0] sm:$0xff]
      %v2275 = vld [vmem:[%s2247 + $0xd8] sm:$0xff]
      %v2276 = vld [vmem:[%s2247 + $0xe0] sm:$0xff]
      %v2277 = vld [vmem:[%s2247 + $0xe8] sm:$0xff]
      %v2278 = vld [vmem:[%s2247 + $0xf0] sm:$0xff]
      %v2279 = vld [vmem:[%s2247 + $0xf8] sm:$0xff]
      %v2280 = vld [vmem:[%s2247 + $0x100] sm:$0xff]
      %v2281 = vld [vmem:[%s2247 + $0x108] sm:$0xff]
      %v2282 = vld [vmem:[%s2247 + $0x110] sm:$0xff]
      %v2283 = vld [vmem:[%s2247 + $0x118] sm:$0xff]
      %v2284 = vld [vmem:[%s2247 + $0x120] sm:$0xff]
      %v2285 = vld [vmem:[%s2247 + $0x128] sm:$0xff]
      %v2286 = vld [vmem:[%s2247 + $0x130] sm:$0xff]
      %v2287 = vld [vmem:[%s2247 + $0x138] sm:$0xff]
      %v2288 = vld [vmem:[%s2247 + $0x140] sm:$0xff]
      %v2289 = vld [vmem:[%s2247 + $0x148] sm:$0xff]
      %v2290 = vld [vmem:[%s2247 + $0x150] sm:$0xff]
      %v2291 = vld [vmem:[%s2247 + $0x158] sm:$0xff]
      %v2292 = vld [vmem:[%s2247 + $0x160] sm:$0xff]
      %v2293 = vld [vmem:[%s2247 + $0x168] sm:$0xff]
      %v2294 = vld [vmem:[%s2247 + $0x170] sm:$0xff]
      %v2295 = vld [vmem:[%s2247 + $0x178] sm:$0xff]
      %v2296 = vld [vmem:[%s2247 + $0x180] sm:$0xff]
      %v2297 = vld [vmem:[%s2247 + $0x188] sm:$0xff]
      %v2298 = vld [vmem:[%s2247 + $0x190] sm:$0xff]
      %v2299 = vld [vmem:[%s2247 + $0x198] sm:$0xff]
      %v2300 = vld [vmem:[%s2247 + $0x1a0] sm:$0xff]
      %v2301 = vld [vmem:[%s2247 + $0x1a8] sm:$0xff]
      %v2302 = vld [vmem:[%s2247 + $0x1b0] sm:$0xff]
      %v2303 = vld [vmem:[%s2247 + $0x1b8] sm:$0xff]
      %v2304 = vld [vmem:[%s2247 + $0x1c0] sm:$0xff]
      %v2305 = vld [vmem:[%s2247 + $0x1c8] sm:$0xff]
      %v2306 = vld [vmem:[%s2247 + $0x1d0] sm:$0xff]
      %v2307 = vld [vmem:[%s2247 + $0x1d8] sm:$0xff]
      %v2308 = vld [vmem:[%s2247 + $0x1e0] sm:$0xff]
      %v2309 = vld [vmem:[%s2247 + $0x1e8] sm:$0xff]
      %v2310 = vld [vmem:[%s2247 + $0x1f0] sm:$0xff]
      %v2311 = vld [vmem:[%s2247 + $0x1f8] sm:$0xff]
      %2312 = vmatprep.subr.mxu0 0.0
      %2313 = vmatpush1.msra.mxu0 %v2248
      %2314 = vmatprep.subr.mxu0 0.0
      %2315 = vmatpush1.msra.mxu0 %v2249
      %2316 = vmatprep.subr.mxu0 0.0
      %2317 = vmatpush1.msra.mxu0 %v2250
      %2318 = vmatprep.subr.mxu0 0.0
      %2319 = vmatpush1.msra.mxu0 %v2251
      %2320 = vmatprep.subr.mxu0 0.0
      %2321 = vmatpush1.msra.mxu0 %v2252
      %2322 = vmatprep.subr.mxu0 0.0
      %2323 = vmatpush1.msra.mxu0 %v2253
      %2324 = vmatprep.subr.mxu0 0.0
      %2325 = vmatpush1.msra.mxu0 %v2254
      %2326 = vmatprep.subr.mxu0 0.0
      %2327 = vmatpush1.msra.mxu0 %v2255
      %2328 = vmatprep.subr.mxu0 0.0
      %2329 = vmatpush1.msra.mxu0 %v2256
      %2330 = vmatprep.subr.mxu0 0.0
      %2331 = vmatpush1.msra.mxu0 %v2257
      %2332 = vmatprep.subr.mxu0 0.0
      %2333 = vmatpush1.msra.mxu0 %v2258
      %2334 = vmatprep.subr.mxu0 0.0
      %2335 = vmatpush1.msra.mxu0 %v2259
      %2336 = vmatprep.subr.mxu0 0.0
      %2337 = vmatpush1.msra.mxu0 %v2260
      %2338 = vmatprep.subr.mxu0 0.0
      %2339 = vmatpush1.msra.mxu0 %v2261
      %2340 = vmatprep.subr.mxu0 0.0
      %2341 = vmatpush1.msra.mxu0 %v2262
      %2342 = vmatprep.subr.mxu0 0.0
      %2343 = vmatpush1.msra.mxu0 %v2263
      %2344 = vmatprep.subr.mxu0 0.0
      %2345 = vmatpush1.msra.mxu0 %v2264
      %2346 = vmatprep.subr.mxu0 0.0
      %2347 = vmatpush1.msra.mxu0 %v2265
      %2348 = vmatprep.subr.mxu0 0.0
      %2349 = vmatpush1.msra.mxu0 %v2266
      %2350 = vmatprep.subr.mxu0 0.0
      %2351 = vmatpush1.msra.mxu0 %v2267
      %2352 = vmatprep.subr.mxu0 0.0
      %2353 = vmatpush1.msra.mxu0 %v2268
      %2354 = vmatprep.subr.mxu0 0.0
      %2355 = vmatpush1.msra.mxu0 %v2269
      %2356 = vmatprep.subr.mxu0 0.0
      %2357 = vmatpush1.msra.mxu0 %v2270
      %2358 = vmatprep.subr.mxu0 0.0
      %2359 = vmatpush1.msra.mxu0 %v2271
      %2360 = vmatprep.subr.mxu0 0.0
      %2361 = vmatpush1.msra.mxu0 %v2272
      %2362 = vmatprep.subr.mxu0 0.0
      %2363 = vmatpush1.msra.mxu0 %v2273
      %2364 = vmatprep.subr.mxu0 0.0
      %2365 = vmatpush1.msra.mxu0 %v2274
      %2366 = vmatprep.subr.mxu0 0.0
      %2367 = vmatpush1.msra.mxu0 %v2275
      %2368 = vmatprep.subr.mxu0 0.0
      %2369 = vmatpush1.msra.mxu0 %v2276
      %2370 = vmatprep.subr.mxu0 0.0
      %2371 = vmatpush1.msra.mxu0 %v2277
      %2372 = vmatprep.subr.mxu0 0.0
      %2373 = vmatpush1.msra.mxu0 %v2278
      %2374 = vmatprep.subr.mxu0 0.0
      %2375 = vmatpush1.msra.mxu0 %v2279
      %2376 = vmatprep.mubr.f32.mxu0 %v2240
      %2377 = vmatmul.mubr.f32.gmra.mrb[0].mxu0 %v2239
      %v2378 = vpop.f32.mrb[0].mxu0
      %v2379 = vadd.f32 0.0, %v2378
      %v2380 = vpop.f32.mrb[0].mxu0
      %2381 = vmatprep.mubr.f32.mxu0 %v2244
      %2382 = vmatmul.mubr.f32.gmra.mrb[0].mxu0 %v2243
      %v2383 = vpop.f32.mrb[0].mxu0
      %v2384 = vpop.f32.mrb[0].mxu0
      %2385 = vdwg.mxu0
      %2386 = vmatprep.subr.mxu0 0.0
      %2387 = vmatpush1.msra.mxu0 %v2280
      %2388 = vmatprep.subr.mxu0 0.0
      %2389 = vmatpush1.msra.mxu0 %v2281
      %2390 = vmatprep.subr.mxu0 0.0
      %2391 = vmatpush1.msra.mxu0 %v2282
      %2392 = vmatprep.subr.mxu0 0.0
      %2393 = vmatpush1.msra.mxu0 %v2283
      %2394 = vmatprep.subr.mxu0 0.0
      %2395 = vmatpush1.msra.mxu0 %v2284
      %2396 = vmatprep.subr.mxu0 0.0
      %2397 = vmatpush1.msra.mxu0 %v2285
      %2398 = vmatprep.subr.mxu0 0.0
      %2399 = vmatpush1.msra.mxu0 %v2286
      %2400 = vmatprep.subr.mxu0 0.0
      %2401 = vmatpush1.msra.mxu0 %v2287
      %2402 = vmatprep.subr.mxu0 0.0
      %2403 = vmatpush1.msra.mxu0 %v2288
      %2404 = vmatprep.subr.mxu0 0.0
      %2405 = vmatpush1.msra.mxu0 %v2289
      %2406 = vmatprep.subr.mxu0 0.0
      %2407 = vmatpush1.msra.mxu0 %v2290
      %2408 = vmatprep.subr.mxu0 0.0
      %2409 = vmatpush1.msra.mxu0 %v2291
      %2410 = vmatprep.subr.mxu0 0.0
      %2411 = vmatpush1.msra.mxu0 %v2292
      %2412 = vmatprep.subr.mxu0 0.0
      %2413 = vmatpush1.msra.mxu0 %v2293
      %2414 = vmatprep.subr.mxu0 0.0
      %2415 = vmatpush1.msra.mxu0 %v2294
      %2416 = vmatprep.subr.mxu0 0.0
      %2417 = vmatpush1.msra.mxu0 %v2295
      %2418 = vmatprep.subr.mxu0 0.0
      %2419 = vmatpush1.msra.mxu0 %v2296
      %2420 = vmatprep.subr.mxu0 0.0
      %2421 = vmatpush1.msra.mxu0 %v2297
      %2422 = vmatprep.subr.mxu0 0.0
      %2423 = vmatpush1.msra.mxu0 %v2298
      %2424 = vmatprep.subr.mxu0 0.0
      %2425 = vmatpush1.msra.mxu0 %v2299
      %2426 = vmatprep.subr.mxu0 0.0
      %2427 = vmatpush1.msra.mxu0 %v2300
      %2428 = vmatprep.subr.mxu0 0.0
      %2429 = vmatpush1.msra.mxu0 %v2301
      %2430 = vmatprep.subr.mxu0 0.0
      %2431 = vmatpush1.msra.mxu0 %v2302
      %2432 = vmatprep.subr.mxu0 0.0
      %2433 = vmatpush1.msra.mxu0 %v2303
      %2434 = vmatprep.subr.mxu0 0.0
      %2435 = vmatpush1.msra.mxu0 %v2304
      %2436 = vmatprep.subr.mxu0 0.0
      %2437 = vmatpush1.msra.mxu0 %v2305
      %2438 = vmatprep.subr.mxu0 0.0
      %2439 = vmatpush1.msra.mxu0 %v2306
      %2440 = vmatprep.subr.mxu0 0.0
      %2441 = vmatpush1.msra.mxu0 %v2307
      %2442 = vmatprep.subr.mxu0 0.0
      %2443 = vmatpush1.msra.mxu0 %v2308
      %2444 = vmatprep.subr.mxu0 0.0
      %2445 = vmatpush1.msra.mxu0 %v2309
      %2446 = vmatprep.subr.mxu0 0.0
      %2447 = vmatpush1.msra.mxu0 %v2310
      %2448 = vmatprep.subr.mxu0 0.0
      %2449 = vmatpush1.msra.mxu0 %v2311
      %2450 = vmatprep.mubr.f32.mxu0 %v2242
      %2451 = vmatmul.mubr.f32.gmra.mrb[0].mxu0 %v2241
      %v2452 = vpop.f32.mrb[0].mxu0
      %v2453 = vadd.f32 %v2379, %v2452
      %v2454 = vpop.f32.mrb[0].mxu0
      %2455 = vmatprep.mubr.f32.mxu0 %v2246
      %2456 = vmatmul.mubr.f32.gmra.mrb[0].mxu0 %v2245
      %v2457 = vpop.f32.mrb[0].mxu0
      %v2458 = vpop.f32.mrb[0].mxu0
      %2459 = vdwg.mxu0
      %v2460 = vadd.f32 %v2229, %v2453
      %v2461 = vrot.slane %v1773, 3
      %v2462 = vrot.slane %v1774, 3
      %v2463 = vrot.slane %v1775, 3
      %v2464 = vrot.slane %v1776, 3
      %v2465 = vrot.slane %v1777, 3
      %v2466 = vrot.slane %v1778, 3
      %v2467 = vrot.slane %v1779, 3
      %v2468 = vrot.slane %v1780, 3
      %vm2469 = vcmp.lt.s32.totalorder %v844, 5
      %v2470 = vsel %vm2469, %v2461, %v2465
      %v2471 = vsel %vm2469, %v2462, %v2466
      %v2472 = vsel %vm2469, %v2463, %v2467
      %v2473 = vsel %vm2469, %v2464, %v2468
      %v2474 = vsel %vm2469, %v2465, %v2461
      %v2475 = vsel %vm2469, %v2466, %v2462
      %v2476 = vsel %vm2469, %v2467, %v2463
      %v2477 = vsel %vm2469, %v2468, %v2464
      %s2478 = scalar_lea.vmem %s5, 1536
      %v2479 = vld [vmem:[%s2478] sm:$0xff]
      %v2480 = vld [vmem:[%s2478 + $0x8] sm:$0xff]
      %v2481 = vld [vmem:[%s2478 + $0x10] sm:$0xff]
      %v2482 = vld [vmem:[%s2478 + $0x18] sm:$0xff]
      %v2483 = vld [vmem:[%s2478 + $0x20] sm:$0xff]
      %v2484 = vld [vmem:[%s2478 + $0x28] sm:$0xff]
      %v2485 = vld [vmem:[%s2478 + $0x30] sm:$0xff]
      %v2486 = vld [vmem:[%s2478 + $0x38] sm:$0xff]
      %v2487 = vld [vmem:[%s2478 + $0x40] sm:$0xff]
      %v2488 = vld [vmem:[%s2478 + $0x48] sm:$0xff]
      %v2489 = vld [vmem:[%s2478 + $0x50] sm:$0xff]
      %v2490 = vld [vmem:[%s2478 + $0x58] sm:$0xff]
      %v2491 = vld [vmem:[%s2478 + $0x60] sm:$0xff]
      %v2492 = vld [vmem:[%s2478 + $0x68] sm:$0xff]
      %v2493 = vld [vmem:[%s2478 + $0x70] sm:$0xff]
      %v2494 = vld [vmem:[%s2478 + $0x78] sm:$0xff]
      %v2495 = vld [vmem:[%s2478 + $0x80] sm:$0xff]
      %v2496 = vld [vmem:[%s2478 + $0x88] sm:$0xff]
      %v2497 = vld [vmem:[%s2478 + $0x90] sm:$0xff]
      %v2498 = vld [vmem:[%s2478 + $0x98] sm:$0xff]
      %v2499 = vld [vmem:[%s2478 + $0xa0] sm:$0xff]
      %v2500 = vld [vmem:[%s2478 + $0xa8] sm:$0xff]
      %v2501 = vld [vmem:[%s2478 + $0xb0] sm:$0xff]
      %v2502 = vld [vmem:[%s2478 + $0xb8] sm:$0xff]
      %v2503 = vld [vmem:[%s2478 + $0xc0] sm:$0xff]
      %v2504 = vld [vmem:[%s2478 + $0xc8] sm:$0xff]
      %v2505 = vld [vmem:[%s2478 + $0xd0] sm:$0xff]
      %v2506 = vld [vmem:[%s2478 + $0xd8] sm:$0xff]
      %v2507 = vld [vmem:[%s2478 + $0xe0] sm:$0xff]
      %v2508 = vld [vmem:[%s2478 + $0xe8] sm:$0xff]
      %v2509 = vld [vmem:[%s2478 + $0xf0] sm:$0xff]
      %v2510 = vld [vmem:[%s2478 + $0xf8] sm:$0xff]
      %v2511 = vld [vmem:[%s2478 + $0x100] sm:$0xff]
      %v2512 = vld [vmem:[%s2478 + $0x108] sm:$0xff]
      %v2513 = vld [vmem:[%s2478 + $0x110] sm:$0xff]
      %v2514 = vld [vmem:[%s2478 + $0x118] sm:$0xff]
      %v2515 = vld [vmem:[%s2478 + $0x120] sm:$0xff]
      %v2516 = vld [vmem:[%s2478 + $0x128] sm:$0xff]
      %v2517 = vld [vmem:[%s2478 + $0x130] sm:$0xff]
      %v2518 = vld [vmem:[%s2478 + $0x138] sm:$0xff]
      %v2519 = vld [vmem:[%s2478 + $0x140] sm:$0xff]
      %v2520 = vld [vmem:[%s2478 + $0x148] sm:$0xff]
      %v2521 = vld [vmem:[%s2478 + $0x150] sm:$0xff]
      %v2522 = vld [vmem:[%s2478 + $0x158] sm:$0xff]
      %v2523 = vld [vmem:[%s2478 + $0x160] sm:$0xff]
      %v2524 = vld [vmem:[%s2478 + $0x168] sm:$0xff]
      %v2525 = vld [vmem:[%s2478 + $0x170] sm:$0xff]
      %v2526 = vld [vmem:[%s2478 + $0x178] sm:$0xff]
      %v2527 = vld [vmem:[%s2478 + $0x180] sm:$0xff]
      %v2528 = vld [vmem:[%s2478 + $0x188] sm:$0xff]
      %v2529 = vld [vmem:[%s2478 + $0x190] sm:$0xff]
      %v2530 = vld [vmem:[%s2478 + $0x198] sm:$0xff]
      %v2531 = vld [vmem:[%s2478 + $0x1a0] sm:$0xff]
      %v2532 = vld [vmem:[%s2478 + $0x1a8] sm:$0xff]
      %v2533 = vld [vmem:[%s2478 + $0x1b0] sm:$0xff]
      %v2534 = vld [vmem:[%s2478 + $0x1b8] sm:$0xff]
      %v2535 = vld [vmem:[%s2478 + $0x1c0] sm:$0xff]
      %v2536 = vld [vmem:[%s2478 + $0x1c8] sm:$0xff]
      %v2537 = vld [vmem:[%s2478 + $0x1d0] sm:$0xff]
      %v2538 = vld [vmem:[%s2478 + $0x1d8] sm:$0xff]
      %v2539 = vld [vmem:[%s2478 + $0x1e0] sm:$0xff]
      %v2540 = vld [vmem:[%s2478 + $0x1e8] sm:$0xff]
      %v2541 = vld [vmem:[%s2478 + $0x1f0] sm:$0xff]
      %v2542 = vld [vmem:[%s2478 + $0x1f8] sm:$0xff]
      %2543 = vmatprep.subr.mxu0 0.0
      %2544 = vmatpush1.msra.mxu0 %v2479
      %2545 = vmatprep.subr.mxu0 0.0
      %2546 = vmatpush1.msra.mxu0 %v2480
      %2547 = vmatprep.subr.mxu0 0.0
      %2548 = vmatpush1.msra.mxu0 %v2481
      %2549 = vmatprep.subr.mxu0 0.0
      %2550 = vmatpush1.msra.mxu0 %v2482
      %2551 = vmatprep.subr.mxu0 0.0
      %2552 = vmatpush1.msra.mxu0 %v2483
      %2553 = vmatprep.subr.mxu0 0.0
      %2554 = vmatpush1.msra.mxu0 %v2484
      %2555 = vmatprep.subr.mxu0 0.0
      %2556 = vmatpush1.msra.mxu0 %v2485
      %2557 = vmatprep.subr.mxu0 0.0
      %2558 = vmatpush1.msra.mxu0 %v2486
      %2559 = vmatprep.subr.mxu0 0.0
      %2560 = vmatpush1.msra.mxu0 %v2487
      %2561 = vmatprep.subr.mxu0 0.0
      %2562 = vmatpush1.msra.mxu0 %v2488
      %2563 = vmatprep.subr.mxu0 0.0
      %2564 = vmatpush1.msra.mxu0 %v2489
      %2565 = vmatprep.subr.mxu0 0.0
      %2566 = vmatpush1.msra.mxu0 %v2490
      %2567 = vmatprep.subr.mxu0 0.0
      %2568 = vmatpush1.msra.mxu0 %v2491
      %2569 = vmatprep.subr.mxu0 0.0
      %2570 = vmatpush1.msra.mxu0 %v2492
      %2571 = vmatprep.subr.mxu0 0.0
      %2572 = vmatpush1.msra.mxu0 %v2493
      %2573 = vmatprep.subr.mxu0 0.0
      %2574 = vmatpush1.msra.mxu0 %v2494
      %2575 = vmatprep.subr.mxu0 0.0
      %2576 = vmatpush1.msra.mxu0 %v2495
      %2577 = vmatprep.subr.mxu0 0.0
      %2578 = vmatpush1.msra.mxu0 %v2496
      %2579 = vmatprep.subr.mxu0 0.0
      %2580 = vmatpush1.msra.mxu0 %v2497
      %2581 = vmatprep.subr.mxu0 0.0
      %2582 = vmatpush1.msra.mxu0 %v2498
      %2583 = vmatprep.subr.mxu0 0.0
      %2584 = vmatpush1.msra.mxu0 %v2499
      %2585 = vmatprep.subr.mxu0 0.0
      %2586 = vmatpush1.msra.mxu0 %v2500
      %2587 = vmatprep.subr.mxu0 0.0
      %2588 = vmatpush1.msra.mxu0 %v2501
      %2589 = vmatprep.subr.mxu0 0.0
      %2590 = vmatpush1.msra.mxu0 %v2502
      %2591 = vmatprep.subr.mxu0 0.0
      %2592 = vmatpush1.msra.mxu0 %v2503
      %2593 = vmatprep.subr.mxu0 0.0
      %2594 = vmatpush1.msra.mxu0 %v2504
      %2595 = vmatprep.subr.mxu0 0.0
      %2596 = vmatpush1.msra.mxu0 %v2505
      %2597 = vmatprep.subr.mxu0 0.0
      %2598 = vmatpush1.msra.mxu0 %v2506
      %2599 = vmatprep.subr.mxu0 0.0
      %2600 = vmatpush1.msra.mxu0 %v2507
      %2601 = vmatprep.subr.mxu0 0.0
      %2602 = vmatpush1.msra.mxu0 %v2508
      %2603 = vmatprep.subr.mxu0 0.0
      %2604 = vmatpush1.msra.mxu0 %v2509
      %2605 = vmatprep.subr.mxu0 0.0
      %2606 = vmatpush1.msra.mxu0 %v2510
      %2607 = vmatprep.mubr.f32.mxu0 %v2471
      %2608 = vmatmul.mubr.f32.gmra.mrb[0].mxu0 %v2470
      %v2609 = vpop.f32.mrb[0].mxu0
      %v2610 = vadd.f32 0.0, %v2609
      %v2611 = vpop.f32.mrb[0].mxu0
      %2612 = vmatprep.mubr.f32.mxu0 %v2475
      %2613 = vmatmul.mubr.f32.gmra.mrb[0].mxu0 %v2474
      %v2614 = vpop.f32.mrb[0].mxu0
      %v2615 = vpop.f32.mrb[0].mxu0
      %2616 = vdwg.mxu0
      %2617 = vmatprep.subr.mxu0 0.0
      %2618 = vmatpush1.msra.mxu0 %v2511
      %2619 = vmatprep.subr.mxu0 0.0
      %2620 = vmatpush1.msra.mxu0 %v2512
      %2621 = vmatprep.subr.mxu0 0.0
      %2622 = vmatpush1.msra.mxu0 %v2513
      %2623 = vmatprep.subr.mxu0 0.0
      %2624 = vmatpush1.msra.mxu0 %v2514
      %2625 = vmatprep.subr.mxu0 0.0
      %2626 = vmatpush1.msra.mxu0 %v2515
      %2627 = vmatprep.subr.mxu0 0.0
      %2628 = vmatpush1.msra.mxu0 %v2516
      %2629 = vmatprep.subr.mxu0 0.0
      %2630 = vmatpush1.msra.mxu0 %v2517
      %2631 = vmatprep.subr.mxu0 0.0
      %2632 = vmatpush1.msra.mxu0 %v2518
      %2633 = vmatprep.subr.mxu0 0.0
      %2634 = vmatpush1.msra.mxu0 %v2519
      %2635 = vmatprep.subr.mxu0 0.0
      %2636 = vmatpush1.msra.mxu0 %v2520
      %2637 = vmatprep.subr.mxu0 0.0
      %2638 = vmatpush1.msra.mxu0 %v2521
      %2639 = vmatprep.subr.mxu0 0.0
      %2640 = vmatpush1.msra.mxu0 %v2522
      %2641 = vmatprep.subr.mxu0 0.0
      %2642 = vmatpush1.msra.mxu0 %v2523
      %2643 = vmatprep.subr.mxu0 0.0
      %2644 = vmatpush1.msra.mxu0 %v2524
      %2645 = vmatprep.subr.mxu0 0.0
      %2646 = vmatpush1.msra.mxu0 %v2525
      %2647 = vmatprep.subr.mxu0 0.0
      %2648 = vmatpush1.msra.mxu0 %v2526
      %2649 = vmatprep.subr.mxu0 0.0
      %2650 = vmatpush1.msra.mxu0 %v2527
      %2651 = vmatprep.subr.mxu0 0.0
      %2652 = vmatpush1.msra.mxu0 %v2528
      %2653 = vmatprep.subr.mxu0 0.0
      %2654 = vmatpush1.msra.mxu0 %v2529
      %2655 = vmatprep.subr.mxu0 0.0
      %2656 = vmatpush1.msra.mxu0 %v2530
      %2657 = vmatprep.subr.mxu0 0.0
      %2658 = vmatpush1.msra.mxu0 %v2531
      %2659 = vmatprep.subr.mxu0 0.0
      %2660 = vmatpush1.msra.mxu0 %v2532
      %2661 = vmatprep.subr.mxu0 0.0
      %2662 = vmatpush1.msra.mxu0 %v2533
      %2663 = vmatprep.subr.mxu0 0.0
      %2664 = vmatpush1.msra.mxu0 %v2534
      %2665 = vmatprep.subr.mxu0 0.0
      %2666 = vmatpush1.msra.mxu0 %v2535
      %2667 = vmatprep.subr.mxu0 0.0
      %2668 = vmatpush1.msra.mxu0 %v2536
      %2669 = vmatprep.subr.mxu0 0.0
      %2670 = vmatpush1.msra.mxu0 %v2537
      %2671 = vmatprep.subr.mxu0 0.0
      %2672 = vmatpush1.msra.mxu0 %v2538
      %2673 = vmatprep.subr.mxu0 0.0
      %2674 = vmatpush1.msra.mxu0 %v2539
      %2675 = vmatprep.subr.mxu0 0.0
      %2676 = vmatpush1.msra.mxu0 %v2540
      %2677 = vmatprep.subr.mxu0 0.0
      %2678 = vmatpush1.msra.mxu0 %v2541
      %2679 = vmatprep.subr.mxu0 0.0
      %2680 = vmatpush1.msra.mxu0 %v2542
      %2681 = vmatprep.mubr.f32.mxu0 %v2473
      %2682 = vmatmul.mubr.f32.gmra.mrb[0].mxu0 %v2472
      %v2683 = vpop.f32.mrb[0].mxu0
      %v2684 = vadd.f32 %v2610, %v2683
      %v2685 = vpop.f32.mrb[0].mxu0
      %2686 = vmatprep.mubr.f32.mxu0 %v2477
      %2687 = vmatmul.mubr.f32.gmra.mrb[0].mxu0 %v2476
      %v2688 = vpop.f32.mrb[0].mxu0
      %v2689 = vpop.f32.mrb[0].mxu0
      %2690 = vdwg.mxu0
      %v2691 = vadd.f32 %v2460, %v2684
      %v2692 = vrot.slane %v1773, 4
      %v2693 = vrot.slane %v1774, 4
      %v2694 = vrot.slane %v1775, 4
      %v2695 = vrot.slane %v1776, 4
      %v2696 = vrot.slane %v1777, 4
      %v2697 = vrot.slane %v1778, 4
      %v2698 = vrot.slane %v1779, 4
      %v2699 = vrot.slane %v1780, 4
      %vm2700 = vcmp.lt.s32.totalorder %v844, 4
      %v2701 = vsel %vm2700, %v2692, %v2696
      %v2702 = vsel %vm2700, %v2693, %v2697
      %v2703 = vsel %vm2700, %v2694, %v2698
      %v2704 = vsel %vm2700, %v2695, %v2699
      %v2705 = vsel %vm2700, %v2696, %v2692
      %v2706 = vsel %vm2700, %v2697, %v2693
      %v2707 = vsel %vm2700, %v2698, %v2694
      %v2708 = vsel %vm2700, %v2699, %v2695
      %s2709 = scalar_lea.vmem %s5, 2048
      %v2710 = vld [vmem:[%s2709] sm:$0xff]
      %v2711 = vld [vmem:[%s2709 + $0x8] sm:$0xff]
      %v2712 = vld [vmem:[%s2709 + $0x10] sm:$0xff]
      %v2713 = vld [vmem:[%s2709 + $0x18] sm:$0xff]
      %v2714 = vld [vmem:[%s2709 + $0x20] sm:$0xff]
      %v2715 = vld [vmem:[%s2709 + $0x28] sm:$0xff]
      %v2716 = vld [vmem:[%s2709 + $0x30] sm:$0xff]
      %v2717 = vld [vmem:[%s2709 + $0x38] sm:$0xff]
      %v2718 = vld [vmem:[%s2709 + $0x40] sm:$0xff]
      %v2719 = vld [vmem:[%s2709 + $0x48] sm:$0xff]
      %v2720 = vld [vmem:[%s2709 + $0x50] sm:$0xff]
      %v2721 = vld [vmem:[%s2709 + $0x58] sm:$0xff]
      %v2722 = vld [vmem:[%s2709 + $0x60] sm:$0xff]
      %v2723 = vld [vmem:[%s2709 + $0x68] sm:$0xff]
      %v2724 = vld [vmem:[%s2709 + $0x70] sm:$0xff]
      %v2725 = vld [vmem:[%s2709 + $0x78] sm:$0xff]
      %v2726 = vld [vmem:[%s2709 + $0x80] sm:$0xff]
      %v2727 = vld [vmem:[%s2709 + $0x88] sm:$0xff]
      %v2728 = vld [vmem:[%s2709 + $0x90] sm:$0xff]
      %v2729 = vld [vmem:[%s2709 + $0x98] sm:$0xff]
      %v2730 = vld [vmem:[%s2709 + $0xa0] sm:$0xff]
      %v2731 = vld [vmem:[%s2709 + $0xa8] sm:$0xff]
      %v2732 = vld [vmem:[%s2709 + $0xb0] sm:$0xff]
      %v2733 = vld [vmem:[%s2709 + $0xb8] sm:$0xff]
      %v2734 = vld [vmem:[%s2709 + $0xc0] sm:$0xff]
      %v2735 = vld [vmem:[%s2709 + $0xc8] sm:$0xff]
      %v2736 = vld [vmem:[%s2709 + $0xd0] sm:$0xff]
      %v2737 = vld [vmem:[%s2709 + $0xd8] sm:$0xff]
      %v2738 = vld [vmem:[%s2709 + $0xe0] sm:$0xff]
      %v2739 = vld [vmem:[%s2709 + $0xe8] sm:$0xff]
      %v2740 = vld [vmem:[%s2709 + $0xf0] sm:$0xff]
      %v2741 = vld [vmem:[%s2709 + $0xf8] sm:$0xff]
      %v2742 = vld [vmem:[%s2709 + $0x100] sm:$0xff]
      %v2743 = vld [vmem:[%s2709 + $0x108] sm:$0xff]
      %v2744 = vld [vmem:[%s2709 + $0x110] sm:$0xff]
      %v2745 = vld [vmem:[%s2709 + $0x118] sm:$0xff]
      %v2746 = vld [vmem:[%s2709 + $0x120] sm:$0xff]
      %v2747 = vld [vmem:[%s2709 + $0x128] sm:$0xff]
      %v2748 = vld [vmem:[%s2709 + $0x130] sm:$0xff]
      %v2749 = vld [vmem:[%s2709 + $0x138] sm:$0xff]
      %v2750 = vld [vmem:[%s2709 + $0x140] sm:$0xff]
      %v2751 = vld [vmem:[%s2709 + $0x148] sm:$0xff]
      %v2752 = vld [vmem:[%s2709 + $0x150] sm:$0xff]
      %v2753 = vld [vmem:[%s2709 + $0x158] sm:$0xff]
      %v2754 = vld [vmem:[%s2709 + $0x160] sm:$0xff]
      %v2755 = vld [vmem:[%s2709 + $0x168] sm:$0xff]
      %v2756 = vld [vmem:[%s2709 + $0x170] sm:$0xff]
      %v2757 = vld [vmem:[%s2709 + $0x178] sm:$0xff]
      %v2758 = vld [vmem:[%s2709 + $0x180] sm:$0xff]
      %v2759 = vld [vmem:[%s2709 + $0x188] sm:$0xff]
      %v2760 = vld [vmem:[%s2709 + $0x190] sm:$0xff]
      %v2761 = vld [vmem:[%s2709 + $0x198] sm:$0xff]
      %v2762 = vld [vmem:[%s2709 + $0x1a0] sm:$0xff]
      %v2763 = vld [vmem:[%s2709 + $0x1a8] sm:$0xff]
      %v2764 = vld [vmem:[%s2709 + $0x1b0] sm:$0xff]
      %v2765 = vld [vmem:[%s2709 + $0x1b8] sm:$0xff]
      %v2766 = vld [vmem:[%s2709 + $0x1c0] sm:$0xff]
      %v2767 = vld [vmem:[%s2709 + $0x1c8] sm:$0xff]
      %v2768 = vld [vmem:[%s2709 + $0x1d0] sm:$0xff]
      %v2769 = vld [vmem:[%s2709 + $0x1d8] sm:$0xff]
      %v2770 = vld [vmem:[%s2709 + $0x1e0] sm:$0xff]
      %v2771 = vld [vmem:[%s2709 + $0x1e8] sm:$0xff]
      %v2772 = vld [vmem:[%s2709 + $0x1f0] sm:$0xff]
      %v2773 = vld [vmem:[%s2709 + $0x1f8] sm:$0xff]
      %2774 = vmatprep.subr.mxu0 0.0
      %2775 = vmatpush1.msra.mxu0 %v2710
      %2776 = vmatprep.subr.mxu0 0.0
      %2777 = vmatpush1.msra.mxu0 %v2711
      %2778 = vmatprep.subr.mxu0 0.0
      %2779 = vmatpush1.msra.mxu0 %v2712
      %2780 = vmatprep.subr.mxu0 0.0
      %2781 = vmatpush1.msra.mxu0 %v2713
      %2782 = vmatprep.subr.mxu0 0.0
      %2783 = vmatpush1.msra.mxu0 %v2714
      %2784 = vmatprep.subr.mxu0 0.0
      %2785 = vmatpush1.msra.mxu0 %v2715
      %2786 = vmatprep.subr.mxu0 0.0
      %2787 = vmatpush1.msra.mxu0 %v2716
      %2788 = vmatprep.subr.mxu0 0.0
      %2789 = vmatpush1.msra.mxu0 %v2717
      %2790 = vmatprep.subr.mxu0 0.0
      %2791 = vmatpush1.msra.mxu0 %v2718
      %2792 = vmatprep.subr.mxu0 0.0
      %2793 = vmatpush1.msra.mxu0 %v2719
      %2794 = vmatprep.subr.mxu0 0.0
      %2795 = vmatpush1.msra.mxu0 %v2720
      %2796 = vmatprep.subr.mxu0 0.0
      %2797 = vmatpush1.msra.mxu0 %v2721
      %2798 = vmatprep.subr.mxu0 0.0
      %2799 = vmatpush1.msra.mxu0 %v2722
      %2800 = vmatprep.subr.mxu0 0.0
      %2801 = vmatpush1.msra.mxu0 %v2723
      %2802 = vmatprep.subr.mxu0 0.0
      %2803 = vmatpush1.msra.mxu0 %v2724
      %2804 = vmatprep.subr.mxu0 0.0
      %2805 = vmatpush1.msra.mxu0 %v2725
      %2806 = vmatprep.subr.mxu0 0.0
      %2807 = vmatpush1.msra.mxu0 %v2726
      %2808 = vmatprep.subr.mxu0 0.0
      %2809 = vmatpush1.msra.mxu0 %v2727
      %2810 = vmatprep.subr.mxu0 0.0
      %2811 = vmatpush1.msra.mxu0 %v2728
      %2812 = vmatprep.subr.mxu0 0.0
      %2813 = vmatpush1.msra.mxu0 %v2729
      %2814 = vmatprep.subr.mxu0 0.0
      %2815 = vmatpush1.msra.mxu0 %v2730
      %2816 = vmatprep.subr.mxu0 0.0
      %2817 = vmatpush1.msra.mxu0 %v2731
      %2818 = vmatprep.subr.mxu0 0.0
      %2819 = vmatpush1.msra.mxu0 %v2732
      %2820 = vmatprep.subr.mxu0 0.0
      %2821 = vmatpush1.msra.mxu0 %v2733
      %2822 = vmatprep.subr.mxu0 0.0
      %2823 = vmatpush1.msra.mxu0 %v2734
      %2824 = vmatprep.subr.mxu0 0.0
      %2825 = vmatpush1.msra.mxu0 %v2735
      %2826 = vmatprep.subr.mxu0 0.0
      %2827 = vmatpush1.msra.mxu0 %v2736
      %2828 = vmatprep.subr.mxu0 0.0
      %2829 = vmatpush1.msra.mxu0 %v2737
      %2830 = vmatprep.subr.mxu0 0.0
      %2831 = vmatpush1.msra.mxu0 %v2738
      %2832 = vmatprep.subr.mxu0 0.0
      %2833 = vmatpush1.msra.mxu0 %v2739
      %2834 = vmatprep.subr.mxu0 0.0
      %2835 = vmatpush1.msra.mxu0 %v2740
      %2836 = vmatprep.subr.mxu0 0.0
      %2837 = vmatpush1.msra.mxu0 %v2741
      %2838 = vmatprep.mubr.f32.mxu0 %v2702
      %2839 = vmatmul.mubr.f32.gmra.mrb[0].mxu0 %v2701
      %v2840 = vpop.f32.mrb[0].mxu0
      %v2841 = vadd.f32 0.0, %v2840
      %v2842 = vpop.f32.mrb[0].mxu0
      %2843 = vmatprep.mubr.f32.mxu0 %v2706
      %2844 = vmatmul.mubr.f32.gmra.mrb[0].mxu0 %v2705
      %v2845 = vpop.f32.mrb[0].mxu0
      %v2846 = vpop.f32.mrb[0].mxu0
      %2847 = vdwg.mxu0
      %2848 = vmatprep.subr.mxu0 0.0
      %2849 = vmatpush1.msra.mxu0 %v2742
      %2850 = vmatprep.subr.mxu0 0.0
      %2851 = vmatpush1.msra.mxu0 %v2743
      %2852 = vmatprep.subr.mxu0 0.0
      %2853 = vmatpush1.msra.mxu0 %v2744
      %2854 = vmatprep.subr.mxu0 0.0
      %2855 = vmatpush1.msra.mxu0 %v2745
      %2856 = vmatprep.subr.mxu0 0.0
      %2857 = vmatpush1.msra.mxu0 %v2746
      %2858 = vmatprep.subr.mxu0 0.0
      %2859 = vmatpush1.msra.mxu0 %v2747
      %2860 = vmatprep.subr.mxu0 0.0
      %2861 = vmatpush1.msra.mxu0 %v2748
      %2862 = vmatprep.subr.mxu0 0.0
      %2863 = vmatpush1.msra.mxu0 %v2749
      %2864 = vmatprep.subr.mxu0 0.0
      %2865 = vmatpush1.msra.mxu0 %v2750
      %2866 = vmatprep.subr.mxu0 0.0
      %2867 = vmatpush1.msra.mxu0 %v2751
      %2868 = vmatprep.subr.mxu0 0.0
      %2869 = vmatpush1.msra.mxu0 %v2752
      %2870 = vmatprep.subr.mxu0 0.0
      %2871 = vmatpush1.msra.mxu0 %v2753
      %2872 = vmatprep.subr.mxu0 0.0
      %2873 = vmatpush1.msra.mxu0 %v2754
      %2874 = vmatprep.subr.mxu0 0.0
      %2875 = vmatpush1.msra.mxu0 %v2755
      %2876 = vmatprep.subr.mxu0 0.0
      %2877 = vmatpush1.msra.mxu0 %v2756
      %2878 = vmatprep.subr.mxu0 0.0
      %2879 = vmatpush1.msra.mxu0 %v2757
      %2880 = vmatprep.subr.mxu0 0.0
      %2881 = vmatpush1.msra.mxu0 %v2758
      %2882 = vmatprep.subr.mxu0 0.0
      %2883 = vmatpush1.msra.mxu0 %v2759
      %2884 = vmatprep.subr.mxu0 0.0
      %2885 = vmatpush1.msra.mxu0 %v2760
      %2886 = vmatprep.subr.mxu0 0.0
      %2887 = vmatpush1.msra.mxu0 %v2761
      %2888 = vmatprep.subr.mxu0 0.0
      %2889 = vmatpush1.msra.mxu0 %v2762
      %2890 = vmatprep.subr.mxu0 0.0
      %2891 = vmatpush1.msra.mxu0 %v2763
      %2892 = vmatprep.subr.mxu0 0.0
      %2893 = vmatpush1.msra.mxu0 %v2764
      %2894 = vmatprep.subr.mxu0 0.0
      %2895 = vmatpush1.msra.mxu0 %v2765
      %2896 = vmatprep.subr.mxu0 0.0
      %2897 = vmatpush1.msra.mxu0 %v2766
      %2898 = vmatprep.subr.mxu0 0.0
      %2899 = vmatpush1.msra.mxu0 %v2767
      %2900 = vmatprep.subr.mxu0 0.0
      %2901 = vmatpush1.msra.mxu0 %v2768
      %2902 = vmatprep.subr.mxu0 0.0
      %2903 = vmatpush1.msra.mxu0 %v2769
      %2904 = vmatprep.subr.mxu0 0.0
      %2905 = vmatpush1.msra.mxu0 %v2770
      %2906 = vmatprep.subr.mxu0 0.0
      %2907 = vmatpush1.msra.mxu0 %v2771
      %2908 = vmatprep.subr.mxu0 0.0
      %2909 = vmatpush1.msra.mxu0 %v2772
      %2910 = vmatprep.subr.mxu0 0.0
      %2911 = vmatpush1.msra.mxu0 %v2773
      %2912 = vmatprep.mubr.f32.mxu0 %v2704
      %2913 = vmatmul.mubr.f32.gmra.mrb[0].mxu0 %v2703
      %v2914 = vpop.f32.mrb[0].mxu0
      %v2915 = vadd.f32 %v2841, %v2914
      %v2916 = vpop.f32.mrb[0].mxu0
      %2917 = vmatprep.mubr.f32.mxu0 %v2708
      %2918 = vmatmul.mubr.f32.gmra.mrb[0].mxu0 %v2707
      %v2919 = vpop.f32.mrb[0].mxu0
      %v2920 = vpop.f32.mrb[0].mxu0
      %2921 = vdwg.mxu0
      %v2922 = vadd.f32 %v2691, %v2915
      %2923 = vst [vmem:[%s312] sm:$0xff] %v2922
      %p2924 = scmp.lt.s32.totalorder %s23, 1
      %s2925 = scalar_select %p2924, %s23, 1
      %p2926 = scmp.lt.s32.totalorder %s22, 1
      %s2927 = scalar_select %p2926, %s22, 1
      %s2928 = smul.addr %s2925, 2
      %s2929 = sadd.s32 %s2927, %s2928
      %s2930 = smul.addr %s2929, 8
      %s2931 = scalar_lea.vmem %s7, %s2930
      // Predicated region
      $region49: #{top_mini_conv.1} parent=47 // pred_check
        %p2932 = pneg %p204
      $region50: #{top_mini_conv.1} parent=47 // pred_check_branch
        %2934 = sbr.rel (%p2932) target = $region52
      $region51: #{top_mini_conv.1} parent=47 // pred_region
        _
      $region52: #{top_mini_conv.1} parent=47 // pred_fallthru
        _
    $region48: #{top_mini_conv.1} parent=5 // pred_fallthru
      _
    %p2935 = scmp.le.s32.totalorder 2, %s13
    // Predicated region
    $region53: #{top_mini_conv.1} parent=5 // pred_check
      %p2936 = pneg %p2935
    $region54: #{top_mini_conv.1} parent=5 // pred_check_branch
      %2938 = sbr.rel (%p2936) target = $region56
    $region55: #{top_mini_conv.1} parent=5 // pred_region
      %s2939 = ssub.s32 %s13, 2
      // Predicated region
      $region57: #{top_mini_conv.1} parent=55 // pred_check
        %p2940 = pneg %p210
      $region58: #{top_mini_conv.1} parent=55 // pred_check_branch
        %2942 = sbr.rel (%p2940) target = $region60
      $region59: #{top_mini_conv.1} parent=55 // pred_region
        %p2943 = scmp.lt.s32.totalorder %s25, 1
        %s2944 = scalar_select %p2943, %s25, 1
        %p2945 = scmp.lt.s32.totalorder %s24, 1
        %s2946 = scalar_select %p2945, %s24, 1
        %s2947 = smul.addr %s2944, 2
        %s2948 = sadd.s32 %s2946, %s2947
        %s2949 = smul.addr %s2948, 8
        %s2950 = scalar_lea.vmem %s7, %s2949
      $region60: #{top_mini_conv.1} parent=55 // pred_fallthru
        _
    $region56: #{top_mini_conv.1} parent=5 // pred_fallthru
      _
  $region6: #{top_mini_conv.1} parent=0 // loop_footer
    %s17 = sadd.s32 1, %s13
  $region7: #{top_mini_conv.1} parent=0 // loop_footer_branch
    %12 = sbr.rel target = $region3
  $region8: #{top_mini_conv.1} parent=0 // loop_exit
    _

</llo_original>
